<compile_context>
chip_gen: v7x
topology: tpu7x:2x2x1
jax: 0.10.0
libtpu: 0.0.40
codegen_flags: <defaults>
</compile_context>

<pallas_src>
import functools
import math

import numpy as np
import jax
import jax.numpy as jnp
from jax.experimental import pallas as pl
from jax.experimental.pallas import tpu as pltpu

SEQ_LENGTH = 30  # max_len of the positional encoding (matches the PyTorch module)


# ----------------------------- Pallas kernel --------------------------------

def transformer_step_kernel(x_ref, pe_ref, w_emb_ref,
                            wq_ref, wk_ref, wv_ref, bq_ref, bk_ref, bv_ref,
                            wo_ref, bo_ref, g1_ref, be1_ref,
                            w1_ref, b1_ref, w2_ref, b2_ref, g2_ref, be2_ref,
                            w_out_ref, b_out_ref, o_ref,
                            *, num_layers, num_heads, eps):
    """Full forward for one sequence position s.

    x_ref:   (1, B, Din)  raw features of position s for every batch element.
    pe_ref:  (1, 1, E)    positional-encoding row s + embedding bias (f32).
    o_ref:   (1, 1, B)    fc_out output for every batch element (lane-dense).
    Weight stacks are (L, ...) bf16/f32 with constant index_maps (resident).
    Q/K/V weights are (L, nh, E, hd); O weights are (L, nh, hd, E).
    """
    _, B, Din = x_ref.shape
    E = pe_ref.shape[-1]
    hd = E // num_heads
    scale = 1.0 / math.sqrt(hd)
    bf16 = jnp.bfloat16
    f32 = jnp.float32

    # ---- input embedding + positional encoding (VPU broadcast-FMAs) ---------
    x = x_ref[0]                                              # (B, Din) f32
    h = jnp.broadcast_to(pe_ref[0], (B, E)).astype(f32)       # pe + b_emb
    for d in range(Din):                                      # K = Din is tiny
        h = h + x[:, d:d + 1] * w_emb_ref[d:d + 1, :]

    def layer_norm(y, g, b):
        # single-pass statistics: var = E[y^2] - E[y]^2, all in f32
        mu = jnp.mean(y, axis=-1, keepdims=True)
        mu2 = jnp.mean(y * y, axis=-1, keepdims=True)
        inv = jax.lax.rsqrt(jnp.maximum(mu2 - mu * mu, 0.0) + eps)
        return (y - mu) * (inv * g) + b

    # ---- encoder layers (post-norm, ReLU FFN, dropout = identity) -----------
    for l in range(num_layers):
        hb = h.astype(bf16)                                   # bf16 only at MXU
        attn = jnp.zeros((B, E), f32)
        for hh in range(num_heads):
            qh = jnp.dot(hb, wq_ref[l, hh],
                         preferred_element_type=f32) + bq_ref[l, hh]
            kh = jnp.dot(hb, wk_ref[l, hh],
                         preferred_element_type=f32) + bk_ref[l, hh]
            vh = jnp.dot(hb, wv_ref[l, hh],
                         preferred_element_type=f32) + bv_ref[l, hh]
            # (B, B) scores for this position's "batch" of tokens.
            s = jax.lax.dot_general(
                qh.astype(bf16), kh.astype(bf16), (((1,), (1,)), ((), ())),
                preferred_element_type=f32) * scale
            s = s - jnp.max(s, axis=-1, keepdims=True)        # f32 softmax stats
            p = jnp.exp(s)                                    # unnormalised
            denom = jnp.sum(p, axis=-1, keepdims=True)
            ctx = jnp.dot(p.astype(bf16), vh.astype(bf16),
                          preferred_element_type=f32)         # (B, hd)
            # deferred normalisation: O(B*hd) muls + EUP reciprocal
            ctx = ctx * pl.reciprocal(denom, approx=True)
            # per-head output projection, accumulated in f32 (no concat)
            attn = attn + jnp.dot(ctx.astype(bf16), wo_ref[l, hh],
                                  preferred_element_type=f32)
        attn = attn + bo_ref[l]

        h1 = layer_norm(h + attn, g1_ref[l], be1_ref[l])
        ff = jnp.dot(h1.astype(bf16), w1_ref[l],
                     preferred_element_type=f32) + b1_ref[l]
        ff = jnp.maximum(ff, 0.0)
        ff = jnp.dot(ff.astype(bf16), w2_ref[l],
                     preferred_element_type=f32) + b2_ref[l]
        h = layer_norm(h1 + ff, g2_ref[l], be2_ref[l])

    # ---- output head: lane-dense (1, B) row for this sequence position ------
    # dot_general contracts E and yields the row directly along lanes
    # (no XLU relayout, no last-dim-1 masked store).
    row = jax.lax.dot_general(w_out_ref[...], h, (((1,), (1,)), ((), ())),
                              preferred_element_type=f32) + b_out_ref[...]
    o_ref[...] = row.reshape(1, 1, B)


# ----------------------------- parameters ----------------------------------

def make_positional_encoding(embed_dim, max_len=SEQ_LENGTH):
    pos = np.arange(0, max_len, dtype=np.float32)[:, None]
    div = np.exp(np.arange(0, embed_dim, 2, dtype=np.float32)
                 * -(np.log(10000.0) / embed_dim))
    pe = np.zeros((max_len, embed_dim), dtype=np.float32)
    pe[:, 0::2] = np.sin(pos * div)
    pe[:, 1::2] = np.cos(pos * div)
    return jnp.asarray(pe)   # (max_len, E); PyTorch keeps a leading 1 dim


def init_params(key, input_dim, embed_dim, hidden_dim, num_layers):
    L, E, H = num_layers, embed_dim, hidden_dim

    def w(k, shape, scale=0.05):
        return scale * jax.random.normal(k, shape, dtype=jnp.float32)

    ks = jax.random.split(key, 12)
    zeros = lambda shape: jnp.zeros(shape, jnp.float32)
    ones = lambda shape: jnp.ones(shape, jnp.float32)
    return {
        'w_emb_t': w(ks[0], (input_dim, E)),
        'b_emb':   w(ks[1], (1, E)),
        'w_out':   w(ks[2], (1, E)),     # row vector
        'b_out':   w(ks[3], (1, 1)),
        'pe':      make_positional_encoding(E),
        # per-layer weights, stacked along a leading layer axis (f32 master copy)
        'wq_t': w(ks[4], (L, E, E)),
        'wk_t': w(ks[5], (L, E, E)),
        'wv_t': w(ks[6], (L, E, E)),
        'wo_t': w(ks[7], (L, E, E)),
        'bq': zeros((L, 1, E)), 'bk': zeros((L, 1, E)), 'bv': zeros((L, 1, E)),
        'bo': zeros((L, 1, E)),
        'g1': ones((L, 1, E)), 'be1': zeros((L, 1, E)),
        'w1_t': w(ks[8], (L, E, H)), 'b1': w(ks[9], (L, 1, H)),
        'w2_t': w(ks[10], (L, H, E)), 'b2': w(ks[11], (L, 1, E)),
        'g2': ones((L, 1, E)), 'be2': zeros((L, 1, E)),
    }


# ------------------------------ forward pass --------------------------------

def _resident(shape):
    """Whole-array block with a constant index_map -> fetched once, VMEM resident."""
    n = len(shape)

    def idx(s):
        del s
        return (0,) * n

    return pl.BlockSpec(shape, idx)


@functools.partial(jax.jit, static_argnames=('num_heads',))
def forward(x, params, num_heads):
    B, S, Din = x.shape
    E = params['w_emb_t'].shape[1]
    L = params['wq_t'].shape[0]
    H = params['w1_t'].shape[2]
    assert E % num_heads == 0
    nh, hd = num_heads, E // num_heads
    bf16 = jnp.bfloat16

    # ---- wrapper-side glue (tiny / weight-sized only) ------------------------
    # (B, S, Din) -> (S, B, Din): attention mixes the B axis per position s.
    x_sbd = jnp.transpose(x, (1, 0, 2))
    # PE row + embedding bias, one (1, E) row per grid step.
    pe_bias = (params['pe'][:S] + params['b_emb']).reshape(S, 1, E)

    # Pre-split Q/K/V/O per head and pre-cast MXU weights to bf16.
    # (In deployment these would be packed once, outside the step function.)
    def split_heads_in(wt):   # (L, E, E) -> (L, nh, E, hd)
        return wt.reshape(L, E, nh, hd).transpose(0, 2, 1, 3)

    wq = split_heads_in(params['wq_t']).astype(bf16)
    wk = split_heads_in(params['wk_t']).astype(bf16)
    wv = split_heads_in(params['wv_t']).astype(bf16)
    wo = params['wo_t'].reshape(L, nh, hd, E).astype(bf16)
    bq = params['bq'].reshape(L, 1, nh, hd).transpose(0, 2, 1, 3)
    bk = params['bk'].reshape(L, 1, nh, hd).transpose(0, 2, 1, 3)
    bv = params['bv'].reshape(L, 1, nh, hd).transpose(0, 2, 1, 3)
    w1 = params['w1_t'].astype(bf16)
    w2 = params['w2_t'].astype(bf16)

    kernel = functools.partial(transformer_step_kernel,
                               num_layers=L, num_heads=nh, eps=1e-5)

    in_specs = [
        pl.BlockSpec((1, B, Din), lambda s: (s, 0, 0)),   # x (per position)
        pl.BlockSpec((1, 1, E), lambda s: (s, 0, 0)),     # pe + b_emb (per position)
        _resident((Din, E)),                              # w_emb (f32, VPU FMA)
        _resident((L, nh, E, hd)),                        # wq
        _resident((L, nh, E, hd)),                        # wk
        _resident((L, nh, E, hd)),                        # wv
        _resident((L, nh, 1, hd)),                        # bq
        _resident((L, nh, 1, hd)),                        # bk
        _resident((L, nh, 1, hd)),                        # bv
        _resident((L, nh, hd, E)),                        # wo
        _resident((L, 1, E)),                             # bo
        _resident((L, 1, E)),                             # g1
        _resident((L, 1, E)),                             # be1
        _resident((L, E, H)),                             # w1
        _resident((L, 1, H)),                             # b1
        _resident((L, H, E)),                             # w2
        _resident((L, 1, E)),                             # b2
        _resident((L, 1, E)),                             # g2
        _resident((L, 1, E)),                             # be2
        _resident((1, E)),                                # w_out (f32)
        _resident((1, 1)),                                # b_out (f32)
    ]

    grid_spec = pltpu.PrefetchScalarGridSpec(
        num_scalar_prefetch=0,
        grid=(S,),
        in_specs=in_specs,
        out_specs=pl.BlockSpec((1, 1, B), lambda s: (s, 0, 0)),
    )

    out = pl.pallas_call(
        kernel,
        out_shape=jax.ShapeDtypeStruct((S, 1, B), jnp.float32),
        grid_spec=grid_spec,
        compiler_params=pltpu.CompilerParams(
            dimension_semantics=("parallel",),            # 2 TCs on v7x
            vmem_limit_bytes=32 * 1024 * 1024),           # explicit budget (all gens)
    )(x_sbd, pe_bias, params['w_emb_t'],
      wq, wk, wv, bq, bk, bv, wo,
      params['bo'], params['g1'], params['be1'],
      w1, params['b1'], w2, params['b2'],
      params['g2'], params['be2'],
      params['w_out'], params['b_out'])

    # fc_out(x[:, -1, :]) == the row written by grid step s = S-1.
    return jnp.transpose(out[S - 1])                      # (B, 1)


# ------------------------- pure-JAX reference -------------------------------

def reference_forward(x, params, num_heads):
    B, S, Din = x.shape
    E = params['w_emb_t'].shape[1]
    L = params['wq_t'].shape[0]
    hd = E // num_heads
    scale = 1.0 / math.sqrt(hd)
    eps = 1e-5

    def ln(y, g, b):
        mu = y.mean(-1, keepdims=True)
        var = ((y - mu) ** 2).mean(-1, keepdims=True)
        return (y - mu) / jnp.sqrt(var + eps) * g + b

    h = x @ params['w_emb_t'] + params['b_emb'] + params['pe'][:S][None]
    for li in range(L):
        q = (h @ params['wq_t'][li] + params['bq'][li]).reshape(B, S, num_heads, hd)
        k = (h @ params['wk_t'][li] + params['bk'][li]).reshape(B, S, num_heads, hd)
        v = (h @ params['wv_t'][li] + params['bv'][li]).reshape(B, S, num_heads, hd)
        # batch_first=False on a (B, S, E) input: attend over axis 0 (B).
        s = jnp.einsum('lnhd,mnhd->nhlm', q, k) * scale
        p = jax.nn.softmax(s, axis=-1)
        ctx = jnp.einsum('nhlm,mnhd->lnhd', p, v).reshape(B, S, E)
        attn = ctx @ params['wo_t'][li] + params['bo'][li]
        h1 = ln(h + attn, params['g1'][li], params['be1'][li])
        ff = (jnp.maximum(h1 @ params['w1_t'][li] + params['b1'][li], 0.0)
              @ params['w2_t'][li] + params['b2'][li])
        h = ln(h1 + ff, params['g2'][li], params['be2'][li])
    return h[:, -1, :] @ params['w_out'].T + params['b_out']


# --------------------------------- main --------------------------------------

if __name__ == "__main__":
    B, S = 2, 8                       # batch, sequence length (<= 30)
    input_dim, embed_dim = 4, 32
    num_heads, hidden_dim, num_layers = 4, 64, 2

    root = jax.random.PRNGKey(0)
    k_x, k_p = jax.random.split(root)
    params = init_params(k_p, input_dim, embed_dim, hidden_dim, num_layers)
    x = jax.random.normal(k_x, (B, S, input_dim), dtype=jnp.float32)

    out = forward(x, params, num_heads)
    out = jax.block_until_ready(out)
    assert out.shape == (B, 1)

    with jax.default_matmul_precision("highest"):
        ref = reference_forward(x, params, num_heads)
    # Kernel feeds the MXU in bf16 (f32 accumulation) and uses an approximate
    # EUP reciprocal for the softmax denominator -> compare at 2e-2.
    np.testing.assert_allclose(np.asarray(out), np.asarray(ref),
                               rtol=2e-2, atol=2e-2)
    print("KERNEL_OK")
</pallas_src>

<mosaic_0001>
module attributes {stable_mosaic.version = 11 : i64} {
  func.func @transformer_step_kernel(%arg0: i32, %arg1: memref<1x2x4xf32, #tpu.memory_space<vmem>>, %arg2: memref<1x1x32xf32, #tpu.memory_space<vmem>>, %arg3: memref<4x32xf32, #tpu.memory_space<vmem>>, %arg4: memref<2x4x32x8xbf16, #tpu.memory_space<vmem>>, %arg5: memref<2x4x32x8xbf16, #tpu.memory_space<vmem>>, %arg6: memref<2x4x32x8xbf16, #tpu.memory_space<vmem>>, %arg7: memref<2x4x1x8xf32, #tpu.memory_space<vmem>>, %arg8: memref<2x4x1x8xf32, #tpu.memory_space<vmem>>, %arg9: memref<2x4x1x8xf32, #tpu.memory_space<vmem>>, %arg10: memref<2x4x8x32xbf16, #tpu.memory_space<vmem>>, %arg11: memref<2x1x32xf32, #tpu.memory_space<vmem>>, %arg12: memref<2x1x32xf32, #tpu.memory_space<vmem>>, %arg13: memref<2x1x32xf32, #tpu.memory_space<vmem>>, %arg14: memref<2x32x64xbf16, #tpu.memory_space<vmem>>, %arg15: memref<2x1x64xf32, #tpu.memory_space<vmem>>, %arg16: memref<2x64x32xbf16, #tpu.memory_space<vmem>>, %arg17: memref<2x1x32xf32, #tpu.memory_space<vmem>>, %arg18: memref<2x1x32xf32, #tpu.memory_space<vmem>>, %arg19: memref<2x1x32xf32, #tpu.memory_space<vmem>>, %arg20: memref<1x32xf32, #tpu.memory_space<vmem>>, %arg21: memref<1x1xf32, #tpu.memory_space<vmem>>, %arg22: memref<1x1x2xf32, #tpu.memory_space<vmem>>) attributes {dimension_semantics = [#tpu.dimension_semantics<parallel>], iteration_bounds = array<i64: 8>, scalar_prefetch = 0 : i64, scratch_operands = 0 : i64, tpu.core_type = #tpu.core_type<tc>, window_params = [{transform_indices = @transform_0, window_bounds = array<i64: 1, 2, 4>}, {transform_indices = @transform_1, window_bounds = array<i64: 1, 1, 32>}, {pipeline_mode = #tpu.pipeline_mode<synchronous>, transform_indices = @transform_2, window_bounds = array<i64: 4, 32>}, {pipeline_mode = #tpu.pipeline_mode<synchronous>, transform_indices = @transform_3, window_bounds = array<i64: 2, 4, 32, 8>}, {pipeline_mode = #tpu.pipeline_mode<synchronous>, transform_indices = @transform_4, window_bounds = array<i64: 2, 4, 32, 8>}, {pipeline_mode = #tpu.pipeline_mode<synchronous>, transform_indices = @transform_5, window_bounds = array<i64: 2, 4, 32, 8>}, {pipeline_mode = #tpu.pipeline_mode<synchronous>, transform_indices = @transform_6, window_bounds = array<i64: 2, 4, 1, 8>}, {pipeline_mode = #tpu.pipeline_mode<synchronous>, transform_indices = @transform_7, window_bounds = array<i64: 2, 4, 1, 8>}, {pipeline_mode = #tpu.pipeline_mode<synchronous>, transform_indices = @transform_8, window_bounds = array<i64: 2, 4, 1, 8>}, {pipeline_mode = #tpu.pipeline_mode<synchronous>, transform_indices = @transform_9, window_bounds = array<i64: 2, 4, 8, 32>}, {pipeline_mode = #tpu.pipeline_mode<synchronous>, transform_indices = @transform_10, window_bounds = array<i64: 2, 1, 32>}, {pipeline_mode = #tpu.pipeline_mode<synchronous>, transform_indices = @transform_11, window_bounds = array<i64: 2, 1, 32>}, {pipeline_mode = #tpu.pipeline_mode<synchronous>, transform_indices = @transform_12, window_bounds = array<i64: 2, 1, 32>}, {pipeline_mode = #tpu.pipeline_mode<synchronous>, transform_indices = @transform_13, window_bounds = array<i64: 2, 32, 64>}, {pipeline_mode = #tpu.pipeline_mode<synchronous>, transform_indices = @transform_14, window_bounds = array<i64: 2, 1, 64>}, {pipeline_mode = #tpu.pipeline_mode<synchronous>, transform_indices = @transform_15, window_bounds = array<i64: 2, 64, 32>}, {pipeline_mode = #tpu.pipeline_mode<synchronous>, transform_indices = @transform_16, window_bounds = array<i64: 2, 1, 32>}, {pipeline_mode = #tpu.pipeline_mode<synchronous>, transform_indices = @transform_17, window_bounds = array<i64: 2, 1, 32>}, {pipeline_mode = #tpu.pipeline_mode<synchronous>, transform_indices = @transform_18, window_bounds = array<i64: 2, 1, 32>}, {pipeline_mode = #tpu.pipeline_mode<synchronous>, transform_indices = @transform_19, window_bounds = array<i64: 1, 32>}, {pipeline_mode = #tpu.pipeline_mode<synchronous>, transform_indices = @transform_20, window_bounds = array<i64: 1, 1>}, {transform_indices = @transform_21, window_bounds = array<i64: 1, 1, 2>}]} {
    %c0 = arith.constant 0 : index
    %c0_0 = arith.constant 0 : index
    %c0_1 = arith.constant 0 : index
    %0 = vector.load %arg1[%c0, %c0_0, %c0_1] : memref<1x2x4xf32, #tpu.memory_space<vmem>>, vector<1x2x4xf32>
    %1 = vector.shape_cast %0 : vector<1x2x4xf32> to vector<2x4xf32>
    %c0_2 = arith.constant 0 : index
    %c0_3 = arith.constant 0 : index
    %c0_4 = arith.constant 0 : index
    %2 = vector.load %arg2[%c0_2, %c0_3, %c0_4] : memref<1x1x32xf32, #tpu.memory_space<vmem>>, vector<1x1x32xf32>
    %3 = vector.shape_cast %2 : vector<1x1x32xf32> to vector<1x32xf32>
    %4 = vector.shape_cast %3 : vector<1x32xf32> to vector<1x32xf32>
    %5 = vector.broadcast %4 : vector<1x32xf32> to vector<2x32xf32>
    %6 = vector.extract_strided_slice %1 {offsets = [0, 0], sizes = [2, 1], strides = [1, 1]} : vector<2x4xf32> to vector<2x1xf32>
    %c0_5 = arith.constant 0 : index
    %c0_6 = arith.constant 0 : index
    %7 = vector.load %arg3[%c0_5, %c0_6] : memref<4x32xf32, #tpu.memory_space<vmem>>, vector<1x32xf32>
    %8 = vector.broadcast %6 : vector<2x1xf32> to vector<2x32xf32>
    %9 = vector.broadcast %7 : vector<1x32xf32> to vector<2x32xf32>
    %10 = arith.mulf %8, %9 : vector<2x32xf32>
    %11 = arith.addf %5, %10 : vector<2x32xf32>
    %12 = vector.extract_strided_slice %1 {offsets = [0, 1], sizes = [2, 1], strides = [1, 1]} : vector<2x4xf32> to vector<2x1xf32>
    %c1 = arith.constant 1 : index
    %c0_7 = arith.constant 0 : index
    %13 = vector.load %arg3[%c1, %c0_7] : memref<4x32xf32, #tpu.memory_space<vmem>>, vector<1x32xf32>
    %14 = vector.broadcast %12 : vector<2x1xf32> to vector<2x32xf32>
    %15 = vector.broadcast %13 : vector<1x32xf32> to vector<2x32xf32>
    %16 = arith.mulf %14, %15 : vector<2x32xf32>
    %17 = arith.addf %11, %16 : vector<2x32xf32>
    %18 = vector.extract_strided_slice %1 {offsets = [0, 2], sizes = [2, 1], strides = [1, 1]} : vector<2x4xf32> to vector<2x1xf32>
    %c2 = arith.constant 2 : index
    %c0_8 = arith.constant 0 : index
    %19 = vector.load %arg3[%c2, %c0_8] : memref<4x32xf32, #tpu.memory_space<vmem>>, vector<1x32xf32>
    %20 = vector.broadcast %18 : vector<2x1xf32> to vector<2x32xf32>
    %21 = vector.broadcast %19 : vector<1x32xf32> to vector<2x32xf32>
    %22 = arith.mulf %20, %21 : vector<2x32xf32>
    %23 = arith.addf %17, %22 : vector<2x32xf32>
    %24 = vector.extract_strided_slice %1 {offsets = [0, 3], sizes = [2, 1], strides = [1, 1]} : vector<2x4xf32> to vector<2x1xf32>
    %c3 = arith.constant 3 : index
    %c0_9 = arith.constant 0 : index
    %25 = vector.load %arg3[%c3, %c0_9] : memref<4x32xf32, #tpu.memory_space<vmem>>, vector<1x32xf32>
    %26 = vector.broadcast %24 : vector<2x1xf32> to vector<2x32xf32>
    %27 = vector.broadcast %25 : vector<1x32xf32> to vector<2x32xf32>
    %28 = arith.mulf %26, %27 : vector<2x32xf32>
    %29 = arith.addf %23, %28 : vector<2x32xf32>
    %30 = arith.truncf %29 : vector<2x32xf32> to vector<2x32xbf16>
    %cst = arith.constant 0.000000e+00 : f32
    %31 = vector.broadcast %cst : f32 to vector<2x32xf32>
    %c0_10 = arith.constant 0 : index
    %c0_11 = arith.constant 0 : index
    %c0_12 = arith.constant 0 : index
    %c0_13 = arith.constant 0 : index
    %32 = vector.load %arg4[%c0_10, %c0_11, %c0_12, %c0_13] : memref<2x4x32x8xbf16, #tpu.memory_space<vmem>>, vector<1x1x32x8xbf16>
    %33 = vector.shape_cast %32 : vector<1x1x32x8xbf16> to vector<32x8xbf16>
    %cst_14 = arith.constant dense<0.000000e+00> : vector<2x8xf32>
    %34 = tpu.matmul %30, %33, %cst_14 {dimension_numbers = #tpu.dot_dimension_numbers<[1], [0], [0], [1], [0, 0, 1, 1], [], []>} : vector<2x32xbf16>, vector<32x8xbf16>, vector<2x8xf32> -> vector<2x8xf32>
    %c0_15 = arith.constant 0 : index
    %c0_16 = arith.constant 0 : index
    %c0_17 = arith.constant 0 : index
    %c0_18 = arith.constant 0 : index
    %35 = vector.load %arg7[%c0_15, %c0_16, %c0_17, %c0_18] : memref<2x4x1x8xf32, #tpu.memory_space<vmem>>, vector<1x1x1x8xf32>
    %36 = vector.shape_cast %35 : vector<1x1x1x8xf32> to vector<1x8xf32>
    %37 = vector.broadcast %36 : vector<1x8xf32> to vector<2x8xf32>
    %38 = arith.addf %34, %37 : vector<2x8xf32>
    %c0_19 = arith.constant 0 : index
    %c0_20 = arith.constant 0 : index
    %c0_21 = arith.constant 0 : index
    %c0_22 = arith.constant 0 : index
    %39 = vector.load %arg5[%c0_19, %c0_20, %c0_21, %c0_22] : memref<2x4x32x8xbf16, #tpu.memory_space<vmem>>, vector<1x1x32x8xbf16>
    %40 = vector.shape_cast %39 : vector<1x1x32x8xbf16> to vector<32x8xbf16>
    %cst_23 = arith.constant dense<0.000000e+00> : vector<2x8xf32>
    %41 = tpu.matmul %30, %40, %cst_23 {dimension_numbers = #tpu.dot_dimension_numbers<[1], [0], [0], [1], [0, 0, 1, 1], [], []>} : vector<2x32xbf16>, vector<32x8xbf16>, vector<2x8xf32> -> vector<2x8xf32>
    %c0_24 = arith.constant 0 : index
    %c0_25 = arith.constant 0 : index
    %c0_26 = arith.constant 0 : index
    %c0_27 = arith.constant 0 : index
    %42 = vector.load %arg8[%c0_24, %c0_25, %c0_26, %c0_27] : memref<2x4x1x8xf32, #tpu.memory_space<vmem>>, vector<1x1x1x8xf32>
    %43 = vector.shape_cast %42 : vector<1x1x1x8xf32> to vector<1x8xf32>
    %44 = vector.broadcast %43 : vector<1x8xf32> to vector<2x8xf32>
    %45 = arith.addf %41, %44 : vector<2x8xf32>
    %c0_28 = arith.constant 0 : index
    %c0_29 = arith.constant 0 : index
    %c0_30 = arith.constant 0 : index
    %c0_31 = arith.constant 0 : index
    %46 = vector.load %arg6[%c0_28, %c0_29, %c0_30, %c0_31] : memref<2x4x32x8xbf16, #tpu.memory_space<vmem>>, vector<1x1x32x8xbf16>
    %47 = vector.shape_cast %46 : vector<1x1x32x8xbf16> to vector<32x8xbf16>
    %cst_32 = arith.constant dense<0.000000e+00> : vector<2x8xf32>
    %48 = tpu.matmul %30, %47, %cst_32 {dimension_numbers = #tpu.dot_dimension_numbers<[1], [0], [0], [1], [0, 0, 1, 1], [], []>} : vector<2x32xbf16>, vector<32x8xbf16>, vector<2x8xf32> -> vector<2x8xf32>
    %c0_33 = arith.constant 0 : index
    %c0_34 = arith.constant 0 : index
    %c0_35 = arith.constant 0 : index
    %c0_36 = arith.constant 0 : index
    %49 = vector.load %arg9[%c0_33, %c0_34, %c0_35, %c0_36] : memref<2x4x1x8xf32, #tpu.memory_space<vmem>>, vector<1x1x1x8xf32>
    %50 = vector.shape_cast %49 : vector<1x1x1x8xf32> to vector<1x8xf32>
    %51 = vector.broadcast %50 : vector<1x8xf32> to vector<2x8xf32>
    %52 = arith.addf %48, %51 : vector<2x8xf32>
    %53 = arith.truncf %38 : vector<2x8xf32> to vector<2x8xbf16>
    %54 = arith.truncf %45 : vector<2x8xf32> to vector<2x8xbf16>
    %cst_37 = arith.constant dense<0.000000e+00> : vector<2x2xf32>
    %55 = tpu.matmul %53, %54, %cst_37 {dimension_numbers = #tpu.dot_dimension_numbers<[1], [1], [0], [0], [0, 0, 1, 0], [], []>} : vector<2x8xbf16>, vector<2x8xbf16>, vector<2x2xf32> -> vector<2x2xf32>
    %cst_38 = arith.constant 0.353553385 : f32
    %56 = vector.broadcast %cst_38 : f32 to vector<2x2xf32>
    %57 = arith.mulf %55, %56 : vector<2x2xf32>
    %cst_39 = arith.constant dense<0xFF800000> : vector<2xf32>
    %58 = vector.multi_reduction <maximumf>, %57, %cst_39 [1] : vector<2x2xf32> to vector<2xf32>
    %59 = vector.shape_cast %58 : vector<2xf32> to vector<2x1xf32>
    %60 = vector.broadcast %59 : vector<2x1xf32> to vector<2x2xf32>
    %61 = arith.subf %57, %60 : vector<2x2xf32>
    %62 = math.exp %61 : vector<2x2xf32>
    %cst_40 = arith.constant dense<0.000000e+00> : vector<2xf32>
    %63 = vector.multi_reduction <add>, %62, %cst_40 [1] : vector<2x2xf32> to vector<2xf32>
    %64 = vector.shape_cast %63 : vector<2xf32> to vector<2x1xf32>
    %65 = arith.truncf %62 : vector<2x2xf32> to vector<2x2xbf16>
    %66 = arith.truncf %52 : vector<2x8xf32> to vector<2x8xbf16>
    %cst_41 = arith.constant dense<0.000000e+00> : vector<2x8xf32>
    %67 = tpu.matmul %65, %66, %cst_41 {dimension_numbers = #tpu.dot_dimension_numbers<[1], [0], [0], [1], [0, 0, 1, 1], [], []>} : vector<2x2xbf16>, vector<2x8xbf16>, vector<2x8xf32> -> vector<2x8xf32>
    %68 = tpu.reciprocal %64 {approx = true} : vector<2x1xf32> -> vector<2x1xf32>
    %69 = vector.broadcast %68 : vector<2x1xf32> to vector<2x8xf32>
    %70 = arith.mulf %67, %69 : vector<2x8xf32>
    %71 = arith.truncf %70 : vector<2x8xf32> to vector<2x8xbf16>
    %c0_42 = arith.constant 0 : index
    %c0_43 = arith.constant 0 : index
    %c0_44 = arith.constant 0 : index
    %c0_45 = arith.constant 0 : index
    %72 = vector.load %arg10[%c0_42, %c0_43, %c0_44, %c0_45] : memref<2x4x8x32xbf16, #tpu.memory_space<vmem>>, vector<1x1x8x32xbf16>
    %73 = vector.shape_cast %72 : vector<1x1x8x32xbf16> to vector<8x32xbf16>
    %cst_46 = arith.constant dense<0.000000e+00> : vector<2x32xf32>
    %74 = tpu.matmul %71, %73, %cst_46 {dimension_numbers = #tpu.dot_dimension_numbers<[1], [0], [0], [1], [0, 0, 1, 1], [], []>} : vector<2x8xbf16>, vector<8x32xbf16>, vector<2x32xf32> -> vector<2x32xf32>
    %75 = arith.addf %31, %74 : vector<2x32xf32>
    %c0_47 = arith.constant 0 : index
    %c1_48 = arith.constant 1 : index
    %c0_49 = arith.constant 0 : index
    %c0_50 = arith.constant 0 : index
    %76 = vector.load %arg4[%c0_47, %c1_48, %c0_49, %c0_50] : memref<2x4x32x8xbf16, #tpu.memory_space<vmem>>, vector<1x1x32x8xbf16>
    %77 = vector.shape_cast %76 : vector<1x1x32x8xbf16> to vector<32x8xbf16>
    %cst_51 = arith.constant dense<0.000000e+00> : vector<2x8xf32>
    %78 = tpu.matmul %30, %77, %cst_51 {dimension_numbers = #tpu.dot_dimension_numbers<[1], [0], [0], [1], [0, 0, 1, 1], [], []>} : vector<2x32xbf16>, vector<32x8xbf16>, vector<2x8xf32> -> vector<2x8xf32>
    %c0_52 = arith.constant 0 : index
    %c1_53 = arith.constant 1 : index
    %c0_54 = arith.constant 0 : index
    %c0_55 = arith.constant 0 : index
    %79 = vector.load %arg7[%c0_52, %c1_53, %c0_54, %c0_55] : memref<2x4x1x8xf32, #tpu.memory_space<vmem>>, vector<1x1x1x8xf32>
    %80 = vector.shape_cast %79 : vector<1x1x1x8xf32> to vector<1x8xf32>
    %81 = vector.broadcast %80 : vector<1x8xf32> to vector<2x8xf32>
    %82 = arith.addf %78, %81 : vector<2x8xf32>
    %c0_56 = arith.constant 0 : index
    %c1_57 = arith.constant 1 : index
    %c0_58 = arith.constant 0 : index
    %c0_59 = arith.constant 0 : index
    %83 = vector.load %arg5[%c0_56, %c1_57, %c0_58, %c0_59] : memref<2x4x32x8xbf16, #tpu.memory_space<vmem>>, vector<1x1x32x8xbf16>
    %84 = vector.shape_cast %83 : vector<1x1x32x8xbf16> to vector<32x8xbf16>
    %cst_60 = arith.constant dense<0.000000e+00> : vector<2x8xf32>
    %85 = tpu.matmul %30, %84, %cst_60 {dimension_numbers = #tpu.dot_dimension_numbers<[1], [0], [0], [1], [0, 0, 1, 1], [], []>} : vector<2x32xbf16>, vector<32x8xbf16>, vector<2x8xf32> -> vector<2x8xf32>
    %c0_61 = arith.constant 0 : index
    %c1_62 = arith.constant 1 : index
    %c0_63 = arith.constant 0 : index
    %c0_64 = arith.constant 0 : index
    %86 = vector.load %arg8[%c0_61, %c1_62, %c0_63, %c0_64] : memref<2x4x1x8xf32, #tpu.memory_space<vmem>>, vector<1x1x1x8xf32>
    %87 = vector.shape_cast %86 : vector<1x1x1x8xf32> to vector<1x8xf32>
    %88 = vector.broadcast %87 : vector<1x8xf32> to vector<2x8xf32>
    %89 = arith.addf %85, %88 : vector<2x8xf32>
    %c0_65 = arith.constant 0 : index
    %c1_66 = arith.constant 1 : index
    %c0_67 = arith.constant 0 : index
    %c0_68 = arith.constant 0 : index
    %90 = vector.load %arg6[%c0_65, %c1_66, %c0_67, %c0_68] : memref<2x4x32x8xbf16, #tpu.memory_space<vmem>>, vector<1x1x32x8xbf16>
    %91 = vector.shape_cast %90 : vector<1x1x32x8xbf16> to vector<32x8xbf16>
    %cst_69 = arith.constant dense<0.000000e+00> : vector<2x8xf32>
    %92 = tpu.matmul %30, %91, %cst_69 {dimension_numbers = #tpu.dot_dimension_numbers<[1], [0], [0], [1], [0, 0, 1, 1], [], []>} : vector<2x32xbf16>, vector<32x8xbf16>, vector<2x8xf32> -> vector<2x8xf32>
    %c0_70 = arith.constant 0 : index
    %c1_71 = arith.constant 1 : index
    %c0_72 = arith.constant 0 : index
    %c0_73 = arith.constant 0 : index
    %93 = vector.load %arg9[%c0_70, %c1_71, %c0_72, %c0_73] : memref<2x4x1x8xf32, #tpu.memory_space<vmem>>, vector<1x1x1x8xf32>
    %94 = vector.shape_cast %93 : vector<1x1x1x8xf32> to vector<1x8xf32>
    %95 = vector.broadcast %94 : vector<1x8xf32> to vector<2x8xf32>
    %96 = arith.addf %92, %95 : vector<2x8xf32>
    %97 = arith.truncf %82 : vector<2x8xf32> to vector<2x8xbf16>
    %98 = arith.truncf %89 : vector<2x8xf32> to vector<2x8xbf16>
    %cst_74 = arith.constant dense<0.000000e+00> : vector<2x2xf32>
    %99 = tpu.matmul %97, %98, %cst_74 {dimension_numbers = #tpu.dot_dimension_numbers<[1], [1], [0], [0], [0, 0, 1, 0], [], []>} : vector<2x8xbf16>, vector<2x8xbf16>, vector<2x2xf32> -> vector<2x2xf32>
    %cst_75 = arith.constant 0.353553385 : f32
    %100 = vector.broadcast %cst_75 : f32 to vector<2x2xf32>
    %101 = arith.mulf %99, %100 : vector<2x2xf32>
    %cst_76 = arith.constant dense<0xFF800000> : vector<2xf32>
    %102 = vector.multi_reduction <maximumf>, %101, %cst_76 [1] : vector<2x2xf32> to vector<2xf32>
    %103 = vector.shape_cast %102 : vector<2xf32> to vector<2x1xf32>
    %104 = vector.broadcast %103 : vector<2x1xf32> to vector<2x2xf32>
    %105 = arith.subf %101, %104 : vector<2x2xf32>
    %106 = math.exp %105 : vector<2x2xf32>
    %cst_77 = arith.constant dense<0.000000e+00> : vector<2xf32>
    %107 = vector.multi_reduction <add>, %106, %cst_77 [1] : vector<2x2xf32> to vector<2xf32>
    %108 = vector.shape_cast %107 : vector<2xf32> to vector<2x1xf32>
    %109 = arith.truncf %106 : vector<2x2xf32> to vector<2x2xbf16>
    %110 = arith.truncf %96 : vector<2x8xf32> to vector<2x8xbf16>
    %cst_78 = arith.constant dense<0.000000e+00> : vector<2x8xf32>
    %111 = tpu.matmul %109, %110, %cst_78 {dimension_numbers = #tpu.dot_dimension_numbers<[1], [0], [0], [1], [0, 0, 1, 1], [], []>} : vector<2x2xbf16>, vector<2x8xbf16>, vector<2x8xf32> -> vector<2x8xf32>
    %112 = tpu.reciprocal %108 {approx = true} : vector<2x1xf32> -> vector<2x1xf32>
    %113 = vector.broadcast %112 : vector<2x1xf32> to vector<2x8xf32>
    %114 = arith.mulf %111, %113 : vector<2x8xf32>
    %115 = arith.truncf %114 : vector<2x8xf32> to vector<2x8xbf16>
    %c0_79 = arith.constant 0 : index
    %c1_80 = arith.constant 1 : index
    %c0_81 = arith.constant 0 : index
    %c0_82 = arith.constant 0 : index
    %116 = vector.load %arg10[%c0_79, %c1_80, %c0_81, %c0_82] : memref<2x4x8x32xbf16, #tpu.memory_space<vmem>>, vector<1x1x8x32xbf16>
    %117 = vector.shape_cast %116 : vector<1x1x8x32xbf16> to vector<8x32xbf16>
    %cst_83 = arith.constant dense<0.000000e+00> : vector<2x32xf32>
    %118 = tpu.matmul %115, %117, %cst_83 {dimension_numbers = #tpu.dot_dimension_numbers<[1], [0], [0], [1], [0, 0, 1, 1], [], []>} : vector<2x8xbf16>, vector<8x32xbf16>, vector<2x32xf32> -> vector<2x32xf32>
    %119 = arith.addf %75, %118 : vector<2x32xf32>
    %c0_84 = arith.constant 0 : index
    %c2_85 = arith.constant 2 : index
    %c0_86 = arith.constant 0 : index
    %c0_87 = arith.constant 0 : index
    %120 = vector.load %arg4[%c0_84, %c2_85, %c0_86, %c0_87] : memref<2x4x32x8xbf16, #tpu.memory_space<vmem>>, vector<1x1x32x8xbf16>
    %121 = vector.shape_cast %120 : vector<1x1x32x8xbf16> to vector<32x8xbf16>
    %cst_88 = arith.constant dense<0.000000e+00> : vector<2x8xf32>
    %122 = tpu.matmul %30, %121, %cst_88 {dimension_numbers = #tpu.dot_dimension_numbers<[1], [0], [0], [1], [0, 0, 1, 1], [], []>} : vector<2x32xbf16>, vector<32x8xbf16>, vector<2x8xf32> -> vector<2x8xf32>
    %c0_89 = arith.constant 0 : index
    %c2_90 = arith.constant 2 : index
    %c0_91 = arith.constant 0 : index
    %c0_92 = arith.constant 0 : index
    %123 = vector.load %arg7[%c0_89, %c2_90, %c0_91, %c0_92] : memref<2x4x1x8xf32, #tpu.memory_space<vmem>>, vector<1x1x1x8xf32>
    %124 = vector.shape_cast %123 : vector<1x1x1x8xf32> to vector<1x8xf32>
    %125 = vector.broadcast %124 : vector<1x8xf32> to vector<2x8xf32>
    %126 = arith.addf %122, %125 : vector<2x8xf32>
    %c0_93 = arith.constant 0 : index
    %c2_94 = arith.constant 2 : index
    %c0_95 = arith.constant 0 : index
    %c0_96 = arith.constant 0 : index
    %127 = vector.load %arg5[%c0_93, %c2_94, %c0_95, %c0_96] : memref<2x4x32x8xbf16, #tpu.memory_space<vmem>>, vector<1x1x32x8xbf16>
    %128 = vector.shape_cast %127 : vector<1x1x32x8xbf16> to vector<32x8xbf16>
    %cst_97 = arith.constant dense<0.000000e+00> : vector<2x8xf32>
    %129 = tpu.matmul %30, %128, %cst_97 {dimension_numbers = #tpu.dot_dimension_numbers<[1], [0], [0], [1], [0, 0, 1, 1], [], []>} : vector<2x32xbf16>, vector<32x8xbf16>, vector<2x8xf32> -> vector<2x8xf32>
    %c0_98 = arith.constant 0 : index
    %c2_99 = arith.constant 2 : index
    %c0_100 = arith.constant 0 : index
    %c0_101 = arith.constant 0 : index
    %130 = vector.load %arg8[%c0_98, %c2_99, %c0_100, %c0_101] : memref<2x4x1x8xf32, #tpu.memory_space<vmem>>, vector<1x1x1x8xf32>
    %131 = vector.shape_cast %130 : vector<1x1x1x8xf32> to vector<1x8xf32>
    %132 = vector.broadcast %131 : vector<1x8xf32> to vector<2x8xf32>
    %133 = arith.addf %129, %132 : vector<2x8xf32>
    %c0_102 = arith.constant 0 : index
    %c2_103 = arith.constant 2 : index
    %c0_104 = arith.constant 0 : index
    %c0_105 = arith.constant 0 : index
    %134 = vector.load %arg6[%c0_102, %c2_103, %c0_104, %c0_105] : memref<2x4x32x8xbf16, #tpu.memory_space<vmem>>, vector<1x1x32x8xbf16>
    %135 = vector.shape_cast %134 : vector<1x1x32x8xbf16> to vector<32x8xbf16>
    %cst_106 = arith.constant dense<0.000000e+00> : vector<2x8xf32>
    %136 = tpu.matmul %30, %135, %cst_106 {dimension_numbers = #tpu.dot_dimension_numbers<[1], [0], [0], [1], [0, 0, 1, 1], [], []>} : vector<2x32xbf16>, vector<32x8xbf16>, vector<2x8xf32> -> vector<2x8xf32>
    %c0_107 = arith.constant 0 : index
    %c2_108 = arith.constant 2 : index
    %c0_109 = arith.constant 0 : index
    %c0_110 = arith.constant 0 : index
    %137 = vector.load %arg9[%c0_107, %c2_108, %c0_109, %c0_110] : memref<2x4x1x8xf32, #tpu.memory_space<vmem>>, vector<1x1x1x8xf32>
    %138 = vector.shape_cast %137 : vector<1x1x1x8xf32> to vector<1x8xf32>
    %139 = vector.broadcast %138 : vector<1x8xf32> to vector<2x8xf32>
    %140 = arith.addf %136, %139 : vector<2x8xf32>
    %141 = arith.truncf %126 : vector<2x8xf32> to vector<2x8xbf16>
    %142 = arith.truncf %133 : vector<2x8xf32> to vector<2x8xbf16>
    %cst_111 = arith.constant dense<0.000000e+00> : vector<2x2xf32>
    %143 = tpu.matmul %141, %142, %cst_111 {dimension_numbers = #tpu.dot_dimension_numbers<[1], [1], [0], [0], [0, 0, 1, 0], [], []>} : vector<2x8xbf16>, vector<2x8xbf16>, vector<2x2xf32> -> vector<2x2xf32>
    %cst_112 = arith.constant 0.353553385 : f32
    %144 = vector.broadcast %cst_112 : f32 to vector<2x2xf32>
    %145 = arith.mulf %143, %144 : vector<2x2xf32>
    %cst_113 = arith.constant dense<0xFF800000> : vector<2xf32>
    %146 = vector.multi_reduction <maximumf>, %145, %cst_113 [1] : vector<2x2xf32> to vector<2xf32>
    %147 = vector.shape_cast %146 : vector<2xf32> to vector<2x1xf32>
    %148 = vector.broadcast %147 : vector<2x1xf32> to vector<2x2xf32>
    %149 = arith.subf %145, %148 : vector<2x2xf32>
    %150 = math.exp %149 : vector<2x2xf32>
    %cst_114 = arith.constant dense<0.000000e+00> : vector<2xf32>
    %151 = vector.multi_reduction <add>, %150, %cst_114 [1] : vector<2x2xf32> to vector<2xf32>
    %152 = vector.shape_cast %151 : vector<2xf32> to vector<2x1xf32>
    %153 = arith.truncf %150 : vector<2x2xf32> to vector<2x2xbf16>
    %154 = arith.truncf %140 : vector<2x8xf32> to vector<2x8xbf16>
    %cst_115 = arith.constant dense<0.000000e+00> : vector<2x8xf32>
    %155 = tpu.matmul %153, %154, %cst_115 {dimension_numbers = #tpu.dot_dimension_numbers<[1], [0], [0], [1], [0, 0, 1, 1], [], []>} : vector<2x2xbf16>, vector<2x8xbf16>, vector<2x8xf32> -> vector<2x8xf32>
    %156 = tpu.reciprocal %152 {approx = true} : vector<2x1xf32> -> vector<2x1xf32>
    %157 = vector.broadcast %156 : vector<2x1xf32> to vector<2x8xf32>
    %158 = arith.mulf %155, %157 : vector<2x8xf32>
    %159 = arith.truncf %158 : vector<2x8xf32> to vector<2x8xbf16>
    %c0_116 = arith.constant 0 : index
    %c2_117 = arith.constant 2 : index
    %c0_118 = arith.constant 0 : index
    %c0_119 = arith.constant 0 : index
    %160 = vector.load %arg10[%c0_116, %c2_117, %c0_118, %c0_119] : memref<2x4x8x32xbf16, #tpu.memory_space<vmem>>, vector<1x1x8x32xbf16>
    %161 = vector.shape_cast %160 : vector<1x1x8x32xbf16> to vector<8x32xbf16>
    %cst_120 = arith.constant dense<0.000000e+00> : vector<2x32xf32>
    %162 = tpu.matmul %159, %161, %cst_120 {dimension_numbers = #tpu.dot_dimension_numbers<[1], [0], [0], [1], [0, 0, 1, 1], [], []>} : vector<2x8xbf16>, vector<8x32xbf16>, vector<2x32xf32> -> vector<2x32xf32>
    %163 = arith.addf %119, %162 : vector<2x32xf32>
    %c0_121 = arith.constant 0 : index
    %c3_122 = arith.constant 3 : index
    %c0_123 = arith.constant 0 : index
    %c0_124 = arith.constant 0 : index
    %164 = vector.load %arg4[%c0_121, %c3_122, %c0_123, %c0_124] : memref<2x4x32x8xbf16, #tpu.memory_space<vmem>>, vector<1x1x32x8xbf16>
    %165 = vector.shape_cast %164 : vector<1x1x32x8xbf16> to vector<32x8xbf16>
    %cst_125 = arith.constant dense<0.000000e+00> : vector<2x8xf32>
    %166 = tpu.matmul %30, %165, %cst_125 {dimension_numbers = #tpu.dot_dimension_numbers<[1], [0], [0], [1], [0, 0, 1, 1], [], []>} : vector<2x32xbf16>, vector<32x8xbf16>, vector<2x8xf32> -> vector<2x8xf32>
    %c0_126 = arith.constant 0 : index
    %c3_127 = arith.constant 3 : index
    %c0_128 = arith.constant 0 : index
    %c0_129 = arith.constant 0 : index
    %167 = vector.load %arg7[%c0_126, %c3_127, %c0_128, %c0_129] : memref<2x4x1x8xf32, #tpu.memory_space<vmem>>, vector<1x1x1x8xf32>
    %168 = vector.shape_cast %167 : vector<1x1x1x8xf32> to vector<1x8xf32>
    %169 = vector.broadcast %168 : vector<1x8xf32> to vector<2x8xf32>
    %170 = arith.addf %166, %169 : vector<2x8xf32>
    %c0_130 = arith.constant 0 : index
    %c3_131 = arith.constant 3 : index
    %c0_132 = arith.constant 0 : index
    %c0_133 = arith.constant 0 : index
    %171 = vector.load %arg5[%c0_130, %c3_131, %c0_132, %c0_133] : memref<2x4x32x8xbf16, #tpu.memory_space<vmem>>, vector<1x1x32x8xbf16>
    %172 = vector.shape_cast %171 : vector<1x1x32x8xbf16> to vector<32x8xbf16>
    %cst_134 = arith.constant dense<0.000000e+00> : vector<2x8xf32>
    %173 = tpu.matmul %30, %172, %cst_134 {dimension_numbers = #tpu.dot_dimension_numbers<[1], [0], [0], [1], [0, 0, 1, 1], [], []>} : vector<2x32xbf16>, vector<32x8xbf16>, vector<2x8xf32> -> vector<2x8xf32>
    %c0_135 = arith.constant 0 : index
    %c3_136 = arith.constant 3 : index
    %c0_137 = arith.constant 0 : index
    %c0_138 = arith.constant 0 : index
    %174 = vector.load %arg8[%c0_135, %c3_136, %c0_137, %c0_138] : memref<2x4x1x8xf32, #tpu.memory_space<vmem>>, vector<1x1x1x8xf32>
    %175 = vector.shape_cast %174 : vector<1x1x1x8xf32> to vector<1x8xf32>
    %176 = vector.broadcast %175 : vector<1x8xf32> to vector<2x8xf32>
    %177 = arith.addf %173, %176 : vector<2x8xf32>
    %c0_139 = arith.constant 0 : index
    %c3_140 = arith.constant 3 : index
    %c0_141 = arith.constant 0 : index
    %c0_142 = arith.constant 0 : index
    %178 = vector.load %arg6[%c0_139, %c3_140, %c0_141, %c0_142] : memref<2x4x32x8xbf16, #tpu.memory_space<vmem>>, vector<1x1x32x8xbf16>
    %179 = vector.shape_cast %178 : vector<1x1x32x8xbf16> to vector<32x8xbf16>
    %cst_143 = arith.constant dense<0.000000e+00> : vector<2x8xf32>
    %180 = tpu.matmul %30, %179, %cst_143 {dimension_numbers = #tpu.dot_dimension_numbers<[1], [0], [0], [1], [0, 0, 1, 1], [], []>} : vector<2x32xbf16>, vector<32x8xbf16>, vector<2x8xf32> -> vector<2x8xf32>
    %c0_144 = arith.constant 0 : index
    %c3_145 = arith.constant 3 : index
    %c0_146 = arith.constant 0 : index
    %c0_147 = arith.constant 0 : index
    %181 = vector.load %arg9[%c0_144, %c3_145, %c0_146, %c0_147] : memref<2x4x1x8xf32, #tpu.memory_space<vmem>>, vector<1x1x1x8xf32>
    %182 = vector.shape_cast %181 : vector<1x1x1x8xf32> to vector<1x8xf32>
    %183 = vector.broadcast %182 : vector<1x8xf32> to vector<2x8xf32>
    %184 = arith.addf %180, %183 : vector<2x8xf32>
    %185 = arith.truncf %170 : vector<2x8xf32> to vector<2x8xbf16>
    %186 = arith.truncf %177 : vector<2x8xf32> to vector<2x8xbf16>
    %cst_148 = arith.constant dense<0.000000e+00> : vector<2x2xf32>
    %187 = tpu.matmul %185, %186, %cst_148 {dimension_numbers = #tpu.dot_dimension_numbers<[1], [1], [0], [0], [0, 0, 1, 0], [], []>} : vector<2x8xbf16>, vector<2x8xbf16>, vector<2x2xf32> -> vector<2x2xf32>
    %cst_149 = arith.constant 0.353553385 : f32
    %188 = vector.broadcast %cst_149 : f32 to vector<2x2xf32>
    %189 = arith.mulf %187, %188 : vector<2x2xf32>
    %cst_150 = arith.constant dense<0xFF800000> : vector<2xf32>
    %190 = vector.multi_reduction <maximumf>, %189, %cst_150 [1] : vector<2x2xf32> to vector<2xf32>
    %191 = vector.shape_cast %190 : vector<2xf32> to vector<2x1xf32>
    %192 = vector.broadcast %191 : vector<2x1xf32> to vector<2x2xf32>
    %193 = arith.subf %189, %192 : vector<2x2xf32>
    %194 = math.exp %193 : vector<2x2xf32>
    %cst_151 = arith.constant dense<0.000000e+00> : vector<2xf32>
    %195 = vector.multi_reduction <add>, %194, %cst_151 [1] : vector<2x2xf32> to vector<2xf32>
    %196 = vector.shape_cast %195 : vector<2xf32> to vector<2x1xf32>
    %197 = arith.truncf %194 : vector<2x2xf32> to vector<2x2xbf16>
    %198 = arith.truncf %184 : vector<2x8xf32> to vector<2x8xbf16>
    %cst_152 = arith.constant dense<0.000000e+00> : vector<2x8xf32>
    %199 = tpu.matmul %197, %198, %cst_152 {dimension_numbers = #tpu.dot_dimension_numbers<[1], [0], [0], [1], [0, 0, 1, 1], [], []>} : vector<2x2xbf16>, vector<2x8xbf16>, vector<2x8xf32> -> vector<2x8xf32>
    %200 = tpu.reciprocal %196 {approx = true} : vector<2x1xf32> -> vector<2x1xf32>
    %201 = vector.broadcast %200 : vector<2x1xf32> to vector<2x8xf32>
    %202 = arith.mulf %199, %201 : vector<2x8xf32>
    %203 = arith.truncf %202 : vector<2x8xf32> to vector<2x8xbf16>
    %c0_153 = arith.constant 0 : index
    %c3_154 = arith.constant 3 : index
    %c0_155 = arith.constant 0 : index
    %c0_156 = arith.constant 0 : index
    %204 = vector.load %arg10[%c0_153, %c3_154, %c0_155, %c0_156] : memref<2x4x8x32xbf16, #tpu.memory_space<vmem>>, vector<1x1x8x32xbf16>
    %205 = vector.shape_cast %204 : vector<1x1x8x32xbf16> to vector<8x32xbf16>
    %cst_157 = arith.constant dense<0.000000e+00> : vector<2x32xf32>
    %206 = tpu.matmul %203, %205, %cst_157 {dimension_numbers = #tpu.dot_dimension_numbers<[1], [0], [0], [1], [0, 0, 1, 1], [], []>} : vector<2x8xbf16>, vector<8x32xbf16>, vector<2x32xf32> -> vector<2x32xf32>
    %207 = arith.addf %163, %206 : vector<2x32xf32>
    %c0_158 = arith.constant 0 : index
    %c0_159 = arith.constant 0 : index
    %c0_160 = arith.constant 0 : index
    %208 = vector.load %arg11[%c0_158, %c0_159, %c0_160] : memref<2x1x32xf32, #tpu.memory_space<vmem>>, vector<1x1x32xf32>
    %209 = vector.shape_cast %208 : vector<1x1x32xf32> to vector<1x32xf32>
    %210 = vector.broadcast %209 : vector<1x32xf32> to vector<2x32xf32>
    %211 = arith.addf %207, %210 : vector<2x32xf32>
    %212 = arith.addf %29, %211 : vector<2x32xf32>
    %c0_161 = arith.constant 0 : index
    %c0_162 = arith.constant 0 : index
    %c0_163 = arith.constant 0 : index
    %213 = vector.load %arg12[%c0_161, %c0_162, %c0_163] : memref<2x1x32xf32, #tpu.memory_space<vmem>>, vector<1x1x32xf32>
    %214 = vector.shape_cast %213 : vector<1x1x32xf32> to vector<1x32xf32>
    %c0_164 = arith.constant 0 : index
    %c0_165 = arith.constant 0 : index
    %c0_166 = arith.constant 0 : index
    %215 = vector.load %arg13[%c0_164, %c0_165, %c0_166] : memref<2x1x32xf32, #tpu.memory_space<vmem>>, vector<1x1x32xf32>
    %216 = vector.shape_cast %215 : vector<1x1x32xf32> to vector<1x32xf32>
    %cst_167 = arith.constant dense<0.000000e+00> : vector<2xf32>
    %217 = vector.multi_reduction <add>, %212, %cst_167 [1] : vector<2x32xf32> to vector<2xf32>
    %218 = vector.shape_cast %217 : vector<2xf32> to vector<2x1xf32>
    %cst_168 = arith.constant 3.200000e+01 : f32
    %219 = vector.broadcast %cst_168 : f32 to vector<2x1xf32>
    %220 = arith.divf %218, %219 : vector<2x1xf32>
    %221 = arith.mulf %212, %212 : vector<2x32xf32>
    %cst_169 = arith.constant dense<0.000000e+00> : vector<2xf32>
    %222 = vector.multi_reduction <add>, %221, %cst_169 [1] : vector<2x32xf32> to vector<2xf32>
    %223 = vector.shape_cast %222 : vector<2xf32> to vector<2x1xf32>
    %cst_170 = arith.constant 3.200000e+01 : f32
    %224 = vector.broadcast %cst_170 : f32 to vector<2x1xf32>
    %225 = arith.divf %223, %224 : vector<2x1xf32>
    %226 = arith.mulf %220, %220 : vector<2x1xf32>
    %227 = arith.subf %225, %226 : vector<2x1xf32>
    %cst_171 = arith.constant 0.000000e+00 : f32
    %228 = vector.broadcast %cst_171 : f32 to vector<2x1xf32>
    %229 = arith.maximumf %227, %228 : vector<2x1xf32>
    %cst_172 = arith.constant 9.99999974E-6 : f32
    %230 = vector.broadcast %cst_172 : f32 to vector<2x1xf32>
    %231 = arith.addf %229, %230 : vector<2x1xf32>
    %232 = math.rsqrt %231 : vector<2x1xf32>
    %233 = vector.broadcast %220 : vector<2x1xf32> to vector<2x32xf32>
    %234 = arith.subf %212, %233 : vector<2x32xf32>
    %235 = vector.broadcast %232 : vector<2x1xf32> to vector<2x32xf32>
    %236 = vector.broadcast %214 : vector<1x32xf32> to vector<2x32xf32>
    %237 = arith.mulf %235, %236 : vector<2x32xf32>
    %238 = arith.mulf %234, %237 : vector<2x32xf32>
    %239 = vector.broadcast %216 : vector<1x32xf32> to vector<2x32xf32>
    %240 = arith.addf %238, %239 : vector<2x32xf32>
    %241 = arith.truncf %240 : vector<2x32xf32> to vector<2x32xbf16>
    %c0_173 = arith.constant 0 : index
    %c0_174 = arith.constant 0 : index
    %c0_175 = arith.constant 0 : index
    %242 = vector.load %arg14[%c0_173, %c0_174, %c0_175] : memref<2x32x64xbf16, #tpu.memory_space<vmem>>, vector<1x32x64xbf16>
    %243 = vector.shape_cast %242 : vector<1x32x64xbf16> to vector<32x64xbf16>
    %cst_176 = arith.constant dense<0.000000e+00> : vector<2x64xf32>
    %244 = tpu.matmul %241, %243, %cst_176 {dimension_numbers = #tpu.dot_dimension_numbers<[1], [0], [0], [1], [0, 0, 1, 1], [], []>} : vector<2x32xbf16>, vector<32x64xbf16>, vector<2x64xf32> -> vector<2x64xf32>
    %c0_177 = arith.constant 0 : index
    %c0_178 = arith.constant 0 : index
    %c0_179 = arith.constant 0 : index
    %245 = vector.load %arg15[%c0_177, %c0_178, %c0_179] : memref<2x1x64xf32, #tpu.memory_space<vmem>>, vector<1x1x64xf32>
    %246 = vector.shape_cast %245 : vector<1x1x64xf32> to vector<1x64xf32>
    %247 = vector.broadcast %246 : vector<1x64xf32> to vector<2x64xf32>
    %248 = arith.addf %244, %247 : vector<2x64xf32>
    %cst_180 = arith.constant 0.000000e+00 : f32
    %249 = vector.broadcast %cst_180 : f32 to vector<2x64xf32>
    %250 = arith.maximumf %248, %249 : vector<2x64xf32>
    %251 = arith.truncf %250 : vector<2x64xf32> to vector<2x64xbf16>
    %c0_181 = arith.constant 0 : index
    %c0_182 = arith.constant 0 : index
    %c0_183 = arith.constant 0 : index
    %252 = vector.load %arg16[%c0_181, %c0_182, %c0_183] : memref<2x64x32xbf16, #tpu.memory_space<vmem>>, vector<1x64x32xbf16>
    %253 = vector.shape_cast %252 : vector<1x64x32xbf16> to vector<64x32xbf16>
    %cst_184 = arith.constant dense<0.000000e+00> : vector<2x32xf32>
    %254 = tpu.matmul %251, %253, %cst_184 {dimension_numbers = #tpu.dot_dimension_numbers<[1], [0], [0], [1], [0, 0, 1, 1], [], []>} : vector<2x64xbf16>, vector<64x32xbf16>, vector<2x32xf32> -> vector<2x32xf32>
    %c0_185 = arith.constant 0 : index
    %c0_186 = arith.constant 0 : index
    %c0_187 = arith.constant 0 : index
    %255 = vector.load %arg17[%c0_185, %c0_186, %c0_187] : memref<2x1x32xf32, #tpu.memory_space<vmem>>, vector<1x1x32xf32>
    %256 = vector.shape_cast %255 : vector<1x1x32xf32> to vector<1x32xf32>
    %257 = vector.broadcast %256 : vector<1x32xf32> to vector<2x32xf32>
    %258 = arith.addf %254, %257 : vector<2x32xf32>
    %259 = arith.addf %240, %258 : vector<2x32xf32>
    %c0_188 = arith.constant 0 : index
    %c0_189 = arith.constant 0 : index
    %c0_190 = arith.constant 0 : index
    %260 = vector.load %arg18[%c0_188, %c0_189, %c0_190] : memref<2x1x32xf32, #tpu.memory_space<vmem>>, vector<1x1x32xf32>
    %261 = vector.shape_cast %260 : vector<1x1x32xf32> to vector<1x32xf32>
    %c0_191 = arith.constant 0 : index
    %c0_192 = arith.constant 0 : index
    %c0_193 = arith.constant 0 : index
    %262 = vector.load %arg19[%c0_191, %c0_192, %c0_193] : memref<2x1x32xf32, #tpu.memory_space<vmem>>, vector<1x1x32xf32>
    %263 = vector.shape_cast %262 : vector<1x1x32xf32> to vector<1x32xf32>
    %cst_194 = arith.constant dense<0.000000e+00> : vector<2xf32>
    %264 = vector.multi_reduction <add>, %259, %cst_194 [1] : vector<2x32xf32> to vector<2xf32>
    %265 = vector.shape_cast %264 : vector<2xf32> to vector<2x1xf32>
    %cst_195 = arith.constant 3.200000e+01 : f32
    %266 = vector.broadcast %cst_195 : f32 to vector<2x1xf32>
    %267 = arith.divf %265, %266 : vector<2x1xf32>
    %268 = arith.mulf %259, %259 : vector<2x32xf32>
    %cst_196 = arith.constant dense<0.000000e+00> : vector<2xf32>
    %269 = vector.multi_reduction <add>, %268, %cst_196 [1] : vector<2x32xf32> to vector<2xf32>
    %270 = vector.shape_cast %269 : vector<2xf32> to vector<2x1xf32>
    %cst_197 = arith.constant 3.200000e+01 : f32
    %271 = vector.broadcast %cst_197 : f32 to vector<2x1xf32>
    %272 = arith.divf %270, %271 : vector<2x1xf32>
    %273 = arith.mulf %267, %267 : vector<2x1xf32>
    %274 = arith.subf %272, %273 : vector<2x1xf32>
    %cst_198 = arith.constant 0.000000e+00 : f32
    %275 = vector.broadcast %cst_198 : f32 to vector<2x1xf32>
    %276 = arith.maximumf %274, %275 : vector<2x1xf32>
    %cst_199 = arith.constant 9.99999974E-6 : f32
    %277 = vector.broadcast %cst_199 : f32 to vector<2x1xf32>
    %278 = arith.addf %276, %277 : vector<2x1xf32>
    %279 = math.rsqrt %278 : vector<2x1xf32>
    %280 = vector.broadcast %267 : vector<2x1xf32> to vector<2x32xf32>
    %281 = arith.subf %259, %280 : vector<2x32xf32>
    %282 = vector.broadcast %279 : vector<2x1xf32> to vector<2x32xf32>
    %283 = vector.broadcast %261 : vector<1x32xf32> to vector<2x32xf32>
    %284 = arith.mulf %282, %283 : vector<2x32xf32>
    %285 = arith.mulf %281, %284 : vector<2x32xf32>
    %286 = vector.broadcast %263 : vector<1x32xf32> to vector<2x32xf32>
    %287 = arith.addf %285, %286 : vector<2x32xf32>
    %288 = arith.truncf %287 : vector<2x32xf32> to vector<2x32xbf16>
    %cst_200 = arith.constant 0.000000e+00 : f32
    %289 = vector.broadcast %cst_200 : f32 to vector<2x32xf32>
    %c1_201 = arith.constant 1 : index
    %c0_202 = arith.constant 0 : index
    %c0_203 = arith.constant 0 : index
    %c0_204 = arith.constant 0 : index
    %290 = vector.load %arg4[%c1_201, %c0_202, %c0_203, %c0_204] : memref<2x4x32x8xbf16, #tpu.memory_space<vmem>>, vector<1x1x32x8xbf16>
    %291 = vector.shape_cast %290 : vector<1x1x32x8xbf16> to vector<32x8xbf16>
    %cst_205 = arith.constant dense<0.000000e+00> : vector<2x8xf32>
    %292 = tpu.matmul %288, %291, %cst_205 {dimension_numbers = #tpu.dot_dimension_numbers<[1], [0], [0], [1], [0, 0, 1, 1], [], []>} : vector<2x32xbf16>, vector<32x8xbf16>, vector<2x8xf32> -> vector<2x8xf32>
    %c1_206 = arith.constant 1 : index
    %c0_207 = arith.constant 0 : index
    %c0_208 = arith.constant 0 : index
    %c0_209 = arith.constant 0 : index
    %293 = vector.load %arg7[%c1_206, %c0_207, %c0_208, %c0_209] : memref<2x4x1x8xf32, #tpu.memory_space<vmem>>, vector<1x1x1x8xf32>
    %294 = vector.shape_cast %293 : vector<1x1x1x8xf32> to vector<1x8xf32>
    %295 = vector.broadcast %294 : vector<1x8xf32> to vector<2x8xf32>
    %296 = arith.addf %292, %295 : vector<2x8xf32>
    %c1_210 = arith.constant 1 : index
    %c0_211 = arith.constant 0 : index
    %c0_212 = arith.constant 0 : index
    %c0_213 = arith.constant 0 : index
    %297 = vector.load %arg5[%c1_210, %c0_211, %c0_212, %c0_213] : memref<2x4x32x8xbf16, #tpu.memory_space<vmem>>, vector<1x1x32x8xbf16>
    %298 = vector.shape_cast %297 : vector<1x1x32x8xbf16> to vector<32x8xbf16>
    %cst_214 = arith.constant dense<0.000000e+00> : vector<2x8xf32>
    %299 = tpu.matmul %288, %298, %cst_214 {dimension_numbers = #tpu.dot_dimension_numbers<[1], [0], [0], [1], [0, 0, 1, 1], [], []>} : vector<2x32xbf16>, vector<32x8xbf16>, vector<2x8xf32> -> vector<2x8xf32>
    %c1_215 = arith.constant 1 : index
    %c0_216 = arith.constant 0 : index
    %c0_217 = arith.constant 0 : index
    %c0_218 = arith.constant 0 : index
    %300 = vector.load %arg8[%c1_215, %c0_216, %c0_217, %c0_218] : memref<2x4x1x8xf32, #tpu.memory_space<vmem>>, vector<1x1x1x8xf32>
    %301 = vector.shape_cast %300 : vector<1x1x1x8xf32> to vector<1x8xf32>
    %302 = vector.broadcast %301 : vector<1x8xf32> to vector<2x8xf32>
    %303 = arith.addf %299, %302 : vector<2x8xf32>
    %c1_219 = arith.constant 1 : index
    %c0_220 = arith.constant 0 : index
    %c0_221 = arith.constant 0 : index
    %c0_222 = arith.constant 0 : index
    %304 = vector.load %arg6[%c1_219, %c0_220, %c0_221, %c0_222] : memref<2x4x32x8xbf16, #tpu.memory_space<vmem>>, vector<1x1x32x8xbf16>
    %305 = vector.shape_cast %304 : vector<1x1x32x8xbf16> to vector<32x8xbf16>
    %cst_223 = arith.constant dense<0.000000e+00> : vector<2x8xf32>
    %306 = tpu.matmul %288, %305, %cst_223 {dimension_numbers = #tpu.dot_dimension_numbers<[1], [0], [0], [1], [0, 0, 1, 1], [], []>} : vector<2x32xbf16>, vector<32x8xbf16>, vector<2x8xf32> -> vector<2x8xf32>
    %c1_224 = arith.constant 1 : index
    %c0_225 = arith.constant 0 : index
    %c0_226 = arith.constant 0 : index
    %c0_227 = arith.constant 0 : index
    %307 = vector.load %arg9[%c1_224, %c0_225, %c0_226, %c0_227] : memref<2x4x1x8xf32, #tpu.memory_space<vmem>>, vector<1x1x1x8xf32>
    %308 = vector.shape_cast %307 : vector<1x1x1x8xf32> to vector<1x8xf32>
    %309 = vector.broadcast %308 : vector<1x8xf32> to vector<2x8xf32>
    %310 = arith.addf %306, %309 : vector<2x8xf32>
    %311 = arith.truncf %296 : vector<2x8xf32> to vector<2x8xbf16>
    %312 = arith.truncf %303 : vector<2x8xf32> to vector<2x8xbf16>
    %cst_228 = arith.constant dense<0.000000e+00> : vector<2x2xf32>
    %313 = tpu.matmul %311, %312, %cst_228 {dimension_numbers = #tpu.dot_dimension_numbers<[1], [1], [0], [0], [0, 0, 1, 0], [], []>} : vector<2x8xbf16>, vector<2x8xbf16>, vector<2x2xf32> -> vector<2x2xf32>
    %cst_229 = arith.constant 0.353553385 : f32
    %314 = vector.broadcast %cst_229 : f32 to vector<2x2xf32>
    %315 = arith.mulf %313, %314 : vector<2x2xf32>
    %cst_230 = arith.constant dense<0xFF800000> : vector<2xf32>
    %316 = vector.multi_reduction <maximumf>, %315, %cst_230 [1] : vector<2x2xf32> to vector<2xf32>
    %317 = vector.shape_cast %316 : vector<2xf32> to vector<2x1xf32>
    %318 = vector.broadcast %317 : vector<2x1xf32> to vector<2x2xf32>
    %319 = arith.subf %315, %318 : vector<2x2xf32>
    %320 = math.exp %319 : vector<2x2xf32>
    %cst_231 = arith.constant dense<0.000000e+00> : vector<2xf32>
    %321 = vector.multi_reduction <add>, %320, %cst_231 [1] : vector<2x2xf32> to vector<2xf32>
    %322 = vector.shape_cast %321 : vector<2xf32> to vector<2x1xf32>
    %323 = arith.truncf %320 : vector<2x2xf32> to vector<2x2xbf16>
    %324 = arith.truncf %310 : vector<2x8xf32> to vector<2x8xbf16>
    %cst_232 = arith.constant dense<0.000000e+00> : vector<2x8xf32>
    %325 = tpu.matmul %323, %324, %cst_232 {dimension_numbers = #tpu.dot_dimension_numbers<[1], [0], [0], [1], [0, 0, 1, 1], [], []>} : vector<2x2xbf16>, vector<2x8xbf16>, vector<2x8xf32> -> vector<2x8xf32>
    %326 = tpu.reciprocal %322 {approx = true} : vector<2x1xf32> -> vector<2x1xf32>
    %327 = vector.broadcast %326 : vector<2x1xf32> to vector<2x8xf32>
    %328 = arith.mulf %325, %327 : vector<2x8xf32>
    %329 = arith.truncf %328 : vector<2x8xf32> to vector<2x8xbf16>
    %c1_233 = arith.constant 1 : index
    %c0_234 = arith.constant 0 : index
    %c0_235 = arith.constant 0 : index
    %c0_236 = arith.constant 0 : index
    %330 = vector.load %arg10[%c1_233, %c0_234, %c0_235, %c0_236] : memref<2x4x8x32xbf16, #tpu.memory_space<vmem>>, vector<1x1x8x32xbf16>
    %331 = vector.shape_cast %330 : vector<1x1x8x32xbf16> to vector<8x32xbf16>
    %cst_237 = arith.constant dense<0.000000e+00> : vector<2x32xf32>
    %332 = tpu.matmul %329, %331, %cst_237 {dimension_numbers = #tpu.dot_dimension_numbers<[1], [0], [0], [1], [0, 0, 1, 1], [], []>} : vector<2x8xbf16>, vector<8x32xbf16>, vector<2x32xf32> -> vector<2x32xf32>
    %333 = arith.addf %289, %332 : vector<2x32xf32>
    %c1_238 = arith.constant 1 : index
    %c1_239 = arith.constant 1 : index
    %c0_240 = arith.constant 0 : index
    %c0_241 = arith.constant 0 : index
    %334 = vector.load %arg4[%c1_238, %c1_239, %c0_240, %c0_241] : memref<2x4x32x8xbf16, #tpu.memory_space<vmem>>, vector<1x1x32x8xbf16>
    %335 = vector.shape_cast %334 : vector<1x1x32x8xbf16> to vector<32x8xbf16>
    %cst_242 = arith.constant dense<0.000000e+00> : vector<2x8xf32>
    %336 = tpu.matmul %288, %335, %cst_242 {dimension_numbers = #tpu.dot_dimension_numbers<[1], [0], [0], [1], [0, 0, 1, 1], [], []>} : vector<2x32xbf16>, vector<32x8xbf16>, vector<2x8xf32> -> vector<2x8xf32>
    %c1_243 = arith.constant 1 : index
    %c1_244 = arith.constant 1 : index
    %c0_245 = arith.constant 0 : index
    %c0_246 = arith.constant 0 : index
    %337 = vector.load %arg7[%c1_243, %c1_244, %c0_245, %c0_246] : memref<2x4x1x8xf32, #tpu.memory_space<vmem>>, vector<1x1x1x8xf32>
    %338 = vector.shape_cast %337 : vector<1x1x1x8xf32> to vector<1x8xf32>
    %339 = vector.broadcast %338 : vector<1x8xf32> to vector<2x8xf32>
    %340 = arith.addf %336, %339 : vector<2x8xf32>
    %c1_247 = arith.constant 1 : index
    %c1_248 = arith.constant 1 : index
    %c0_249 = arith.constant 0 : index
    %c0_250 = arith.constant 0 : index
    %341 = vector.load %arg5[%c1_247, %c1_248, %c0_249, %c0_250] : memref<2x4x32x8xbf16, #tpu.memory_space<vmem>>, vector<1x1x32x8xbf16>
    %342 = vector.shape_cast %341 : vector<1x1x32x8xbf16> to vector<32x8xbf16>
    %cst_251 = arith.constant dense<0.000000e+00> : vector<2x8xf32>
    %343 = tpu.matmul %288, %342, %cst_251 {dimension_numbers = #tpu.dot_dimension_numbers<[1], [0], [0], [1], [0, 0, 1, 1], [], []>} : vector<2x32xbf16>, vector<32x8xbf16>, vector<2x8xf32> -> vector<2x8xf32>
    %c1_252 = arith.constant 1 : index
    %c1_253 = arith.constant 1 : index
    %c0_254 = arith.constant 0 : index
    %c0_255 = arith.constant 0 : index
    %344 = vector.load %arg8[%c1_252, %c1_253, %c0_254, %c0_255] : memref<2x4x1x8xf32, #tpu.memory_space<vmem>>, vector<1x1x1x8xf32>
    %345 = vector.shape_cast %344 : vector<1x1x1x8xf32> to vector<1x8xf32>
    %346 = vector.broadcast %345 : vector<1x8xf32> to vector<2x8xf32>
    %347 = arith.addf %343, %346 : vector<2x8xf32>
    %c1_256 = arith.constant 1 : index
    %c1_257 = arith.constant 1 : index
    %c0_258 = arith.constant 0 : index
    %c0_259 = arith.constant 0 : index
    %348 = vector.load %arg6[%c1_256, %c1_257, %c0_258, %c0_259] : memref<2x4x32x8xbf16, #tpu.memory_space<vmem>>, vector<1x1x32x8xbf16>
    %349 = vector.shape_cast %348 : vector<1x1x32x8xbf16> to vector<32x8xbf16>
    %cst_260 = arith.constant dense<0.000000e+00> : vector<2x8xf32>
    %350 = tpu.matmul %288, %349, %cst_260 {dimension_numbers = #tpu.dot_dimension_numbers<[1], [0], [0], [1], [0, 0, 1, 1], [], []>} : vector<2x32xbf16>, vector<32x8xbf16>, vector<2x8xf32> -> vector<2x8xf32>
    %c1_261 = arith.constant 1 : index
    %c1_262 = arith.constant 1 : index
    %c0_263 = arith.constant 0 : index
    %c0_264 = arith.constant 0 : index
    %351 = vector.load %arg9[%c1_261, %c1_262, %c0_263, %c0_264] : memref<2x4x1x8xf32, #tpu.memory_space<vmem>>, vector<1x1x1x8xf32>
    %352 = vector.shape_cast %351 : vector<1x1x1x8xf32> to vector<1x8xf32>
    %353 = vector.broadcast %352 : vector<1x8xf32> to vector<2x8xf32>
    %354 = arith.addf %350, %353 : vector<2x8xf32>
    %355 = arith.truncf %340 : vector<2x8xf32> to vector<2x8xbf16>
    %356 = arith.truncf %347 : vector<2x8xf32> to vector<2x8xbf16>
    %cst_265 = arith.constant dense<0.000000e+00> : vector<2x2xf32>
    %357 = tpu.matmul %355, %356, %cst_265 {dimension_numbers = #tpu.dot_dimension_numbers<[1], [1], [0], [0], [0, 0, 1, 0], [], []>} : vector<2x8xbf16>, vector<2x8xbf16>, vector<2x2xf32> -> vector<2x2xf32>
    %cst_266 = arith.constant 0.353553385 : f32
    %358 = vector.broadcast %cst_266 : f32 to vector<2x2xf32>
    %359 = arith.mulf %357, %358 : vector<2x2xf32>
    %cst_267 = arith.constant dense<0xFF800000> : vector<2xf32>
    %360 = vector.multi_reduction <maximumf>, %359, %cst_267 [1] : vector<2x2xf32> to vector<2xf32>
    %361 = vector.shape_cast %360 : vector<2xf32> to vector<2x1xf32>
    %362 = vector.broadcast %361 : vector<2x1xf32> to vector<2x2xf32>
    %363 = arith.subf %359, %362 : vector<2x2xf32>
    %364 = math.exp %363 : vector<2x2xf32>
    %cst_268 = arith.constant dense<0.000000e+00> : vector<2xf32>
    %365 = vector.multi_reduction <add>, %364, %cst_268 [1] : vector<2x2xf32> to vector<2xf32>
    %366 = vector.shape_cast %365 : vector<2xf32> to vector<2x1xf32>
    %367 = arith.truncf %364 : vector<2x2xf32> to vector<2x2xbf16>
    %368 = arith.truncf %354 : vector<2x8xf32> to vector<2x8xbf16>
    %cst_269 = arith.constant dense<0.000000e+00> : vector<2x8xf32>
    %369 = tpu.matmul %367, %368, %cst_269 {dimension_numbers = #tpu.dot_dimension_numbers<[1], [0], [0], [1], [0, 0, 1, 1], [], []>} : vector<2x2xbf16>, vector<2x8xbf16>, vector<2x8xf32> -> vector<2x8xf32>
    %370 = tpu.reciprocal %366 {approx = true} : vector<2x1xf32> -> vector<2x1xf32>
    %371 = vector.broadcast %370 : vector<2x1xf32> to vector<2x8xf32>
    %372 = arith.mulf %369, %371 : vector<2x8xf32>
    %373 = arith.truncf %372 : vector<2x8xf32> to vector<2x8xbf16>
    %c1_270 = arith.constant 1 : index
    %c1_271 = arith.constant 1 : index
    %c0_272 = arith.constant 0 : index
    %c0_273 = arith.constant 0 : index
    %374 = vector.load %arg10[%c1_270, %c1_271, %c0_272, %c0_273] : memref<2x4x8x32xbf16, #tpu.memory_space<vmem>>, vector<1x1x8x32xbf16>
    %375 = vector.shape_cast %374 : vector<1x1x8x32xbf16> to vector<8x32xbf16>
    %cst_274 = arith.constant dense<0.000000e+00> : vector<2x32xf32>
    %376 = tpu.matmul %373, %375, %cst_274 {dimension_numbers = #tpu.dot_dimension_numbers<[1], [0], [0], [1], [0, 0, 1, 1], [], []>} : vector<2x8xbf16>, vector<8x32xbf16>, vector<2x32xf32> -> vector<2x32xf32>
    %377 = arith.addf %333, %376 : vector<2x32xf32>
    %c1_275 = arith.constant 1 : index
    %c2_276 = arith.constant 2 : index
    %c0_277 = arith.constant 0 : index
    %c0_278 = arith.constant 0 : index
    %378 = vector.load %arg4[%c1_275, %c2_276, %c0_277, %c0_278] : memref<2x4x32x8xbf16, #tpu.memory_space<vmem>>, vector<1x1x32x8xbf16>
    %379 = vector.shape_cast %378 : vector<1x1x32x8xbf16> to vector<32x8xbf16>
    %cst_279 = arith.constant dense<0.000000e+00> : vector<2x8xf32>
    %380 = tpu.matmul %288, %379, %cst_279 {dimension_numbers = #tpu.dot_dimension_numbers<[1], [0], [0], [1], [0, 0, 1, 1], [], []>} : vector<2x32xbf16>, vector<32x8xbf16>, vector<2x8xf32> -> vector<2x8xf32>
    %c1_280 = arith.constant 1 : index
    %c2_281 = arith.constant 2 : index
    %c0_282 = arith.constant 0 : index
    %c0_283 = arith.constant 0 : index
    %381 = vector.load %arg7[%c1_280, %c2_281, %c0_282, %c0_283] : memref<2x4x1x8xf32, #tpu.memory_space<vmem>>, vector<1x1x1x8xf32>
    %382 = vector.shape_cast %381 : vector<1x1x1x8xf32> to vector<1x8xf32>
    %383 = vector.broadcast %382 : vector<1x8xf32> to vector<2x8xf32>
    %384 = arith.addf %380, %383 : vector<2x8xf32>
    %c1_284 = arith.constant 1 : index
    %c2_285 = arith.constant 2 : index
    %c0_286 = arith.constant 0 : index
    %c0_287 = arith.constant 0 : index
    %385 = vector.load %arg5[%c1_284, %c2_285, %c0_286, %c0_287] : memref<2x4x32x8xbf16, #tpu.memory_space<vmem>>, vector<1x1x32x8xbf16>
    %386 = vector.shape_cast %385 : vector<1x1x32x8xbf16> to vector<32x8xbf16>
    %cst_288 = arith.constant dense<0.000000e+00> : vector<2x8xf32>
    %387 = tpu.matmul %288, %386, %cst_288 {dimension_numbers = #tpu.dot_dimension_numbers<[1], [0], [0], [1], [0, 0, 1, 1], [], []>} : vector<2x32xbf16>, vector<32x8xbf16>, vector<2x8xf32> -> vector<2x8xf32>
    %c1_289 = arith.constant 1 : index
    %c2_290 = arith.constant 2 : index
    %c0_291 = arith.constant 0 : index
    %c0_292 = arith.constant 0 : index
    %388 = vector.load %arg8[%c1_289, %c2_290, %c0_291, %c0_292] : memref<2x4x1x8xf32, #tpu.memory_space<vmem>>, vector<1x1x1x8xf32>
    %389 = vector.shape_cast %388 : vector<1x1x1x8xf32> to vector<1x8xf32>
    %390 = vector.broadcast %389 : vector<1x8xf32> to vector<2x8xf32>
    %391 = arith.addf %387, %390 : vector<2x8xf32>
    %c1_293 = arith.constant 1 : index
    %c2_294 = arith.constant 2 : index
    %c0_295 = arith.constant 0 : index
    %c0_296 = arith.constant 0 : index
    %392 = vector.load %arg6[%c1_293, %c2_294, %c0_295, %c0_296] : memref<2x4x32x8xbf16, #tpu.memory_space<vmem>>, vector<1x1x32x8xbf16>
    %393 = vector.shape_cast %392 : vector<1x1x32x8xbf16> to vector<32x8xbf16>
    %cst_297 = arith.constant dense<0.000000e+00> : vector<2x8xf32>
    %394 = tpu.matmul %288, %393, %cst_297 {dimension_numbers = #tpu.dot_dimension_numbers<[1], [0], [0], [1], [0, 0, 1, 1], [], []>} : vector<2x32xbf16>, vector<32x8xbf16>, vector<2x8xf32> -> vector<2x8xf32>
    %c1_298 = arith.constant 1 : index
    %c2_299 = arith.constant 2 : index
    %c0_300 = arith.constant 0 : index
    %c0_301 = arith.constant 0 : index
    %395 = vector.load %arg9[%c1_298, %c2_299, %c0_300, %c0_301] : memref<2x4x1x8xf32, #tpu.memory_space<vmem>>, vector<1x1x1x8xf32>
    %396 = vector.shape_cast %395 : vector<1x1x1x8xf32> to vector<1x8xf32>
    %397 = vector.broadcast %396 : vector<1x8xf32> to vector<2x8xf32>
    %398 = arith.addf %394, %397 : vector<2x8xf32>
    %399 = arith.truncf %384 : vector<2x8xf32> to vector<2x8xbf16>
    %400 = arith.truncf %391 : vector<2x8xf32> to vector<2x8xbf16>
    %cst_302 = arith.constant dense<0.000000e+00> : vector<2x2xf32>
    %401 = tpu.matmul %399, %400, %cst_302 {dimension_numbers = #tpu.dot_dimension_numbers<[1], [1], [0], [0], [0, 0, 1, 0], [], []>} : vector<2x8xbf16>, vector<2x8xbf16>, vector<2x2xf32> -> vector<2x2xf32>
    %cst_303 = arith.constant 0.353553385 : f32
    %402 = vector.broadcast %cst_303 : f32 to vector<2x2xf32>
    %403 = arith.mulf %401, %402 : vector<2x2xf32>
    %cst_304 = arith.constant dense<0xFF800000> : vector<2xf32>
    %404 = vector.multi_reduction <maximumf>, %403, %cst_304 [1] : vector<2x2xf32> to vector<2xf32>
    %405 = vector.shape_cast %404 : vector<2xf32> to vector<2x1xf32>
    %406 = vector.broadcast %405 : vector<2x1xf32> to vector<2x2xf32>
    %407 = arith.subf %403, %406 : vector<2x2xf32>
    %408 = math.exp %407 : vector<2x2xf32>
    %cst_305 = arith.constant dense<0.000000e+00> : vector<2xf32>
    %409 = vector.multi_reduction <add>, %408, %cst_305 [1] : vector<2x2xf32> to vector<2xf32>
    %410 = vector.shape_cast %409 : vector<2xf32> to vector<2x1xf32>
    %411 = arith.truncf %408 : vector<2x2xf32> to vector<2x2xbf16>
    %412 = arith.truncf %398 : vector<2x8xf32> to vector<2x8xbf16>
    %cst_306 = arith.constant dense<0.000000e+00> : vector<2x8xf32>
    %413 = tpu.matmul %411, %412, %cst_306 {dimension_numbers = #tpu.dot_dimension_numbers<[1], [0], [0], [1], [0, 0, 1, 1], [], []>} : vector<2x2xbf16>, vector<2x8xbf16>, vector<2x8xf32> -> vector<2x8xf32>
    %414 = tpu.reciprocal %410 {approx = true} : vector<2x1xf32> -> vector<2x1xf32>
    %415 = vector.broadcast %414 : vector<2x1xf32> to vector<2x8xf32>
    %416 = arith.mulf %413, %415 : vector<2x8xf32>
    %417 = arith.truncf %416 : vector<2x8xf32> to vector<2x8xbf16>
    %c1_307 = arith.constant 1 : index
    %c2_308 = arith.constant 2 : index
    %c0_309 = arith.constant 0 : index
    %c0_310 = arith.constant 0 : index
    %418 = vector.load %arg10[%c1_307, %c2_308, %c0_309, %c0_310] : memref<2x4x8x32xbf16, #tpu.memory_space<vmem>>, vector<1x1x8x32xbf16>
    %419 = vector.shape_cast %418 : vector<1x1x8x32xbf16> to vector<8x32xbf16>
    %cst_311 = arith.constant dense<0.000000e+00> : vector<2x32xf32>
    %420 = tpu.matmul %417, %419, %cst_311 {dimension_numbers = #tpu.dot_dimension_numbers<[1], [0], [0], [1], [0, 0, 1, 1], [], []>} : vector<2x8xbf16>, vector<8x32xbf16>, vector<2x32xf32> -> vector<2x32xf32>
    %421 = arith.addf %377, %420 : vector<2x32xf32>
    %c1_312 = arith.constant 1 : index
    %c3_313 = arith.constant 3 : index
    %c0_314 = arith.constant 0 : index
    %c0_315 = arith.constant 0 : index
    %422 = vector.load %arg4[%c1_312, %c3_313, %c0_314, %c0_315] : memref<2x4x32x8xbf16, #tpu.memory_space<vmem>>, vector<1x1x32x8xbf16>
    %423 = vector.shape_cast %422 : vector<1x1x32x8xbf16> to vector<32x8xbf16>
    %cst_316 = arith.constant dense<0.000000e+00> : vector<2x8xf32>
    %424 = tpu.matmul %288, %423, %cst_316 {dimension_numbers = #tpu.dot_dimension_numbers<[1], [0], [0], [1], [0, 0, 1, 1], [], []>} : vector<2x32xbf16>, vector<32x8xbf16>, vector<2x8xf32> -> vector<2x8xf32>
    %c1_317 = arith.constant 1 : index
    %c3_318 = arith.constant 3 : index
    %c0_319 = arith.constant 0 : index
    %c0_320 = arith.constant 0 : index
    %425 = vector.load %arg7[%c1_317, %c3_318, %c0_319, %c0_320] : memref<2x4x1x8xf32, #tpu.memory_space<vmem>>, vector<1x1x1x8xf32>
    %426 = vector.shape_cast %425 : vector<1x1x1x8xf32> to vector<1x8xf32>
    %427 = vector.broadcast %426 : vector<1x8xf32> to vector<2x8xf32>
    %428 = arith.addf %424, %427 : vector<2x8xf32>
    %c1_321 = arith.constant 1 : index
    %c3_322 = arith.constant 3 : index
    %c0_323 = arith.constant 0 : index
    %c0_324 = arith.constant 0 : index
    %429 = vector.load %arg5[%c1_321, %c3_322, %c0_323, %c0_324] : memref<2x4x32x8xbf16, #tpu.memory_space<vmem>>, vector<1x1x32x8xbf16>
    %430 = vector.shape_cast %429 : vector<1x1x32x8xbf16> to vector<32x8xbf16>
    %cst_325 = arith.constant dense<0.000000e+00> : vector<2x8xf32>
    %431 = tpu.matmul %288, %430, %cst_325 {dimension_numbers = #tpu.dot_dimension_numbers<[1], [0], [0], [1], [0, 0, 1, 1], [], []>} : vector<2x32xbf16>, vector<32x8xbf16>, vector<2x8xf32> -> vector<2x8xf32>
    %c1_326 = arith.constant 1 : index
    %c3_327 = arith.constant 3 : index
    %c0_328 = arith.constant 0 : index
    %c0_329 = arith.constant 0 : index
    %432 = vector.load %arg8[%c1_326, %c3_327, %c0_328, %c0_329] : memref<2x4x1x8xf32, #tpu.memory_space<vmem>>, vector<1x1x1x8xf32>
    %433 = vector.shape_cast %432 : vector<1x1x1x8xf32> to vector<1x8xf32>
    %434 = vector.broadcast %433 : vector<1x8xf32> to vector<2x8xf32>
    %435 = arith.addf %431, %434 : vector<2x8xf32>
    %c1_330 = arith.constant 1 : index
    %c3_331 = arith.constant 3 : index
    %c0_332 = arith.constant 0 : index
    %c0_333 = arith.constant 0 : index
    %436 = vector.load %arg6[%c1_330, %c3_331, %c0_332, %c0_333] : memref<2x4x32x8xbf16, #tpu.memory_space<vmem>>, vector<1x1x32x8xbf16>
    %437 = vector.shape_cast %436 : vector<1x1x32x8xbf16> to vector<32x8xbf16>
    %cst_334 = arith.constant dense<0.000000e+00> : vector<2x8xf32>
    %438 = tpu.matmul %288, %437, %cst_334 {dimension_numbers = #tpu.dot_dimension_numbers<[1], [0], [0], [1], [0, 0, 1, 1], [], []>} : vector<2x32xbf16>, vector<32x8xbf16>, vector<2x8xf32> -> vector<2x8xf32>
    %c1_335 = arith.constant 1 : index
    %c3_336 = arith.constant 3 : index
    %c0_337 = arith.constant 0 : index
    %c0_338 = arith.constant 0 : index
    %439 = vector.load %arg9[%c1_335, %c3_336, %c0_337, %c0_338] : memref<2x4x1x8xf32, #tpu.memory_space<vmem>>, vector<1x1x1x8xf32>
    %440 = vector.shape_cast %439 : vector<1x1x1x8xf32> to vector<1x8xf32>
    %441 = vector.broadcast %440 : vector<1x8xf32> to vector<2x8xf32>
    %442 = arith.addf %438, %441 : vector<2x8xf32>
    %443 = arith.truncf %428 : vector<2x8xf32> to vector<2x8xbf16>
    %444 = arith.truncf %435 : vector<2x8xf32> to vector<2x8xbf16>
    %cst_339 = arith.constant dense<0.000000e+00> : vector<2x2xf32>
    %445 = tpu.matmul %443, %444, %cst_339 {dimension_numbers = #tpu.dot_dimension_numbers<[1], [1], [0], [0], [0, 0, 1, 0], [], []>} : vector<2x8xbf16>, vector<2x8xbf16>, vector<2x2xf32> -> vector<2x2xf32>
    %cst_340 = arith.constant 0.353553385 : f32
    %446 = vector.broadcast %cst_340 : f32 to vector<2x2xf32>
    %447 = arith.mulf %445, %446 : vector<2x2xf32>
    %cst_341 = arith.constant dense<0xFF800000> : vector<2xf32>
    %448 = vector.multi_reduction <maximumf>, %447, %cst_341 [1] : vector<2x2xf32> to vector<2xf32>
    %449 = vector.shape_cast %448 : vector<2xf32> to vector<2x1xf32>
    %450 = vector.broadcast %449 : vector<2x1xf32> to vector<2x2xf32>
    %451 = arith.subf %447, %450 : vector<2x2xf32>
    %452 = math.exp %451 : vector<2x2xf32>
    %cst_342 = arith.constant dense<0.000000e+00> : vector<2xf32>
    %453 = vector.multi_reduction <add>, %452, %cst_342 [1] : vector<2x2xf32> to vector<2xf32>
    %454 = vector.shape_cast %453 : vector<2xf32> to vector<2x1xf32>
    %455 = arith.truncf %452 : vector<2x2xf32> to vector<2x2xbf16>
    %456 = arith.truncf %442 : vector<2x8xf32> to vector<2x8xbf16>
    %cst_343 = arith.constant dense<0.000000e+00> : vector<2x8xf32>
    %457 = tpu.matmul %455, %456, %cst_343 {dimension_numbers = #tpu.dot_dimension_numbers<[1], [0], [0], [1], [0, 0, 1, 1], [], []>} : vector<2x2xbf16>, vector<2x8xbf16>, vector<2x8xf32> -> vector<2x8xf32>
    %458 = tpu.reciprocal %454 {approx = true} : vector<2x1xf32> -> vector<2x1xf32>
    %459 = vector.broadcast %458 : vector<2x1xf32> to vector<2x8xf32>
    %460 = arith.mulf %457, %459 : vector<2x8xf32>
    %461 = arith.truncf %460 : vector<2x8xf32> to vector<2x8xbf16>
    %c1_344 = arith.constant 1 : index
    %c3_345 = arith.constant 3 : index
    %c0_346 = arith.constant 0 : index
    %c0_347 = arith.constant 0 : index
    %462 = vector.load %arg10[%c1_344, %c3_345, %c0_346, %c0_347] : memref<2x4x8x32xbf16, #tpu.memory_space<vmem>>, vector<1x1x8x32xbf16>
    %463 = vector.shape_cast %462 : vector<1x1x8x32xbf16> to vector<8x32xbf16>
    %cst_348 = arith.constant dense<0.000000e+00> : vector<2x32xf32>
    %464 = tpu.matmul %461, %463, %cst_348 {dimension_numbers = #tpu.dot_dimension_numbers<[1], [0], [0], [1], [0, 0, 1, 1], [], []>} : vector<2x8xbf16>, vector<8x32xbf16>, vector<2x32xf32> -> vector<2x32xf32>
    %465 = arith.addf %421, %464 : vector<2x32xf32>
    %c1_349 = arith.constant 1 : index
    %c0_350 = arith.constant 0 : index
    %c0_351 = arith.constant 0 : index
    %466 = vector.load %arg11[%c1_349, %c0_350, %c0_351] : memref<2x1x32xf32, #tpu.memory_space<vmem>>, vector<1x1x32xf32>
    %467 = vector.shape_cast %466 : vector<1x1x32xf32> to vector<1x32xf32>
    %468 = vector.broadcast %467 : vector<1x32xf32> to vector<2x32xf32>
    %469 = arith.addf %465, %468 : vector<2x32xf32>
    %470 = arith.addf %287, %469 : vector<2x32xf32>
    %c1_352 = arith.constant 1 : index
    %c0_353 = arith.constant 0 : index
    %c0_354 = arith.constant 0 : index
    %471 = vector.load %arg12[%c1_352, %c0_353, %c0_354] : memref<2x1x32xf32, #tpu.memory_space<vmem>>, vector<1x1x32xf32>
    %472 = vector.shape_cast %471 : vector<1x1x32xf32> to vector<1x32xf32>
    %c1_355 = arith.constant 1 : index
    %c0_356 = arith.constant 0 : index
    %c0_357 = arith.constant 0 : index
    %473 = vector.load %arg13[%c1_355, %c0_356, %c0_357] : memref<2x1x32xf32, #tpu.memory_space<vmem>>, vector<1x1x32xf32>
    %474 = vector.shape_cast %473 : vector<1x1x32xf32> to vector<1x32xf32>
    %cst_358 = arith.constant dense<0.000000e+00> : vector<2xf32>
    %475 = vector.multi_reduction <add>, %470, %cst_358 [1] : vector<2x32xf32> to vector<2xf32>
    %476 = vector.shape_cast %475 : vector<2xf32> to vector<2x1xf32>
    %cst_359 = arith.constant 3.200000e+01 : f32
    %477 = vector.broadcast %cst_359 : f32 to vector<2x1xf32>
    %478 = arith.divf %476, %477 : vector<2x1xf32>
    %479 = arith.mulf %470, %470 : vector<2x32xf32>
    %cst_360 = arith.constant dense<0.000000e+00> : vector<2xf32>
    %480 = vector.multi_reduction <add>, %479, %cst_360 [1] : vector<2x32xf32> to vector<2xf32>
    %481 = vector.shape_cast %480 : vector<2xf32> to vector<2x1xf32>
    %cst_361 = arith.constant 3.200000e+01 : f32
    %482 = vector.broadcast %cst_361 : f32 to vector<2x1xf32>
    %483 = arith.divf %481, %482 : vector<2x1xf32>
    %484 = arith.mulf %478, %478 : vector<2x1xf32>
    %485 = arith.subf %483, %484 : vector<2x1xf32>
    %cst_362 = arith.constant 0.000000e+00 : f32
    %486 = vector.broadcast %cst_362 : f32 to vector<2x1xf32>
    %487 = arith.maximumf %485, %486 : vector<2x1xf32>
    %cst_363 = arith.constant 9.99999974E-6 : f32
    %488 = vector.broadcast %cst_363 : f32 to vector<2x1xf32>
    %489 = arith.addf %487, %488 : vector<2x1xf32>
    %490 = math.rsqrt %489 : vector<2x1xf32>
    %491 = vector.broadcast %478 : vector<2x1xf32> to vector<2x32xf32>
    %492 = arith.subf %470, %491 : vector<2x32xf32>
    %493 = vector.broadcast %490 : vector<2x1xf32> to vector<2x32xf32>
    %494 = vector.broadcast %472 : vector<1x32xf32> to vector<2x32xf32>
    %495 = arith.mulf %493, %494 : vector<2x32xf32>
    %496 = arith.mulf %492, %495 : vector<2x32xf32>
    %497 = vector.broadcast %474 : vector<1x32xf32> to vector<2x32xf32>
    %498 = arith.addf %496, %497 : vector<2x32xf32>
    %499 = arith.truncf %498 : vector<2x32xf32> to vector<2x32xbf16>
    %c1_364 = arith.constant 1 : index
    %c0_365 = arith.constant 0 : index
    %c0_366 = arith.constant 0 : index
    %500 = vector.load %arg14[%c1_364, %c0_365, %c0_366] : memref<2x32x64xbf16, #tpu.memory_space<vmem>>, vector<1x32x64xbf16>
    %501 = vector.shape_cast %500 : vector<1x32x64xbf16> to vector<32x64xbf16>
    %cst_367 = arith.constant dense<0.000000e+00> : vector<2x64xf32>
    %502 = tpu.matmul %499, %501, %cst_367 {dimension_numbers = #tpu.dot_dimension_numbers<[1], [0], [0], [1], [0, 0, 1, 1], [], []>} : vector<2x32xbf16>, vector<32x64xbf16>, vector<2x64xf32> -> vector<2x64xf32>
    %c1_368 = arith.constant 1 : index
    %c0_369 = arith.constant 0 : index
    %c0_370 = arith.constant 0 : index
    %503 = vector.load %arg15[%c1_368, %c0_369, %c0_370] : memref<2x1x64xf32, #tpu.memory_space<vmem>>, vector<1x1x64xf32>
    %504 = vector.shape_cast %503 : vector<1x1x64xf32> to vector<1x64xf32>
    %505 = vector.broadcast %504 : vector<1x64xf32> to vector<2x64xf32>
    %506 = arith.addf %502, %505 : vector<2x64xf32>
    %cst_371 = arith.constant 0.000000e+00 : f32
    %507 = vector.broadcast %cst_371 : f32 to vector<2x64xf32>
    %508 = arith.maximumf %506, %507 : vector<2x64xf32>
    %509 = arith.truncf %508 : vector<2x64xf32> to vector<2x64xbf16>
    %c1_372 = arith.constant 1 : index
    %c0_373 = arith.constant 0 : index
    %c0_374 = arith.constant 0 : index
    %510 = vector.load %arg16[%c1_372, %c0_373, %c0_374] : memref<2x64x32xbf16, #tpu.memory_space<vmem>>, vector<1x64x32xbf16>
    %511 = vector.shape_cast %510 : vector<1x64x32xbf16> to vector<64x32xbf16>
    %cst_375 = arith.constant dense<0.000000e+00> : vector<2x32xf32>
    %512 = tpu.matmul %509, %511, %cst_375 {dimension_numbers = #tpu.dot_dimension_numbers<[1], [0], [0], [1], [0, 0, 1, 1], [], []>} : vector<2x64xbf16>, vector<64x32xbf16>, vector<2x32xf32> -> vector<2x32xf32>
    %c1_376 = arith.constant 1 : index
    %c0_377 = arith.constant 0 : index
    %c0_378 = arith.constant 0 : index
    %513 = vector.load %arg17[%c1_376, %c0_377, %c0_378] : memref<2x1x32xf32, #tpu.memory_space<vmem>>, vector<1x1x32xf32>
    %514 = vector.shape_cast %513 : vector<1x1x32xf32> to vector<1x32xf32>
    %515 = vector.broadcast %514 : vector<1x32xf32> to vector<2x32xf32>
    %516 = arith.addf %512, %515 : vector<2x32xf32>
    %517 = arith.addf %498, %516 : vector<2x32xf32>
    %c1_379 = arith.constant 1 : index
    %c0_380 = arith.constant 0 : index
    %c0_381 = arith.constant 0 : index
    %518 = vector.load %arg18[%c1_379, %c0_380, %c0_381] : memref<2x1x32xf32, #tpu.memory_space<vmem>>, vector<1x1x32xf32>
    %519 = vector.shape_cast %518 : vector<1x1x32xf32> to vector<1x32xf32>
    %c1_382 = arith.constant 1 : index
    %c0_383 = arith.constant 0 : index
    %c0_384 = arith.constant 0 : index
    %520 = vector.load %arg19[%c1_382, %c0_383, %c0_384] : memref<2x1x32xf32, #tpu.memory_space<vmem>>, vector<1x1x32xf32>
    %521 = vector.shape_cast %520 : vector<1x1x32xf32> to vector<1x32xf32>
    %cst_385 = arith.constant dense<0.000000e+00> : vector<2xf32>
    %522 = vector.multi_reduction <add>, %517, %cst_385 [1] : vector<2x32xf32> to vector<2xf32>
    %523 = vector.shape_cast %522 : vector<2xf32> to vector<2x1xf32>
    %cst_386 = arith.constant 3.200000e+01 : f32
    %524 = vector.broadcast %cst_386 : f32 to vector<2x1xf32>
    %525 = arith.divf %523, %524 : vector<2x1xf32>
    %526 = arith.mulf %517, %517 : vector<2x32xf32>
    %cst_387 = arith.constant dense<0.000000e+00> : vector<2xf32>
    %527 = vector.multi_reduction <add>, %526, %cst_387 [1] : vector<2x32xf32> to vector<2xf32>
    %528 = vector.shape_cast %527 : vector<2xf32> to vector<2x1xf32>
    %cst_388 = arith.constant 3.200000e+01 : f32
    %529 = vector.broadcast %cst_388 : f32 to vector<2x1xf32>
    %530 = arith.divf %528, %529 : vector<2x1xf32>
    %531 = arith.mulf %525, %525 : vector<2x1xf32>
    %532 = arith.subf %530, %531 : vector<2x1xf32>
    %cst_389 = arith.constant 0.000000e+00 : f32
    %533 = vector.broadcast %cst_389 : f32 to vector<2x1xf32>
    %534 = arith.maximumf %532, %533 : vector<2x1xf32>
    %cst_390 = arith.constant 9.99999974E-6 : f32
    %535 = vector.broadcast %cst_390 : f32 to vector<2x1xf32>
    %536 = arith.addf %534, %535 : vector<2x1xf32>
    %537 = math.rsqrt %536 : vector<2x1xf32>
    %538 = vector.broadcast %525 : vector<2x1xf32> to vector<2x32xf32>
    %539 = arith.subf %517, %538 : vector<2x32xf32>
    %540 = vector.broadcast %537 : vector<2x1xf32> to vector<2x32xf32>
    %541 = vector.broadcast %519 : vector<1x32xf32> to vector<2x32xf32>
    %542 = arith.mulf %540, %541 : vector<2x32xf32>
    %543 = arith.mulf %539, %542 : vector<2x32xf32>
    %544 = vector.broadcast %521 : vector<1x32xf32> to vector<2x32xf32>
    %545 = arith.addf %543, %544 : vector<2x32xf32>
    %c0_391 = arith.constant 0 : index
    %c0_392 = arith.constant 0 : index
    %546 = vector.load %arg20[%c0_391, %c0_392] : memref<1x32xf32, #tpu.memory_space<vmem>>, vector<1x32xf32>
    %cst_393 = arith.constant dense<0.000000e+00> : vector<1x2xf32>
    %547 = tpu.matmul %546, %545, %cst_393 {dimension_numbers = #tpu.dot_dimension_numbers<[1], [1], [0], [0], [0, 0, 1, 0], [], []>} : vector<1x32xf32>, vector<2x32xf32>, vector<1x2xf32> -> vector<1x2xf32>
    %c0_394 = arith.constant 0 : index
    %c0_395 = arith.constant 0 : index
    %548 = vector.load %arg21[%c0_394, %c0_395] : memref<1x1xf32, #tpu.memory_space<vmem>>, vector<1x1xf32>
    %549 = vector.broadcast %548 : vector<1x1xf32> to vector<1x2xf32>
    %550 = arith.addf %547, %549 : vector<1x2xf32>
    %551 = vector.shape_cast %550 : vector<1x2xf32> to vector<1x1x2xf32>
    %c0_396 = arith.constant 0 : index
    %c0_397 = arith.constant 0 : index
    %c0_398 = arith.constant 0 : index
    %552 = vector.load %arg22[%c0_396, %c0_397, %c0_398] : memref<1x1x2xf32, #tpu.memory_space<vmem>>, vector<1x1x2xf32>
    tpu.vector_store %arg22[%c0_396, %c0_397, %c0_398], %551 {strides = array<i32>} : memref<1x1x2xf32, #tpu.memory_space<vmem>>, vector<1x1x2xf32>,
    return
  }
  func.func @transform_0(%arg0: i32) -> (i32, i32, i32) {
    %c0_i32 = arith.constant 0 : i32
    %c0_i32_0 = arith.constant 0 : i32
    %c0_i32_1 = arith.constant 0 : i32
    return %arg0, %c0_i32, %c0_i32_0 : i32, i32, i32
  }
  func.func @transform_1(%arg0: i32) -> (i32, i32, i32) {
    %c0_i32 = arith.constant 0 : i32
    %c0_i32_0 = arith.constant 0 : i32
    %c0_i32_1 = arith.constant 0 : i32
    return %arg0, %c0_i32, %c0_i32_0 : i32, i32, i32
  }
  func.func @transform_2(%arg0: i32) -> (i32, i32) {
    %c0_i32 = arith.constant 0 : i32
    %c0_i32_0 = arith.constant 0 : i32
    %c0_i32_1 = arith.constant 0 : i32
    return %c0_i32, %c0_i32_0 : i32, i32
  }
  func.func @transform_3(%arg0: i32) -> (i32, i32, i32, i32) {
    %c0_i32 = arith.constant 0 : i32
    %c0_i32_0 = arith.constant 0 : i32
    %c0_i32_1 = arith.constant 0 : i32
    %c0_i32_2 = arith.constant 0 : i32
    %c0_i32_3 = arith.constant 0 : i32
    return %c0_i32, %c0_i32_0, %c0_i32_1, %c0_i32_2 : i32, i32, i32, i32
  }
  func.func @transform_4(%arg0: i32) -> (i32, i32, i32, i32) {
    %c0_i32 = arith.constant 0 : i32
    %c0_i32_0 = arith.constant 0 : i32
    %c0_i32_1 = arith.constant 0 : i32
    %c0_i32_2 = arith.constant 0 : i32
    %c0_i32_3 = arith.constant 0 : i32
    return %c0_i32, %c0_i32_0, %c0_i32_1, %c0_i32_2 : i32, i32, i32, i32
  }
  func.func @transform_5(%arg0: i32) -> (i32, i32, i32, i32) {
    %c0_i32 = arith.constant 0 : i32
    %c0_i32_0 = arith.constant 0 : i32
    %c0_i32_1 = arith.constant 0 : i32
    %c0_i32_2 = arith.constant 0 : i32
    %c0_i32_3 = arith.constant 0 : i32
    return %c0_i32, %c0_i32_0, %c0_i32_1, %c0_i32_2 : i32, i32, i32, i32
  }
  func.func @transform_6(%arg0: i32) -> (i32, i32, i32, i32) {
    %c0_i32 = arith.constant 0 : i32
    %c0_i32_0 = arith.constant 0 : i32
    %c0_i32_1 = arith.constant 0 : i32
    %c0_i32_2 = arith.constant 0 : i32
    %c0_i32_3 = arith.constant 0 : i32
    return %c0_i32, %c0_i32_0, %c0_i32_1, %c0_i32_2 : i32, i32, i32, i32
  }
  func.func @transform_7(%arg0: i32) -> (i32, i32, i32, i32) {
    %c0_i32 = arith.constant 0 : i32
    %c0_i32_0 = arith.constant 0 : i32
    %c0_i32_1 = arith.constant 0 : i32
    %c0_i32_2 = arith.constant 0 : i32
    %c0_i32_3 = arith.constant 0 : i32
    return %c0_i32, %c0_i32_0, %c0_i32_1, %c0_i32_2 : i32, i32, i32, i32
  }
  func.func @transform_8(%arg0: i32) -> (i32, i32, i32, i32) {
    %c0_i32 = arith.constant 0 : i32
    %c0_i32_0 = arith.constant 0 : i32
    %c0_i32_1 = arith.constant 0 : i32
    %c0_i32_2 = arith.constant 0 : i32
    %c0_i32_3 = arith.constant 0 : i32
    return %c0_i32, %c0_i32_0, %c0_i32_1, %c0_i32_2 : i32, i32, i32, i32
  }
  func.func @transform_9(%arg0: i32) -> (i32, i32, i32, i32) {
    %c0_i32 = arith.constant 0 : i32
    %c0_i32_0 = arith.constant 0 : i32
    %c0_i32_1 = arith.constant 0 : i32
    %c0_i32_2 = arith.constant 0 : i32
    %c0_i32_3 = arith.constant 0 : i32
    return %c0_i32, %c0_i32_0, %c0_i32_1, %c0_i32_2 : i32, i32, i32, i32
  }
  func.func @transform_10(%arg0: i32) -> (i32, i32, i32) {
    %c0_i32 = arith.constant 0 : i32
    %c0_i32_0 = arith.constant 0 : i32
    %c0_i32_1 = arith.constant 0 : i32
    %c0_i32_2 = arith.constant 0 : i32
    return %c0_i32, %c0_i32_0, %c0_i32_1 : i32, i32, i32
  }
  func.func @transform_11(%arg0: i32) -> (i32, i32, i32) {
    %c0_i32 = arith.constant 0 : i32
    %c0_i32_0 = arith.constant 0 : i32
    %c0_i32_1 = arith.constant 0 : i32
    %c0_i32_2 = arith.constant 0 : i32
    return %c0_i32, %c0_i32_0, %c0_i32_1 : i32, i32, i32
  }
  func.func @transform_12(%arg0: i32) -> (i32, i32, i32) {
    %c0_i32 = arith.constant 0 : i32
    %c0_i32_0 = arith.constant 0 : i32
    %c0_i32_1 = arith.constant 0 : i32
    %c0_i32_2 = arith.constant 0 : i32
    return %c0_i32, %c0_i32_0, %c0_i32_1 : i32, i32, i32
  }
  func.func @transform_13(%arg0: i32) -> (i32, i32, i32) {
    %c0_i32 = arith.constant 0 : i32
    %c0_i32_0 = arith.constant 0 : i32
    %c0_i32_1 = arith.constant 0 : i32
    %c0_i32_2 = arith.constant 0 : i32
    return %c0_i32, %c0_i32_0, %c0_i32_1 : i32, i32, i32
  }
  func.func @transform_14(%arg0: i32) -> (i32, i32, i32) {
    %c0_i32 = arith.constant 0 : i32
    %c0_i32_0 = arith.constant 0 : i32
    %c0_i32_1 = arith.constant 0 : i32
    %c0_i32_2 = arith.constant 0 : i32
    return %c0_i32, %c0_i32_0, %c0_i32_1 : i32, i32, i32
  }
  func.func @transform_15(%arg0: i32) -> (i32, i32, i32) {
    %c0_i32 = arith.constant 0 : i32
    %c0_i32_0 = arith.constant 0 : i32
    %c0_i32_1 = arith.constant 0 : i32
    %c0_i32_2 = arith.constant 0 : i32
    return %c0_i32, %c0_i32_0, %c0_i32_1 : i32, i32, i32
  }
  func.func @transform_16(%arg0: i32) -> (i32, i32, i32) {
    %c0_i32 = arith.constant 0 : i32
    %c0_i32_0 = arith.constant 0 : i32
    %c0_i32_1 = arith.constant 0 : i32
    %c0_i32_2 = arith.constant 0 : i32
    return %c0_i32, %c0_i32_0, %c0_i32_1 : i32, i32, i32
  }
  func.func @transform_17(%arg0: i32) -> (i32, i32, i32) {
    %c0_i32 = arith.constant 0 : i32
    %c0_i32_0 = arith.constant 0 : i32
    %c0_i32_1 = arith.constant 0 : i32
    %c0_i32_2 = arith.constant 0 : i32
    return %c0_i32, %c0_i32_0, %c0_i32_1 : i32, i32, i32
  }
  func.func @transform_18(%arg0: i32) -> (i32, i32, i32) {
    %c0_i32 = arith.constant 0 : i32
    %c0_i32_0 = arith.constant 0 : i32
    %c0_i32_1 = arith.constant 0 : i32
    %c0_i32_2 = arith.constant 0 : i32
    return %c0_i32, %c0_i32_0, %c0_i32_1 : i32, i32, i32
  }
  func.func @transform_19(%arg0: i32) -> (i32, i32) {
    %c0_i32 = arith.constant 0 : i32
    %c0_i32_0 = arith.constant 0 : i32
    %c0_i32_1 = arith.constant 0 : i32
    return %c0_i32, %c0_i32_0 : i32, i32
  }
  func.func @transform_20(%arg0: i32) -> (i32, i32) {
    %c0_i32 = arith.constant 0 : i32
    %c0_i32_0 = arith.constant 0 : i32
    %c0_i32_1 = arith.constant 0 : i32
    return %c0_i32, %c0_i32_0 : i32, i32
  }
  func.func @transform_21(%arg0: i32) -> (i32, i32, i32) {
    %c0_i32 = arith.constant 0 : i32
    %c0_i32_0 = arith.constant 0 : i32
    %c0_i32_1 = arith.constant 0 : i32
    return %arg0, %c0_i32, %c0_i32_0 : i32, i32, i32
  }
}

</mosaic_0001>

<llo_original>
// kernel: forward.1
$region0: #{forward.1}
  #allocation0 [shape = 'u32[]', space=smem, size = 0x4, offset = 0x4, fixed_abs, tag = 'smem constant byte address 0x4 - core index']
  #allocation1 [shape = 'u32[144,128]{1,0:T(1,128)}', space=vmem, size = 0x12000, scoped, tag = 'internal scratch']
  #allocation2 [shape = 'f32[1,1]{1,0:T(1,128)S(1)}', space=vmem, size = 0x200, scoped, tag = 'scoped memory for forward.1']
  %s0 = inlined_call_operand.vmem [shape: f32[8,2,4], index: 0, kind: input, shape index: {}]
  %s1 = inlined_call_operand.vmem [shape: f32[8,1,32], index: 1, kind: input, shape index: {}]
  %s2 = inlined_call_operand.vmem [shape: f32[4,32], index: 2, kind: input, shape index: {}]
  %s3 = inlined_call_operand.vmem [shape: bf16[2,4,32,8], index: 3, kind: input, shape index: {}]
  %s4 = inlined_call_operand.vmem [shape: bf16[2,4,32,8], index: 4, kind: input, shape index: {}]
  %s5 = inlined_call_operand.vmem [shape: bf16[2,4,32,8], index: 5, kind: input, shape index: {}]
  %s6 = inlined_call_operand.vmem [shape: f32[2,4,1,8], index: 6, kind: input, shape index: {}]
  %s7 = inlined_call_operand.vmem [shape: f32[2,4,1,8], index: 7, kind: input, shape index: {}]
  %s8 = inlined_call_operand.vmem [shape: f32[2,4,1,8], index: 8, kind: input, shape index: {}]
  %s9 = inlined_call_operand.vmem [shape: bf16[2,4,8,32], index: 9, kind: input, shape index: {}]
  %s10 = inlined_call_operand.vmem [shape: f32[2,1,32], index: 10, kind: input, shape index: {}]
  %s11 = inlined_call_operand.vmem [shape: f32[2,1,32], index: 11, kind: input, shape index: {}]
  %s12 = inlined_call_operand.vmem [shape: f32[2,1,32], index: 12, kind: input, shape index: {}]
  %s13 = inlined_call_operand.vmem [shape: bf16[2,32,64], index: 13, kind: input, shape index: {}]
  %s14 = inlined_call_operand.vmem [shape: f32[2,1,64], index: 14, kind: input, shape index: {}]
  %s15 = inlined_call_operand.vmem [shape: bf16[2,64,32], index: 15, kind: input, shape index: {}]
  %s16 = inlined_call_operand.vmem [shape: f32[2,1,32], index: 16, kind: input, shape index: {}]
  %s17 = inlined_call_operand.vmem [shape: f32[2,1,32], index: 17, kind: input, shape index: {}]
  %s18 = inlined_call_operand.vmem [shape: f32[2,1,32], index: 18, kind: input, shape index: {}]
  %s19 = inlined_call_operand.vmem [shape: f32[1,32], index: 19, kind: input, shape index: {}]
  %s20 = inlined_call_operand.<no memory space> [shape: f32[1,1], index: 20, kind: input, shape index: {}]
  %s21 = inlined_call_operand.vmem [shape: f32[8,1,2], index: 21, kind: output, shape index: {}]
  %s22 = sld [smem:[#allocation0]]
  $region117: #{forward.1} parent=0
    _
  %s24 = ssub.s32 1, %s22
  %s25 = scalar_select 0, %s24, %s22
  %v26 = vstv %s20
  %27 = vst [vmem:[#allocation2] sm:$0x1] %v26
  loop: start=0, step=1, limit=10
  $region2: #{forward.1} parent=0 // loop_pre_header
    _
  $region3: #{forward.1} parent=0 // loop_header
    %s29 = sphi 0, %s33
    %p30 = scmp.ge.s32.totalorder %s29, 10
    %s39 = sphi 0, %s41
    %s42 = sphi 0, %s39
    %s43 = sphi 0, %s42
    %s59 = sphi 0, %s43
    %s65 = sphi 0, %s67
    %s68 = sphi 0, %s65
    %s69 = sphi 0, %s68
    %s85 = sphi 0, %s69
    %s89 = sphi 0, %s89
    %s91 = sphi 0, %s89
    %s92 = sphi 0, %s91
    %s106 = sphi 0, %s92
    %s110 = sphi 0, %s110
    %s112 = sphi 0, %s110
    %s113 = sphi 0, %s112
    %s127 = sphi 0, %s113
    %s131 = sphi 0, %s131
    %s133 = sphi 0, %s131
    %s134 = sphi 0, %s133
    %s148 = sphi 0, %s134
    %s152 = sphi 0, %s152
    %s154 = sphi 0, %s152
    %s155 = sphi 0, %s154
    %s169 = sphi 0, %s155
    %s173 = sphi 0, %s173
    %s175 = sphi 0, %s173
    %s176 = sphi 0, %s175
    %s190 = sphi 0, %s176
    %s194 = sphi 0, %s194
    %s196 = sphi 0, %s194
    %s197 = sphi 0, %s196
    %s211 = sphi 0, %s197
    %s215 = sphi 0, %s215
    %s217 = sphi 0, %s215
    %s218 = sphi 0, %s217
    %s232 = sphi 0, %s218
    %s236 = sphi 0, %s236
    %s238 = sphi 0, %s236
    %s239 = sphi 0, %s238
    %s253 = sphi 0, %s239
    %s257 = sphi 0, %s257
    %s259 = sphi 0, %s257
    %s260 = sphi 0, %s259
    %s274 = sphi 0, %s260
    %s278 = sphi 0, %s278
    %s280 = sphi 0, %s278
    %s281 = sphi 0, %s280
    %s295 = sphi 0, %s281
    %s299 = sphi 0, %s299
    %s301 = sphi 0, %s299
    %s302 = sphi 0, %s301
    %s316 = sphi 0, %s302
    %s320 = sphi 0, %s320
    %s322 = sphi 0, %s320
    %s323 = sphi 0, %s322
    %s337 = sphi 0, %s323
    %s341 = sphi 0, %s341
    %s343 = sphi 0, %s341
    %s344 = sphi 0, %s343
    %s358 = sphi 0, %s344
    %s362 = sphi 0, %s362
    %s364 = sphi 0, %s362
    %s365 = sphi 0, %s364
    %s379 = sphi 0, %s365
    %s383 = sphi 0, %s383
    %s385 = sphi 0, %s383
    %s386 = sphi 0, %s385
    %s400 = sphi 0, %s386
    %s404 = sphi 0, %s404
    %s406 = sphi 0, %s404
    %s407 = sphi 0, %s406
    %s421 = sphi 0, %s407
    %s425 = sphi 0, %s425
    %s427 = sphi 0, %s425
    %s428 = sphi 0, %s427
    %s442 = sphi 0, %s428
    %s446 = sphi 0, %s446
    %s448 = sphi 0, %s446
    %s449 = sphi 0, %s448
    %s463 = sphi 0, %s449
    %s467 = sphi 0, %s467
    %s469 = sphi 0, %s467
    %s470 = sphi 0, %s469
    %s484 = sphi 0, %s470
    %s490 = sphi 0, %s492
    %s493 = sphi 0, %s490
    %s494 = sphi 0, %s493
    %s510 = sphi 0, %s494
  $region4: #{forward.1} parent=0 // loop_header_branch
    %32 = sbr.rel (%p30) target = $region8
  $region5: #{forward.1} parent=0 // loop_body
    %s34 = ssub.s32 %s29, 1
    %s35 = ssub.s32 %s29, 2
    %s36 = sadd.s32 %s29, 1
    %s37 = ssub.s32 %s29, %s36
    %p38 = scmp.eq.s32.totalorder %s37, 0
    %s40 = sadd.s32 %s39, 1
    %s41 = scalar_select %p38, %s39, %s40
    %p44 = pneg %p38
    %p45 = scmp.eq.s32.totalorder %s29, 7
    %p46 = por %p44, %p45
    %p47 = scmp.ne.s32.totalorder %s39, %s42
    %p48 = scmp.eq.s32.totalorder %s29, 0
    %p49 = por %p47, %p48
    %p50 = scmp.ne.s32.totalorder %s39, %s42
    %p51 = scmp.eq.s32.totalorder %s34, 7
    %p52 = por %p50, %p51
    %p53 = scmp.ne.s32.totalorder %s42, %s43
    %p54 = scmp.eq.s32.totalorder %s34, 0
    %p55 = por %p53, %p54
    %p56 = scmp.ne.s32.totalorder %s42, %s43
    %p57 = scmp.eq.s32.totalorder %s35, 7
    %p58 = por %p56, %p57
    %p60 = scmp.ne.s32.totalorder %s43, %s59
    %p61 = scmp.eq.s32.totalorder %s35, 0
    %p62 = por %p60, %p61
    %s63 = ssub.s32 %s29, %s36
    %p64 = scmp.eq.s32.totalorder %s63, 0
    %s66 = sadd.s32 %s65, 1
    %s67 = scalar_select %p64, %s65, %s66
    %p70 = pneg %p64
    %p71 = scmp.eq.s32.totalorder %s29, 7
    %p72 = por %p70, %p71
    %p73 = scmp.ne.s32.totalorder %s65, %s68
    %p74 = scmp.eq.s32.totalorder %s29, 0
    %p75 = por %p73, %p74
    %p76 = scmp.ne.s32.totalorder %s65, %s68
    %p77 = scmp.eq.s32.totalorder %s34, 7
    %p78 = por %p76, %p77
    %p79 = scmp.ne.s32.totalorder %s68, %s69
    %p80 = scmp.eq.s32.totalorder %s34, 0
    %p81 = por %p79, %p80
    %p82 = scmp.ne.s32.totalorder %s68, %s69
    %p83 = scmp.eq.s32.totalorder %s35, 7
    %p84 = por %p82, %p83
    %p86 = scmp.ne.s32.totalorder %s69, %s85
    %p87 = scmp.eq.s32.totalorder %s35, 0
    %p88 = por %p86, %p87
    %s90 = sadd.s32 %s89, 1
    %p93 = scmp.eq.s32.totalorder %s29, 7
    %p94 = scmp.ne.s32.totalorder %s89, %s91
    %p95 = scmp.eq.s32.totalorder %s29, 0
    %p96 = por %p94, %p95
    %p97 = scmp.ne.s32.totalorder %s89, %s91
    %p98 = scmp.eq.s32.totalorder %s34, 7
    %p99 = por %p97, %p98
    %p100 = scmp.ne.s32.totalorder %s91, %s92
    %p101 = scmp.eq.s32.totalorder %s34, 0
    %p102 = por %p100, %p101
    %p103 = scmp.ne.s32.totalorder %s91, %s92
    %p104 = scmp.eq.s32.totalorder %s35, 7
    %p105 = por %p103, %p104
    %p107 = scmp.ne.s32.totalorder %s92, %s106
    %p108 = scmp.eq.s32.totalorder %s35, 0
    %p109 = por %p107, %p108
    %s111 = sadd.s32 %s110, 1
    %p114 = scmp.eq.s32.totalorder %s29, 7
    %p115 = scmp.ne.s32.totalorder %s110, %s112
    %p116 = scmp.eq.s32.totalorder %s29, 0
    %p117 = por %p115, %p116
    %p118 = scmp.ne.s32.totalorder %s110, %s112
    %p119 = scmp.eq.s32.totalorder %s34, 7
    %p120 = por %p118, %p119
    %p121 = scmp.ne.s32.totalorder %s112, %s113
    %p122 = scmp.eq.s32.totalorder %s34, 0
    %p123 = por %p121, %p122
    %p124 = scmp.ne.s32.totalorder %s112, %s113
    %p125 = scmp.eq.s32.totalorder %s35, 7
    %p126 = por %p124, %p125
    %p128 = scmp.ne.s32.totalorder %s113, %s127
    %p129 = scmp.eq.s32.totalorder %s35, 0
    %p130 = por %p128, %p129
    %s132 = sadd.s32 %s131, 1
    %p135 = scmp.eq.s32.totalorder %s29, 7
    %p136 = scmp.ne.s32.totalorder %s131, %s133
    %p137 = scmp.eq.s32.totalorder %s29, 0
    %p138 = por %p136, %p137
    %p139 = scmp.ne.s32.totalorder %s131, %s133
    %p140 = scmp.eq.s32.totalorder %s34, 7
    %p141 = por %p139, %p140
    %p142 = scmp.ne.s32.totalorder %s133, %s134
    %p143 = scmp.eq.s32.totalorder %s34, 0
    %p144 = por %p142, %p143
    %p145 = scmp.ne.s32.totalorder %s133, %s134
    %p146 = scmp.eq.s32.totalorder %s35, 7
    %p147 = por %p145, %p146
    %p149 = scmp.ne.s32.totalorder %s134, %s148
    %p150 = scmp.eq.s32.totalorder %s35, 0
    %p151 = por %p149, %p150
    %s153 = sadd.s32 %s152, 1
    %p156 = scmp.eq.s32.totalorder %s29, 7
    %p157 = scmp.ne.s32.totalorder %s152, %s154
    %p158 = scmp.eq.s32.totalorder %s29, 0
    %p159 = por %p157, %p158
    %p160 = scmp.ne.s32.totalorder %s152, %s154
    %p161 = scmp.eq.s32.totalorder %s34, 7
    %p162 = por %p160, %p161
    %p163 = scmp.ne.s32.totalorder %s154, %s155
    %p164 = scmp.eq.s32.totalorder %s34, 0
    %p165 = por %p163, %p164
    %p166 = scmp.ne.s32.totalorder %s154, %s155
    %p167 = scmp.eq.s32.totalorder %s35, 7
    %p168 = por %p166, %p167
    %p170 = scmp.ne.s32.totalorder %s155, %s169
    %p171 = scmp.eq.s32.totalorder %s35, 0
    %p172 = por %p170, %p171
    %s174 = sadd.s32 %s173, 1
    %p177 = scmp.eq.s32.totalorder %s29, 7
    %p178 = scmp.ne.s32.totalorder %s173, %s175
    %p179 = scmp.eq.s32.totalorder %s29, 0
    %p180 = por %p178, %p179
    %p181 = scmp.ne.s32.totalorder %s173, %s175
    %p182 = scmp.eq.s32.totalorder %s34, 7
    %p183 = por %p181, %p182
    %p184 = scmp.ne.s32.totalorder %s175, %s176
    %p185 = scmp.eq.s32.totalorder %s34, 0
    %p186 = por %p184, %p185
    %p187 = scmp.ne.s32.totalorder %s175, %s176
    %p188 = scmp.eq.s32.totalorder %s35, 7
    %p189 = por %p187, %p188
    %p191 = scmp.ne.s32.totalorder %s176, %s190
    %p192 = scmp.eq.s32.totalorder %s35, 0
    %p193 = por %p191, %p192
    %s195 = sadd.s32 %s194, 1
    %p198 = scmp.eq.s32.totalorder %s29, 7
    %p199 = scmp.ne.s32.totalorder %s194, %s196
    %p200 = scmp.eq.s32.totalorder %s29, 0
    %p201 = por %p199, %p200
    %p202 = scmp.ne.s32.totalorder %s194, %s196
    %p203 = scmp.eq.s32.totalorder %s34, 7
    %p204 = por %p202, %p203
    %p205 = scmp.ne.s32.totalorder %s196, %s197
    %p206 = scmp.eq.s32.totalorder %s34, 0
    %p207 = por %p205, %p206
    %p208 = scmp.ne.s32.totalorder %s196, %s197
    %p209 = scmp.eq.s32.totalorder %s35, 7
    %p210 = por %p208, %p209
    %p212 = scmp.ne.s32.totalorder %s197, %s211
    %p213 = scmp.eq.s32.totalorder %s35, 0
    %p214 = por %p212, %p213
    %s216 = sadd.s32 %s215, 1
    %p219 = scmp.eq.s32.totalorder %s29, 7
    %p220 = scmp.ne.s32.totalorder %s215, %s217
    %p221 = scmp.eq.s32.totalorder %s29, 0
    %p222 = por %p220, %p221
    %p223 = scmp.ne.s32.totalorder %s215, %s217
    %p224 = scmp.eq.s32.totalorder %s34, 7
    %p225 = por %p223, %p224
    %p226 = scmp.ne.s32.totalorder %s217, %s218
    %p227 = scmp.eq.s32.totalorder %s34, 0
    %p228 = por %p226, %p227
    %p229 = scmp.ne.s32.totalorder %s217, %s218
    %p230 = scmp.eq.s32.totalorder %s35, 7
    %p231 = por %p229, %p230
    %p233 = scmp.ne.s32.totalorder %s218, %s232
    %p234 = scmp.eq.s32.totalorder %s35, 0
    %p235 = por %p233, %p234
    %s237 = sadd.s32 %s236, 1
    %p240 = scmp.eq.s32.totalorder %s29, 7
    %p241 = scmp.ne.s32.totalorder %s236, %s238
    %p242 = scmp.eq.s32.totalorder %s29, 0
    %p243 = por %p241, %p242
    %p244 = scmp.ne.s32.totalorder %s236, %s238
    %p245 = scmp.eq.s32.totalorder %s34, 7
    %p246 = por %p244, %p245
    %p247 = scmp.ne.s32.totalorder %s238, %s239
    %p248 = scmp.eq.s32.totalorder %s34, 0
    %p249 = por %p247, %p248
    %p250 = scmp.ne.s32.totalorder %s238, %s239
    %p251 = scmp.eq.s32.totalorder %s35, 7
    %p252 = por %p250, %p251
    %p254 = scmp.ne.s32.totalorder %s239, %s253
    %p255 = scmp.eq.s32.totalorder %s35, 0
    %p256 = por %p254, %p255
    %s258 = sadd.s32 %s257, 1
    %p261 = scmp.eq.s32.totalorder %s29, 7
    %p262 = scmp.ne.s32.totalorder %s257, %s259
    %p263 = scmp.eq.s32.totalorder %s29, 0
    %p264 = por %p262, %p263
    %p265 = scmp.ne.s32.totalorder %s257, %s259
    %p266 = scmp.eq.s32.totalorder %s34, 7
    %p267 = por %p265, %p266
    %p268 = scmp.ne.s32.totalorder %s259, %s260
    %p269 = scmp.eq.s32.totalorder %s34, 0
    %p270 = por %p268, %p269
    %p271 = scmp.ne.s32.totalorder %s259, %s260
    %p272 = scmp.eq.s32.totalorder %s35, 7
    %p273 = por %p271, %p272
    %p275 = scmp.ne.s32.totalorder %s260, %s274
    %p276 = scmp.eq.s32.totalorder %s35, 0
    %p277 = por %p275, %p276
    %s279 = sadd.s32 %s278, 1
    %p282 = scmp.eq.s32.totalorder %s29, 7
    %p283 = scmp.ne.s32.totalorder %s278, %s280
    %p284 = scmp.eq.s32.totalorder %s29, 0
    %p285 = por %p283, %p284
    %p286 = scmp.ne.s32.totalorder %s278, %s280
    %p287 = scmp.eq.s32.totalorder %s34, 7
    %p288 = por %p286, %p287
    %p289 = scmp.ne.s32.totalorder %s280, %s281
    %p290 = scmp.eq.s32.totalorder %s34, 0
    %p291 = por %p289, %p290
    %p292 = scmp.ne.s32.totalorder %s280, %s281
    %p293 = scmp.eq.s32.totalorder %s35, 7
    %p294 = por %p292, %p293
    %p296 = scmp.ne.s32.totalorder %s281, %s295
    %p297 = scmp.eq.s32.totalorder %s35, 0
    %p298 = por %p296, %p297
    %s300 = sadd.s32 %s299, 1
    %p303 = scmp.eq.s32.totalorder %s29, 7
    %p304 = scmp.ne.s32.totalorder %s299, %s301
    %p305 = scmp.eq.s32.totalorder %s29, 0
    %p306 = por %p304, %p305
    %p307 = scmp.ne.s32.totalorder %s299, %s301
    %p308 = scmp.eq.s32.totalorder %s34, 7
    %p309 = por %p307, %p308
    %p310 = scmp.ne.s32.totalorder %s301, %s302
    %p311 = scmp.eq.s32.totalorder %s34, 0
    %p312 = por %p310, %p311
    %p313 = scmp.ne.s32.totalorder %s301, %s302
    %p314 = scmp.eq.s32.totalorder %s35, 7
    %p315 = por %p313, %p314
    %p317 = scmp.ne.s32.totalorder %s302, %s316
    %p318 = scmp.eq.s32.totalorder %s35, 0
    %p319 = por %p317, %p318
    %s321 = sadd.s32 %s320, 1
    %p324 = scmp.eq.s32.totalorder %s29, 7
    %p325 = scmp.ne.s32.totalorder %s320, %s322
    %p326 = scmp.eq.s32.totalorder %s29, 0
    %p327 = por %p325, %p326
    %p328 = scmp.ne.s32.totalorder %s320, %s322
    %p329 = scmp.eq.s32.totalorder %s34, 7
    %p330 = por %p328, %p329
    %p331 = scmp.ne.s32.totalorder %s322, %s323
    %p332 = scmp.eq.s32.totalorder %s34, 0
    %p333 = por %p331, %p332
    %p334 = scmp.ne.s32.totalorder %s322, %s323
    %p335 = scmp.eq.s32.totalorder %s35, 7
    %p336 = por %p334, %p335
    %p338 = scmp.ne.s32.totalorder %s323, %s337
    %p339 = scmp.eq.s32.totalorder %s35, 0
    %p340 = por %p338, %p339
    %s342 = sadd.s32 %s341, 1
    %p345 = scmp.eq.s32.totalorder %s29, 7
    %p346 = scmp.ne.s32.totalorder %s341, %s343
    %p347 = scmp.eq.s32.totalorder %s29, 0
    %p348 = por %p346, %p347
    %p349 = scmp.ne.s32.totalorder %s341, %s343
    %p350 = scmp.eq.s32.totalorder %s34, 7
    %p351 = por %p349, %p350
    %p352 = scmp.ne.s32.totalorder %s343, %s344
    %p353 = scmp.eq.s32.totalorder %s34, 0
    %p354 = por %p352, %p353
    %p355 = scmp.ne.s32.totalorder %s343, %s344
    %p356 = scmp.eq.s32.totalorder %s35, 7
    %p357 = por %p355, %p356
    %p359 = scmp.ne.s32.totalorder %s344, %s358
    %p360 = scmp.eq.s32.totalorder %s35, 0
    %p361 = por %p359, %p360
    %s363 = sadd.s32 %s362, 1
    %p366 = scmp.eq.s32.totalorder %s29, 7
    %p367 = scmp.ne.s32.totalorder %s362, %s364
    %p368 = scmp.eq.s32.totalorder %s29, 0
    %p369 = por %p367, %p368
    %p370 = scmp.ne.s32.totalorder %s362, %s364
    %p371 = scmp.eq.s32.totalorder %s34, 7
    %p372 = por %p370, %p371
    %p373 = scmp.ne.s32.totalorder %s364, %s365
    %p374 = scmp.eq.s32.totalorder %s34, 0
    %p375 = por %p373, %p374
    %p376 = scmp.ne.s32.totalorder %s364, %s365
    %p377 = scmp.eq.s32.totalorder %s35, 7
    %p378 = por %p376, %p377
    %p380 = scmp.ne.s32.totalorder %s365, %s379
    %p381 = scmp.eq.s32.totalorder %s35, 0
    %p382 = por %p380, %p381
    %s384 = sadd.s32 %s383, 1
    %p387 = scmp.eq.s32.totalorder %s29, 7
    %p388 = scmp.ne.s32.totalorder %s383, %s385
    %p389 = scmp.eq.s32.totalorder %s29, 0
    %p390 = por %p388, %p389
    %p391 = scmp.ne.s32.totalorder %s383, %s385
    %p392 = scmp.eq.s32.totalorder %s34, 7
    %p393 = por %p391, %p392
    %p394 = scmp.ne.s32.totalorder %s385, %s386
    %p395 = scmp.eq.s32.totalorder %s34, 0
    %p396 = por %p394, %p395
    %p397 = scmp.ne.s32.totalorder %s385, %s386
    %p398 = scmp.eq.s32.totalorder %s35, 7
    %p399 = por %p397, %p398
    %p401 = scmp.ne.s32.totalorder %s386, %s400
    %p402 = scmp.eq.s32.totalorder %s35, 0
    %p403 = por %p401, %p402
    %s405 = sadd.s32 %s404, 1
    %p408 = scmp.eq.s32.totalorder %s29, 7
    %p409 = scmp.ne.s32.totalorder %s404, %s406
    %p410 = scmp.eq.s32.totalorder %s29, 0
    %p411 = por %p409, %p410
    %p412 = scmp.ne.s32.totalorder %s404, %s406
    %p413 = scmp.eq.s32.totalorder %s34, 7
    %p414 = por %p412, %p413
    %p415 = scmp.ne.s32.totalorder %s406, %s407
    %p416 = scmp.eq.s32.totalorder %s34, 0
    %p417 = por %p415, %p416
    %p418 = scmp.ne.s32.totalorder %s406, %s407
    %p419 = scmp.eq.s32.totalorder %s35, 7
    %p420 = por %p418, %p419
    %p422 = scmp.ne.s32.totalorder %s407, %s421
    %p423 = scmp.eq.s32.totalorder %s35, 0
    %p424 = por %p422, %p423
    %s426 = sadd.s32 %s425, 1
    %p429 = scmp.eq.s32.totalorder %s29, 7
    %p430 = scmp.ne.s32.totalorder %s425, %s427
    %p431 = scmp.eq.s32.totalorder %s29, 0
    %p432 = por %p430, %p431
    %p433 = scmp.ne.s32.totalorder %s425, %s427
    %p434 = scmp.eq.s32.totalorder %s34, 7
    %p435 = por %p433, %p434
    %p436 = scmp.ne.s32.totalorder %s427, %s428
    %p437 = scmp.eq.s32.totalorder %s34, 0
    %p438 = por %p436, %p437
    %p439 = scmp.ne.s32.totalorder %s427, %s428
    %p440 = scmp.eq.s32.totalorder %s35, 7
    %p441 = por %p439, %p440
    %p443 = scmp.ne.s32.totalorder %s428, %s442
    %p444 = scmp.eq.s32.totalorder %s35, 0
    %p445 = por %p443, %p444
    %s447 = sadd.s32 %s446, 1
    %p450 = scmp.eq.s32.totalorder %s29, 7
    %p451 = scmp.ne.s32.totalorder %s446, %s448
    %p452 = scmp.eq.s32.totalorder %s29, 0
    %p453 = por %p451, %p452
    %p454 = scmp.ne.s32.totalorder %s446, %s448
    %p455 = scmp.eq.s32.totalorder %s34, 7
    %p456 = por %p454, %p455
    %p457 = scmp.ne.s32.totalorder %s448, %s449
    %p458 = scmp.eq.s32.totalorder %s34, 0
    %p459 = por %p457, %p458
    %p460 = scmp.ne.s32.totalorder %s448, %s449
    %p461 = scmp.eq.s32.totalorder %s35, 7
    %p462 = por %p460, %p461
    %p464 = scmp.ne.s32.totalorder %s449, %s463
    %p465 = scmp.eq.s32.totalorder %s35, 0
    %p466 = por %p464, %p465
    %s468 = sadd.s32 %s467, 1
    %p471 = scmp.eq.s32.totalorder %s29, 7
    %p472 = scmp.ne.s32.totalorder %s467, %s469
    %p473 = scmp.eq.s32.totalorder %s29, 0
    %p474 = por %p472, %p473
    %p475 = scmp.ne.s32.totalorder %s467, %s469
    %p476 = scmp.eq.s32.totalorder %s34, 7
    %p477 = por %p475, %p476
    %p478 = scmp.ne.s32.totalorder %s469, %s470
    %p479 = scmp.eq.s32.totalorder %s34, 0
    %p480 = por %p478, %p479
    %p481 = scmp.ne.s32.totalorder %s469, %s470
    %p482 = scmp.eq.s32.totalorder %s35, 7
    %p483 = por %p481, %p482
    %p485 = scmp.ne.s32.totalorder %s470, %s484
    %p486 = scmp.eq.s32.totalorder %s35, 0
    %p487 = por %p485, %p486
    %s488 = ssub.s32 %s29, %s36
    %p489 = scmp.eq.s32.totalorder %s488, 0
    %s491 = sadd.s32 %s490, 1
    %s492 = scalar_select %p489, %s490, %s491
    %p495 = pneg %p489
    %p496 = scmp.eq.s32.totalorder %s29, 7
    %p497 = por %p495, %p496
    %p498 = scmp.ne.s32.totalorder %s490, %s493
    %p499 = scmp.eq.s32.totalorder %s29, 0
    %p500 = por %p498, %p499
    %p501 = scmp.ne.s32.totalorder %s490, %s493
    %p502 = scmp.eq.s32.totalorder %s34, 7
    %p503 = por %p501, %p502
    %p504 = scmp.ne.s32.totalorder %s493, %s494
    %p505 = scmp.eq.s32.totalorder %s34, 0
    %p506 = por %p504, %p505
    %p507 = scmp.ne.s32.totalorder %s493, %s494
    %p508 = scmp.eq.s32.totalorder %s35, 7
    %p509 = por %p507, %p508
    %p511 = scmp.ne.s32.totalorder %s494, %s510
    %p512 = scmp.eq.s32.totalorder %s35, 0
    %p513 = por %p511, %p512
    %p514 = scmp.le.s32.totalorder 1, %s29
    %p515 = scmp.lt.s32.totalorder %s29, 9
    %p516 = pnand %p514, %p515
    %p517 = pneg %p516
    // Predicated region
    $region9: #{forward.1} parent=5 // pred_check
      _
    $region10: #{forward.1} parent=5 // pred_check_branch
      %519 = sbr.rel (%p516) target = $region12
    $region11: #{forward.1} parent=5 // pred_region
      %s520 = ssub.s32 %s29, 1
      // Predicated region
      $region13: #{forward.1} parent=11 // pred_check
        %p521 = pneg %p102
      $region14: #{forward.1} parent=11 // pred_check_branch
        %523 = sbr.rel (%p521) target = $region16
      $region15: #{forward.1} parent=11 // pred_region
        _
      $region16: #{forward.1} parent=11 // pred_fallthru
        _
      // Predicated region
      $region17: #{forward.1} parent=11 // pred_check
        %p524 = pneg %p123
      $region18: #{forward.1} parent=11 // pred_check_branch
        %526 = sbr.rel (%p524) target = $region20
      $region19: #{forward.1} parent=11 // pred_region
        _
      $region20: #{forward.1} parent=11 // pred_fallthru
        _
      // Predicated region
      $region21: #{forward.1} parent=11 // pred_check
        %p527 = pneg %p144
      $region22: #{forward.1} parent=11 // pred_check_branch
        %529 = sbr.rel (%p527) target = $region24
      $region23: #{forward.1} parent=11 // pred_region
        _
      $region24: #{forward.1} parent=11 // pred_fallthru
        _
      // Predicated region
      $region25: #{forward.1} parent=11 // pred_check
        %p530 = pneg %p165
      $region26: #{forward.1} parent=11 // pred_check_branch
        %532 = sbr.rel (%p530) target = $region28
      $region27: #{forward.1} parent=11 // pred_region
        _
      $region28: #{forward.1} parent=11 // pred_fallthru
        _
      // Predicated region
      $region29: #{forward.1} parent=11 // pred_check
        %p533 = pneg %p186
      $region30: #{forward.1} parent=11 // pred_check_branch
        %535 = sbr.rel (%p533) target = $region32
      $region31: #{forward.1} parent=11 // pred_region
        _
      $region32: #{forward.1} parent=11 // pred_fallthru
        _
      // Predicated region
      $region33: #{forward.1} parent=11 // pred_check
        %p536 = pneg %p207
      $region34: #{forward.1} parent=11 // pred_check_branch
        %538 = sbr.rel (%p536) target = $region36
      $region35: #{forward.1} parent=11 // pred_region
        _
      $region36: #{forward.1} parent=11 // pred_fallthru
        _
      // Predicated region
      $region37: #{forward.1} parent=11 // pred_check
        %p539 = pneg %p228
      $region38: #{forward.1} parent=11 // pred_check_branch
        %541 = sbr.rel (%p539) target = $region40
      $region39: #{forward.1} parent=11 // pred_region
        _
      $region40: #{forward.1} parent=11 // pred_fallthru
        _
      // Predicated region
      $region41: #{forward.1} parent=11 // pred_check
        %p542 = pneg %p249
      $region42: #{forward.1} parent=11 // pred_check_branch
        %544 = sbr.rel (%p542) target = $region44
      $region43: #{forward.1} parent=11 // pred_region
        _
      $region44: #{forward.1} parent=11 // pred_fallthru
        _
      // Predicated region
      $region45: #{forward.1} parent=11 // pred_check
        %p545 = pneg %p270
      $region46: #{forward.1} parent=11 // pred_check_branch
        %547 = sbr.rel (%p545) target = $region48
      $region47: #{forward.1} parent=11 // pred_region
        _
      $region48: #{forward.1} parent=11 // pred_fallthru
        _
      // Predicated region
      $region49: #{forward.1} parent=11 // pred_check
        %p548 = pneg %p291
      $region50: #{forward.1} parent=11 // pred_check_branch
        %550 = sbr.rel (%p548) target = $region52
      $region51: #{forward.1} parent=11 // pred_region
        _
      $region52: #{forward.1} parent=11 // pred_fallthru
        _
      // Predicated region
      $region53: #{forward.1} parent=11 // pred_check
        %p551 = pneg %p312
      $region54: #{forward.1} parent=11 // pred_check_branch
        %553 = sbr.rel (%p551) target = $region56
      $region55: #{forward.1} parent=11 // pred_region
        _
      $region56: #{forward.1} parent=11 // pred_fallthru
        _
      // Predicated region
      $region57: #{forward.1} parent=11 // pred_check
        %p554 = pneg %p333
      $region58: #{forward.1} parent=11 // pred_check_branch
        %556 = sbr.rel (%p554) target = $region60
      $region59: #{forward.1} parent=11 // pred_region
        _
      $region60: #{forward.1} parent=11 // pred_fallthru
        _
      // Predicated region
      $region61: #{forward.1} parent=11 // pred_check
        %p557 = pneg %p354
      $region62: #{forward.1} parent=11 // pred_check_branch
        %559 = sbr.rel (%p557) target = $region64
      $region63: #{forward.1} parent=11 // pred_region
        _
      $region64: #{forward.1} parent=11 // pred_fallthru
        _
      // Predicated region
      $region65: #{forward.1} parent=11 // pred_check
        %p560 = pneg %p375
      $region66: #{forward.1} parent=11 // pred_check_branch
        %562 = sbr.rel (%p560) target = $region68
      $region67: #{forward.1} parent=11 // pred_region
        _
      $region68: #{forward.1} parent=11 // pred_fallthru
        _
      // Predicated region
      $region69: #{forward.1} parent=11 // pred_check
        %p563 = pneg %p396
      $region70: #{forward.1} parent=11 // pred_check_branch
        %565 = sbr.rel (%p563) target = $region72
      $region71: #{forward.1} parent=11 // pred_region
        _
      $region72: #{forward.1} parent=11 // pred_fallthru
        _
      // Predicated region
      $region73: #{forward.1} parent=11 // pred_check
        %p566 = pneg %p417
      $region74: #{forward.1} parent=11 // pred_check_branch
        %568 = sbr.rel (%p566) target = $region76
      $region75: #{forward.1} parent=11 // pred_region
        _
      $region76: #{forward.1} parent=11 // pred_fallthru
        _
      // Predicated region
      $region77: #{forward.1} parent=11 // pred_check
        %p569 = pneg %p438
      $region78: #{forward.1} parent=11 // pred_check_branch
        %571 = sbr.rel (%p569) target = $region80
      $region79: #{forward.1} parent=11 // pred_region
        _
      $region80: #{forward.1} parent=11 // pred_fallthru
        _
      // Predicated region
      $region81: #{forward.1} parent=11 // pred_check
        %p572 = pneg %p459
      $region82: #{forward.1} parent=11 // pred_check_branch
        %574 = sbr.rel (%p572) target = $region84
      $region83: #{forward.1} parent=11 // pred_region
        _
      $region84: #{forward.1} parent=11 // pred_fallthru
        _
      // Predicated region
      $region85: #{forward.1} parent=11 // pred_check
        %p575 = pneg %p480
      $region86: #{forward.1} parent=11 // pred_check_branch
        %577 = sbr.rel (%p575) target = $region88
      $region87: #{forward.1} parent=11 // pred_region
        _
      $region88: #{forward.1} parent=11 // pred_fallthru
        _
    $region12: #{forward.1} parent=5 // pred_fallthru
      _
    %p578 = scmp.lt.s32.totalorder %s29, 8
    // Predicated region
    $region89: #{forward.1} parent=5 // pred_check
      %p579 = pneg %p578
    $region90: #{forward.1} parent=5 // pred_check_branch
      %581 = sbr.rel (%p579) target = $region92
    $region91: #{forward.1} parent=5 // pred_region
      // Predicated region
      $region93: #{forward.1} parent=91 // pred_check
        %p582 = pneg %p49
      $region94: #{forward.1} parent=91 // pred_check_branch
        %584 = sbr.rel (%p582) target = $region96
      $region95: #{forward.1} parent=91 // pred_region
        %p585 = scmp.lt.s32.totalorder %s29, 7
        %s586 = scalar_select %p585, %s29, 7
        %s587 = smul.addr %s586, 2
        %s588 = scalar_lea.vmem %s0, %s587
      $region96: #{forward.1} parent=91 // pred_fallthru
        _
      // Predicated region
      $region97: #{forward.1} parent=91 // pred_check
        %p589 = pneg %p75
      $region98: #{forward.1} parent=91 // pred_check_branch
        %591 = sbr.rel (%p589) target = $region100
      $region99: #{forward.1} parent=91 // pred_region
        %p592 = scmp.lt.s32.totalorder %s29, 7
        %s593 = scalar_select %p592, %s29, 7
        %s594 = scalar_lea.vmem %s1, %s593
      $region100: #{forward.1} parent=91 // pred_fallthru
        _
    $region92: #{forward.1} parent=5 // pred_fallthru
      _
    %p595 = scmp.le.s32.totalorder 1, %s29
    %p596 = scmp.lt.s32.totalorder %s29, 9
    %p597 = pnand %p595, %p596
    %p598 = pneg %p597
    // Predicated region
    $region101: #{forward.1} parent=5 // pred_check
      _
    $region102: #{forward.1} parent=5 // pred_check_branch
      %600 = sbr.rel (%p597) target = $region104
    $region103: #{forward.1} parent=5 // pred_region
      %s601 = ssub.s32 %s29, 1
      %p602 = scmp.lt.s32.totalorder %s34, 7
      %s603 = scalar_select %p602, %s34, 7
      %s604 = smul.addr %s603, 2
      %s605 = scalar_lea.vmem %s0, %s604
      %p606 = pneg %p55
      %p607 = pneg %p52
      %p608 = scmp.lt.s32.totalorder %s34, 7
      %s609 = scalar_select %p608, %s34, 7
      %s610 = scalar_lea.vmem %s1, %s609
      %p611 = pneg %p81
      %p612 = pneg %p78
      %p613 = pneg %p102
      %p614 = pneg %p99
      %p615 = pneg %p123
      %p616 = pneg %p120
      %p617 = pneg %p144
      %p618 = pneg %p141
      %p619 = pneg %p165
      %p620 = pneg %p162
      %p621 = pneg %p186
      %p622 = pneg %p183
      %p623 = pneg %p207
      %p624 = pneg %p204
      %p625 = pneg %p228
      %p626 = pneg %p225
      %p627 = pneg %p249
      %p628 = pneg %p246
      %p629 = pneg %p270
      %p630 = pneg %p267
      %p631 = pneg %p291
      %p632 = pneg %p288
      %p633 = pneg %p312
      %p634 = pneg %p309
      %p635 = pneg %p333
      %p636 = pneg %p330
      %p637 = pneg %p354
      %p638 = pneg %p351
      %p639 = pneg %p375
      %p640 = pneg %p372
      %p641 = pneg %p396
      %p642 = pneg %p393
      %p643 = pneg %p417
      %p644 = pneg %p414
      %p645 = pneg %p438
      %p646 = pneg %p435
      %p647 = pneg %p459
      %p648 = pneg %p456
      %p649 = pneg %p480
      %p650 = pneg %p477
      %p651 = pneg %p506
      %p652 = pneg %p503
      %p653 = scmp.lt.s32.totalorder %s34, 7
      %s654 = scalar_select %p653, %s34, 7
      %s655 = scalar_lea.vmem %s21, %s654
      %p656 = scmp.lt.s32.totalorder %s34, 7
      %s657 = scalar_select %p656, %s34, 7
      %s658 = smul.addr %s657, 2
      %s659 = scalar_lea.vmem %s0, %s658
      %p660 = scmp.lt.s32.totalorder %s34, 7
      %s661 = scalar_select %p660, %s34, 7
      %s662 = scalar_lea.vmem %s1, %s661
      %p663 = scmp.lt.s32.totalorder %s34, 7
      %s664 = scalar_select %p663, %s34, 7
      %s665 = scalar_lea.vmem %s21, %s664
      %v667 = vld [vmem:[%s659] sm:$0x3]
      %v668 = vld [vmem:[%s662] sm:$0x1]
      %v670 = vlaneseq
      %v671 = vshrl.u32 %v670, 7
      %v672 = vsub.s32 0, %v671
      %v673 = vrot.slane %v668, %v672
      %v675 = vld [vmem:[%s2] sm:$0x1]
      %677 = vset.pattern.permute.xlu0 0
      %678 = vperm.xlu0 %677, %v667
      %v679 = vpop.permute.xlu0 %678
      %v681 = vlaneseq
      %v682 = vshrl.u32 %v681, 7
      %v683 = vsub.s32 0, %v682
      %v684 = vrot.slane %v675, %v683
      %v685 = vmul.f32 %v679, %v684
      %v686 = vadd.f32 %v673, %v685
      %v687 = vld [vmem:[%s2 + $0x1] sm:$0x1]
      %688 = vset.pattern.permute.xlu0 1
      %689 = vperm.xlu0 %688, %v667
      %v690 = vpop.permute.xlu0 %689
      %v692 = vlaneseq
      %v693 = vshrl.u32 %v692, 7
      %v694 = vsub.s32 0, %v693
      %v695 = vrot.slane %v687, %v694
      %v696 = vmul.f32 %v690, %v695
      %v697 = vadd.f32 %v686, %v696
      %v698 = vld [vmem:[%s2 + $0x2] sm:$0x1]
      %699 = vset.pattern.permute.xlu0 2
      %700 = vperm.xlu0 %699, %v667
      %v701 = vpop.permute.xlu0 %700
      %v703 = vlaneseq
      %v704 = vshrl.u32 %v703, 7
      %v705 = vsub.s32 0, %v704
      %v706 = vrot.slane %v698, %v705
      %v707 = vmul.f32 %v701, %v706
      %v708 = vadd.f32 %v697, %v707
      %v709 = vld [vmem:[%s2 + $0x3] sm:$0x1]
      %710 = vset.pattern.permute.xlu0 3
      %711 = vperm.xlu0 %710, %v667
      %v712 = vpop.permute.xlu0 %711
      %v714 = vlaneseq
      %v715 = vshrl.u32 %v714, 7
      %v716 = vsub.s32 0, %v715
      %v717 = vrot.slane %v709, %v716
      %v718 = vmul.f32 %v712, %v717
      %v719 = vadd.f32 %v708, %v718
      %v720 = vpack.c.bf16 %v719, %v719
      %v721 = vld [vmem:[%s3] sm:$0xf]
      %v722 = vld [vmem:[%s3 + $0x4] sm:$0xf]
      %v723 = vld [vmem:[%s3 + $0x8] sm:$0xf]
      %v724 = vld [vmem:[%s3 + $0xc] sm:$0xf]
      %v725 = vld [vmem:[%s6] sm:$0x1]
      %v727 = vlaneseq
      %v728 = vshrl.u32 %v727, 7
      %v729 = vsub.s32 0, %v728
      %v730 = vrot.slane %v725, %v729
      %v736 = vunpack.c.l.b16 %v721
      %v737 = vunpack.c.l.b16 %v722
      %v738 = vunpack.c.l.b16 %v723
      %v739 = vunpack.c.l.b16 %v724
      %v740 = vpack.c.b16 %v737, %v736
      %v741 = vpack.c.b16 %v739, %v738
      %vm744 = vcmask 261120
      %v746 = vsel %vm744, %v720, 0
      %748 = vmatprep.subr.bf16.mxu0 0
      %749 = vmatpush1.bf16.msra.mxu0 %v740
      %750 = vmatprep.subr.bf16.mxu0 0
      %751 = vmatpush1.bf16.msra.mxu0 %v741
      %752 = vmatprep.subr.bf16.mxu0 0
      %753 = vmatpush1.bf16.msra.mxu0 0
      %754 = vmatprep.subr.bf16.mxu0 0
      %755 = vmatpush1.bf16.msra.mxu0 0
      %756 = vmatprep.subr.bf16.mxu0 0
      %757 = vmatpush1.bf16.msra.mxu0 0
      %758 = vmatprep.subr.bf16.mxu0 0
      %759 = vmatpush1.bf16.msra.mxu0 0
      %760 = vmatprep.subr.bf16.mxu0 0
      %761 = vmatpush1.bf16.msra.mxu0 0
      %762 = vmatprep.subr.bf16.mxu0 0
      %763 = vmatpush1.bf16.msra.mxu0 0
      %764 = vmatprep.subr.bf16.mxu0 0
      %765 = vmatpush1.bf16.msra.mxu0 0
      %766 = vmatprep.subr.bf16.mxu0 0
      %767 = vmatpush1.bf16.msra.mxu0 0
      %768 = vmatprep.subr.bf16.mxu0 0
      %769 = vmatpush1.bf16.msra.mxu0 0
      %770 = vmatprep.subr.bf16.mxu0 0
      %771 = vmatpush1.bf16.msra.mxu0 0
      %772 = vmatprep.subr.bf16.mxu0 0
      %773 = vmatpush1.bf16.msra.mxu0 0
      %774 = vmatprep.subr.bf16.mxu0 0
      %775 = vmatpush1.bf16.msra.mxu0 0
      %776 = vmatprep.subr.bf16.mxu0 0
      %777 = vmatpush1.bf16.msra.mxu0 0
      %778 = vmatprep.subr.bf16.mxu0 0
      %779 = vmatpush1.bf16.msra.mxu0 0
      %780 = vmatprep.mubr.bf16.mxu0 0
      %781 = vmatmul.mubr.bf16.gmra.mrb[0].mxu0 %v746
      %v782 = vpop.f32.mrb[0].mxu0
      %v783 = vadd.f32 %v730, %v782
      %v784 = vpop.f32.mrb[0].mxu0
      %v785 = vpop.f32.mrb[0].mxu0
      %v786 = vpop.f32.mrb[0].mxu0
      %787 = vdwg.mxu0
      %v788 = vld [vmem:[%s4] sm:$0xf]
      %v789 = vld [vmem:[%s4 + $0x4] sm:$0xf]
      %v790 = vld [vmem:[%s4 + $0x8] sm:$0xf]
      %v791 = vld [vmem:[%s4 + $0xc] sm:$0xf]
      %v792 = vld [vmem:[%s7] sm:$0x1]
      %v794 = vlaneseq
      %v795 = vshrl.u32 %v794, 7
      %v796 = vsub.s32 0, %v795
      %v797 = vrot.slane %v792, %v796
      %v803 = vunpack.c.l.b16 %v788
      %v804 = vunpack.c.l.b16 %v789
      %v805 = vunpack.c.l.b16 %v790
      %v806 = vunpack.c.l.b16 %v791
      %v807 = vpack.c.b16 %v804, %v803
      %v808 = vpack.c.b16 %v806, %v805
      %811 = vmatprep.subr.bf16.mxu0 0
      %812 = vmatpush1.bf16.msra.mxu0 %v807
      %813 = vmatprep.subr.bf16.mxu0 0
      %814 = vmatpush1.bf16.msra.mxu0 %v808
      %815 = vmatprep.subr.bf16.mxu0 0
      %816 = vmatpush1.bf16.msra.mxu0 0
      %817 = vmatprep.subr.bf16.mxu0 0
      %818 = vmatpush1.bf16.msra.mxu0 0
      %819 = vmatprep.subr.bf16.mxu0 0
      %820 = vmatpush1.bf16.msra.mxu0 0
      %821 = vmatprep.subr.bf16.mxu0 0
      %822 = vmatpush1.bf16.msra.mxu0 0
      %823 = vmatprep.subr.bf16.mxu0 0
      %824 = vmatpush1.bf16.msra.mxu0 0
      %825 = vmatprep.subr.bf16.mxu0 0
      %826 = vmatpush1.bf16.msra.mxu0 0
      %827 = vmatprep.subr.bf16.mxu0 0
      %828 = vmatpush1.bf16.msra.mxu0 0
      %829 = vmatprep.subr.bf16.mxu0 0
      %830 = vmatpush1.bf16.msra.mxu0 0
      %831 = vmatprep.subr.bf16.mxu0 0
      %832 = vmatpush1.bf16.msra.mxu0 0
      %833 = vmatprep.subr.bf16.mxu0 0
      %834 = vmatpush1.bf16.msra.mxu0 0
      %835 = vmatprep.subr.bf16.mxu0 0
      %836 = vmatpush1.bf16.msra.mxu0 0
      %837 = vmatprep.subr.bf16.mxu0 0
      %838 = vmatpush1.bf16.msra.mxu0 0
      %839 = vmatprep.subr.bf16.mxu0 0
      %840 = vmatpush1.bf16.msra.mxu0 0
      %841 = vmatprep.subr.bf16.mxu0 0
      %842 = vmatpush1.bf16.msra.mxu0 0
      %843 = vmatprep.mubr.bf16.mxu0 0
      %844 = vmatmul.mubr.bf16.gmra.mrb[0].mxu0 %v746
      %v845 = vpop.f32.mrb[0].mxu0
      %v846 = vadd.f32 %v797, %v845
      %v847 = vpop.f32.mrb[0].mxu0
      %v848 = vpop.f32.mrb[0].mxu0
      %v849 = vpop.f32.mrb[0].mxu0
      %850 = vdwg.mxu0
      %v851 = vld [vmem:[%s5] sm:$0xf]
      %v852 = vld [vmem:[%s5 + $0x4] sm:$0xf]
      %v853 = vld [vmem:[%s5 + $0x8] sm:$0xf]
      %v854 = vld [vmem:[%s5 + $0xc] sm:$0xf]
      %v855 = vld [vmem:[%s8] sm:$0x1]
      %v857 = vlaneseq
      %v858 = vshrl.u32 %v857, 7
      %v859 = vsub.s32 0, %v858
      %v860 = vrot.slane %v855, %v859
      %v866 = vunpack.c.l.b16 %v851
      %v867 = vunpack.c.l.b16 %v852
      %v868 = vunpack.c.l.b16 %v853
      %v869 = vunpack.c.l.b16 %v854
      %v870 = vpack.c.b16 %v867, %v866
      %v871 = vpack.c.b16 %v869, %v868
      %874 = vmatprep.subr.bf16.mxu0 0
      %875 = vmatpush1.bf16.msra.mxu0 %v870
      %876 = vmatprep.subr.bf16.mxu0 0
      %877 = vmatpush1.bf16.msra.mxu0 %v871
      %878 = vmatprep.subr.bf16.mxu0 0
      %879 = vmatpush1.bf16.msra.mxu0 0
      %880 = vmatprep.subr.bf16.mxu0 0
      %881 = vmatpush1.bf16.msra.mxu0 0
      %882 = vmatprep.subr.bf16.mxu0 0
      %883 = vmatpush1.bf16.msra.mxu0 0
      %884 = vmatprep.subr.bf16.mxu0 0
      %885 = vmatpush1.bf16.msra.mxu0 0
      %886 = vmatprep.subr.bf16.mxu0 0
      %887 = vmatpush1.bf16.msra.mxu0 0
      %888 = vmatprep.subr.bf16.mxu0 0
      %889 = vmatpush1.bf16.msra.mxu0 0
      %890 = vmatprep.subr.bf16.mxu0 0
      %891 = vmatpush1.bf16.msra.mxu0 0
      %892 = vmatprep.subr.bf16.mxu0 0
      %893 = vmatpush1.bf16.msra.mxu0 0
      %894 = vmatprep.subr.bf16.mxu0 0
      %895 = vmatpush1.bf16.msra.mxu0 0
      %896 = vmatprep.subr.bf16.mxu0 0
      %897 = vmatpush1.bf16.msra.mxu0 0
      %898 = vmatprep.subr.bf16.mxu0 0
      %899 = vmatpush1.bf16.msra.mxu0 0
      %900 = vmatprep.subr.bf16.mxu0 0
      %901 = vmatpush1.bf16.msra.mxu0 0
      %902 = vmatprep.subr.bf16.mxu0 0
      %903 = vmatpush1.bf16.msra.mxu0 0
      %904 = vmatprep.subr.bf16.mxu0 0
      %905 = vmatpush1.bf16.msra.mxu0 0
      %906 = vmatprep.mubr.bf16.mxu0 0
      %907 = vmatmul.mubr.bf16.gmra.mrb[0].mxu0 %v746
      %v908 = vpop.f32.mrb[0].mxu0
      %v909 = vadd.f32 %v860, %v908
      %v910 = vpop.f32.mrb[0].mxu0
      %v911 = vpop.f32.mrb[0].mxu0
      %v912 = vpop.f32.mrb[0].mxu0
      %913 = vdwg.mxu0
      %v914 = vpack.c.bf16 %v783, %v783
      %v915 = vpack.c.bf16 %v846, %v846
      %vm916 = vcmask 64512
      %v918 = vsel %vm916, %v914, 0
      %v921 = vsel %vm916, %v915, 0
      %923 = vmatprep.subr.bf16.mxu0 0
      %924 = vmatpush1.bf16.xpose.msra.mxu0 %v921
      %925 = vmatprep.subr.bf16.mxu0 0
      %926 = vmatpush1.bf16.xpose.msra.mxu0 0
      %927 = vmatprep.subr.bf16.mxu0 0
      %928 = vmatpush1.bf16.xpose.msra.mxu0 0
      %929 = vmatprep.subr.bf16.mxu0 0
      %930 = vmatpush1.bf16.xpose.msra.mxu0 0
      %931 = vmatprep.subr.bf16.mxu0 0
      %932 = vmatpush1.bf16.xpose.msra.mxu0 0
      %933 = vmatprep.subr.bf16.mxu0 0
      %934 = vmatpush1.bf16.xpose.msra.mxu0 0
      %935 = vmatprep.subr.bf16.mxu0 0
      %936 = vmatpush1.bf16.xpose.msra.mxu0 0
      %937 = vmatprep.subr.bf16.mxu0 0
      %938 = vmatpush1.bf16.xpose.msra.mxu0 0
      %939 = vmatprep.subr.bf16.mxu0 0
      %940 = vmatpush1.bf16.xpose.msra.mxu0 0
      %941 = vmatprep.subr.bf16.mxu0 0
      %942 = vmatpush1.bf16.xpose.msra.mxu0 0
      %943 = vmatprep.subr.bf16.mxu0 0
      %944 = vmatpush1.bf16.xpose.msra.mxu0 0
      %945 = vmatprep.subr.bf16.mxu0 0
      %946 = vmatpush1.bf16.xpose.msra.mxu0 0
      %947 = vmatprep.subr.bf16.mxu0 0
      %948 = vmatpush1.bf16.xpose.msra.mxu0 0
      %949 = vmatprep.subr.bf16.mxu0 0
      %950 = vmatpush1.bf16.xpose.msra.mxu0 0
      %951 = vmatprep.subr.bf16.mxu0 0
      %952 = vmatpush1.bf16.xpose.msra.mxu0 0
      %953 = vmatprep.subr.bf16.mxu0 0
      %954 = vmatpush1.bf16.xpose.msra.mxu0 0
      %955 = vmatprep.mubr.bf16.mxu0 0
      %956 = vmatmul.mubr.bf16.gmra.mrb[0].mxu0 %v918
      %v957 = vpop.f32.mrb[0].mxu0
      %v958 = vadd.f32 0.0, %v957
      %v959 = vpop.f32.mrb[0].mxu0
      %v960 = vpop.f32.mrb[0].mxu0
      %v961 = vpop.f32.mrb[0].mxu0
      %962 = vdwg.mxu0
      %v963 = vmul.f32 %v958, 0.35355338
      %vm964 = vcmask 9216
      %v965 = vsel %vm964, %v963, -inf
      %966 = vmax.xlane.f32.xlu0 %v965
      %v967 = vpop.xlane.xlu0 %966
      %v968 = vsub.f32 %v963, %v967
      %v969 = vmul.f32 %v968, 1.442695
      %v970 = vpow.pop %v969
      %v971 = vsel %vm964, %v970, 0.0
      %972 = vadd.xlane.f32.xlu0 %v971
      %v973 = vpop.xlane.xlu0 %972
      %v974 = vpack.c.bf16 %v970, %v970
      %v975 = vpack.c.bf16 %v909, %v909
      %vm976 = vcmask 15360
      %v978 = vsel %vm976, %v974, 0
      %vm980 = vcmask 1040384
      %v982 = vsel %vm980, %v975, 0
      %984 = vmatprep.subr.bf16.mxu0 0
      %985 = vmatpush1.bf16.msra.mxu0 %v982
      %986 = vmatprep.subr.bf16.mxu0 0
      %987 = vmatpush1.bf16.msra.mxu0 0
      %988 = vmatprep.subr.bf16.mxu0 0
      %989 = vmatpush1.bf16.msra.mxu0 0
      %990 = vmatprep.subr.bf16.mxu0 0
      %991 = vmatpush1.bf16.msra.mxu0 0
      %992 = vmatprep.subr.bf16.mxu0 0
      %993 = vmatpush1.bf16.msra.mxu0 0
      %994 = vmatprep.subr.bf16.mxu0 0
      %995 = vmatpush1.bf16.msra.mxu0 0
      %996 = vmatprep.subr.bf16.mxu0 0
      %997 = vmatpush1.bf16.msra.mxu0 0
      %998 = vmatprep.subr.bf16.mxu0 0
      %999 = vmatpush1.bf16.msra.mxu0 0
      %1000 = vmatprep.subr.bf16.mxu0 0
      %1001 = vmatpush1.bf16.msra.mxu0 0
      %1002 = vmatprep.subr.bf16.mxu0 0
      %1003 = vmatpush1.bf16.msra.mxu0 0
      %1004 = vmatprep.subr.bf16.mxu0 0
      %1005 = vmatpush1.bf16.msra.mxu0 0
      %1006 = vmatprep.subr.bf16.mxu0 0
      %1007 = vmatpush1.bf16.msra.mxu0 0
      %1008 = vmatprep.subr.bf16.mxu0 0
      %1009 = vmatpush1.bf16.msra.mxu0 0
      %1010 = vmatprep.subr.bf16.mxu0 0
      %1011 = vmatpush1.bf16.msra.mxu0 0
      %1012 = vmatprep.subr.bf16.mxu0 0
      %1013 = vmatpush1.bf16.msra.mxu0 0
      %1014 = vmatprep.subr.bf16.mxu0 0
      %1015 = vmatpush1.bf16.msra.mxu0 0
      %1016 = vmatprep.mubr.bf16.mxu0 0
      %1017 = vmatmul.mubr.bf16.gmra.mrb[0].mxu0 %v978
      %v1018 = vpop.f32.mrb[0].mxu0
      %v1019 = vadd.f32 0.0, %v1018
      %v1020 = vpop.f32.mrb[0].mxu0
      %v1021 = vpop.f32.mrb[0].mxu0
      %v1022 = vpop.f32.mrb[0].mxu0
      %1023 = vdwg.mxu0
      %v1024 = vrcp.pop %v973
      %v1025 = vmul.f32 %v1019, %v1024
      %v1026 = vpack.c.bf16 %v1025, %v1025
      %v1027 = vld [vmem:[%s9] sm:$0xf]
      %s1028 = scalar_lea.vmem %s3, 16
      %v1029 = vld [vmem:[%s1028] sm:$0xf]
      %v1030 = vld [vmem:[%s1028 + $0x4] sm:$0xf]
      %v1031 = vld [vmem:[%s1028 + $0x8] sm:$0xf]
      %v1032 = vld [vmem:[%s1028 + $0xc] sm:$0xf]
      %s1033 = scalar_lea.vmem %s6, 1
      %v1034 = vld [vmem:[%s1033] sm:$0x1]
      %v1036 = vlaneseq
      %v1037 = vshrl.u32 %v1036, 7
      %v1038 = vsub.s32 0, %v1037
      %v1039 = vrot.slane %v1034, %v1038
      %v1045 = vunpack.c.l.b16 %v1029
      %v1046 = vunpack.c.l.b16 %v1030
      %v1047 = vunpack.c.l.b16 %v1031
      %v1048 = vunpack.c.l.b16 %v1032
      %v1049 = vpack.c.b16 %v1046, %v1045
      %v1050 = vpack.c.b16 %v1048, %v1047
      %1053 = vmatprep.subr.bf16.mxu0 0
      %1054 = vmatpush1.bf16.msra.mxu0 %v1049
      %1055 = vmatprep.subr.bf16.mxu0 0
      %1056 = vmatpush1.bf16.msra.mxu0 %v1050
      %1057 = vmatprep.subr.bf16.mxu0 0
      %1058 = vmatpush1.bf16.msra.mxu0 0
      %1059 = vmatprep.subr.bf16.mxu0 0
      %1060 = vmatpush1.bf16.msra.mxu0 0
      %1061 = vmatprep.subr.bf16.mxu0 0
      %1062 = vmatpush1.bf16.msra.mxu0 0
      %1063 = vmatprep.subr.bf16.mxu0 0
      %1064 = vmatpush1.bf16.msra.mxu0 0
      %1065 = vmatprep.subr.bf16.mxu0 0
      %1066 = vmatpush1.bf16.msra.mxu0 0
      %1067 = vmatprep.subr.bf16.mxu0 0
      %1068 = vmatpush1.bf16.msra.mxu0 0
      %1069 = vmatprep.subr.bf16.mxu0 0
      %1070 = vmatpush1.bf16.msra.mxu0 0
      %1071 = vmatprep.subr.bf16.mxu0 0
      %1072 = vmatpush1.bf16.msra.mxu0 0
      %1073 = vmatprep.subr.bf16.mxu0 0
      %1074 = vmatpush1.bf16.msra.mxu0 0
      %1075 = vmatprep.subr.bf16.mxu0 0
      %1076 = vmatpush1.bf16.msra.mxu0 0
      %1077 = vmatprep.subr.bf16.mxu0 0
      %1078 = vmatpush1.bf16.msra.mxu0 0
      %1079 = vmatprep.subr.bf16.mxu0 0
      %1080 = vmatpush1.bf16.msra.mxu0 0
      %1081 = vmatprep.subr.bf16.mxu0 0
      %1082 = vmatpush1.bf16.msra.mxu0 0
      %1083 = vmatprep.subr.bf16.mxu0 0
      %1084 = vmatpush1.bf16.msra.mxu0 0
      %1085 = vmatprep.mubr.bf16.mxu0 0
      %1086 = vmatmul.mubr.bf16.gmra.mrb[0].mxu0 %v746
      %v1087 = vpop.f32.mrb[0].mxu0
      %v1088 = vadd.f32 %v1039, %v1087
      %v1089 = vpop.f32.mrb[0].mxu0
      %v1090 = vpop.f32.mrb[0].mxu0
      %v1091 = vpop.f32.mrb[0].mxu0
      %1092 = vdwg.mxu0
      %s1093 = scalar_lea.vmem %s4, 16
      %v1094 = vld [vmem:[%s1093] sm:$0xf]
      %v1095 = vld [vmem:[%s1093 + $0x4] sm:$0xf]
      %v1096 = vld [vmem:[%s1093 + $0x8] sm:$0xf]
      %v1097 = vld [vmem:[%s1093 + $0xc] sm:$0xf]
      %s1098 = scalar_lea.vmem %s7, 1
      %v1099 = vld [vmem:[%s1098] sm:$0x1]
      %v1101 = vlaneseq
      %v1102 = vshrl.u32 %v1101, 7
      %v1103 = vsub.s32 0, %v1102
      %v1104 = vrot.slane %v1099, %v1103
      %v1110 = vunpack.c.l.b16 %v1094
      %v1111 = vunpack.c.l.b16 %v1095
      %v1112 = vunpack.c.l.b16 %v1096
      %v1113 = vunpack.c.l.b16 %v1097
      %v1114 = vpack.c.b16 %v1111, %v1110
      %v1115 = vpack.c.b16 %v1113, %v1112
      %1118 = vmatprep.subr.bf16.mxu0 0
      %1119 = vmatpush1.bf16.msra.mxu0 %v1114
      %1120 = vmatprep.subr.bf16.mxu0 0
      %1121 = vmatpush1.bf16.msra.mxu0 %v1115
      %1122 = vmatprep.subr.bf16.mxu0 0
      %1123 = vmatpush1.bf16.msra.mxu0 0
      %1124 = vmatprep.subr.bf16.mxu0 0
      %1125 = vmatpush1.bf16.msra.mxu0 0
      %1126 = vmatprep.subr.bf16.mxu0 0
      %1127 = vmatpush1.bf16.msra.mxu0 0
      %1128 = vmatprep.subr.bf16.mxu0 0
      %1129 = vmatpush1.bf16.msra.mxu0 0
      %1130 = vmatprep.subr.bf16.mxu0 0
      %1131 = vmatpush1.bf16.msra.mxu0 0
      %1132 = vmatprep.subr.bf16.mxu0 0
      %1133 = vmatpush1.bf16.msra.mxu0 0
      %1134 = vmatprep.subr.bf16.mxu0 0
      %1135 = vmatpush1.bf16.msra.mxu0 0
      %1136 = vmatprep.subr.bf16.mxu0 0
      %1137 = vmatpush1.bf16.msra.mxu0 0
      %1138 = vmatprep.subr.bf16.mxu0 0
      %1139 = vmatpush1.bf16.msra.mxu0 0
      %1140 = vmatprep.subr.bf16.mxu0 0
      %1141 = vmatpush1.bf16.msra.mxu0 0
      %1142 = vmatprep.subr.bf16.mxu0 0
      %1143 = vmatpush1.bf16.msra.mxu0 0
      %1144 = vmatprep.subr.bf16.mxu0 0
      %1145 = vmatpush1.bf16.msra.mxu0 0
      %1146 = vmatprep.subr.bf16.mxu0 0
      %1147 = vmatpush1.bf16.msra.mxu0 0
      %1148 = vmatprep.subr.bf16.mxu0 0
      %1149 = vmatpush1.bf16.msra.mxu0 0
      %1150 = vmatprep.mubr.bf16.mxu0 0
      %1151 = vmatmul.mubr.bf16.gmra.mrb[0].mxu0 %v746
      %v1152 = vpop.f32.mrb[0].mxu0
      %v1153 = vadd.f32 %v1104, %v1152
      %v1154 = vpop.f32.mrb[0].mxu0
      %v1155 = vpop.f32.mrb[0].mxu0
      %v1156 = vpop.f32.mrb[0].mxu0
      %1157 = vdwg.mxu0
      %s1158 = scalar_lea.vmem %s5, 16
      %v1159 = vld [vmem:[%s1158] sm:$0xf]
      %v1160 = vld [vmem:[%s1158 + $0x4] sm:$0xf]
      %v1161 = vld [vmem:[%s1158 + $0x8] sm:$0xf]
      %v1162 = vld [vmem:[%s1158 + $0xc] sm:$0xf]
      %s1163 = scalar_lea.vmem %s8, 1
      %v1164 = vld [vmem:[%s1163] sm:$0x1]
      %v1166 = vlaneseq
      %v1167 = vshrl.u32 %v1166, 7
      %v1168 = vsub.s32 0, %v1167
      %v1169 = vrot.slane %v1164, %v1168
      %v1175 = vunpack.c.l.b16 %v1159
      %v1176 = vunpack.c.l.b16 %v1160
      %v1177 = vunpack.c.l.b16 %v1161
      %v1178 = vunpack.c.l.b16 %v1162
      %v1179 = vpack.c.b16 %v1176, %v1175
      %v1180 = vpack.c.b16 %v1178, %v1177
      %1183 = vmatprep.subr.bf16.mxu0 0
      %1184 = vmatpush1.bf16.msra.mxu0 %v1179
      %1185 = vmatprep.subr.bf16.mxu0 0
      %1186 = vmatpush1.bf16.msra.mxu0 %v1180
      %1187 = vmatprep.subr.bf16.mxu0 0
      %1188 = vmatpush1.bf16.msra.mxu0 0
      %1189 = vmatprep.subr.bf16.mxu0 0
      %1190 = vmatpush1.bf16.msra.mxu0 0
      %1191 = vmatprep.subr.bf16.mxu0 0
      %1192 = vmatpush1.bf16.msra.mxu0 0
      %1193 = vmatprep.subr.bf16.mxu0 0
      %1194 = vmatpush1.bf16.msra.mxu0 0
      %1195 = vmatprep.subr.bf16.mxu0 0
      %1196 = vmatpush1.bf16.msra.mxu0 0
      %1197 = vmatprep.subr.bf16.mxu0 0
      %1198 = vmatpush1.bf16.msra.mxu0 0
      %1199 = vmatprep.subr.bf16.mxu0 0
      %1200 = vmatpush1.bf16.msra.mxu0 0
      %1201 = vmatprep.subr.bf16.mxu0 0
      %1202 = vmatpush1.bf16.msra.mxu0 0
      %1203 = vmatprep.subr.bf16.mxu0 0
      %1204 = vmatpush1.bf16.msra.mxu0 0
      %1205 = vmatprep.subr.bf16.mxu0 0
      %1206 = vmatpush1.bf16.msra.mxu0 0
      %1207 = vmatprep.subr.bf16.mxu0 0
      %1208 = vmatpush1.bf16.msra.mxu0 0
      %1209 = vmatprep.subr.bf16.mxu0 0
      %1210 = vmatpush1.bf16.msra.mxu0 0
      %1211 = vmatprep.subr.bf16.mxu0 0
      %1212 = vmatpush1.bf16.msra.mxu0 0
      %1213 = vmatprep.subr.bf16.mxu0 0
      %1214 = vmatpush1.bf16.msra.mxu0 0
      %1215 = vmatprep.mubr.bf16.mxu0 0
      %1216 = vmatmul.mubr.bf16.gmra.mrb[0].mxu0 %v746
      %v1217 = vpop.f32.mrb[0].mxu0
      %v1218 = vadd.f32 %v1169, %v1217
      %v1219 = vpop.f32.mrb[0].mxu0
      %v1220 = vpop.f32.mrb[0].mxu0
      %v1221 = vpop.f32.mrb[0].mxu0
      %1222 = vdwg.mxu0
      %v1223 = vpack.c.bf16 %v1088, %v1088
      %v1224 = vpack.c.bf16 %v1153, %v1153
      %v1226 = vsel %vm916, %v1223, 0
      %v1229 = vsel %vm916, %v1224, 0
      %1231 = vmatprep.subr.bf16.mxu0 0
      %1232 = vmatpush1.bf16.xpose.msra.mxu0 %v1229
      %1233 = vmatprep.subr.bf16.mxu0 0
      %1234 = vmatpush1.bf16.xpose.msra.mxu0 0
      %1235 = vmatprep.subr.bf16.mxu0 0
      %1236 = vmatpush1.bf16.xpose.msra.mxu0 0
      %1237 = vmatprep.subr.bf16.mxu0 0
      %1238 = vmatpush1.bf16.xpose.msra.mxu0 0
      %1239 = vmatprep.subr.bf16.mxu0 0
      %1240 = vmatpush1.bf16.xpose.msra.mxu0 0
      %1241 = vmatprep.subr.bf16.mxu0 0
      %1242 = vmatpush1.bf16.xpose.msra.mxu0 0
      %1243 = vmatprep.subr.bf16.mxu0 0
      %1244 = vmatpush1.bf16.xpose.msra.mxu0 0
      %1245 = vmatprep.subr.bf16.mxu0 0
      %1246 = vmatpush1.bf16.xpose.msra.mxu0 0
      %1247 = vmatprep.subr.bf16.mxu0 0
      %1248 = vmatpush1.bf16.xpose.msra.mxu0 0
      %1249 = vmatprep.subr.bf16.mxu0 0
      %1250 = vmatpush1.bf16.xpose.msra.mxu0 0
      %1251 = vmatprep.subr.bf16.mxu0 0
      %1252 = vmatpush1.bf16.xpose.msra.mxu0 0
      %1253 = vmatprep.subr.bf16.mxu0 0
      %1254 = vmatpush1.bf16.xpose.msra.mxu0 0
      %1255 = vmatprep.subr.bf16.mxu0 0
      %1256 = vmatpush1.bf16.xpose.msra.mxu0 0
      %1257 = vmatprep.subr.bf16.mxu0 0
      %1258 = vmatpush1.bf16.xpose.msra.mxu0 0
      %1259 = vmatprep.subr.bf16.mxu0 0
      %1260 = vmatpush1.bf16.xpose.msra.mxu0 0
      %1261 = vmatprep.subr.bf16.mxu0 0
      %1262 = vmatpush1.bf16.xpose.msra.mxu0 0
      %1263 = vmatprep.mubr.bf16.mxu0 0
      %1264 = vmatmul.mubr.bf16.gmra.mrb[0].mxu0 %v1226
      %v1265 = vpop.f32.mrb[0].mxu0
      %v1266 = vadd.f32 0.0, %v1265
      %v1267 = vpop.f32.mrb[0].mxu0
      %v1268 = vpop.f32.mrb[0].mxu0
      %v1269 = vpop.f32.mrb[0].mxu0
      %1270 = vdwg.mxu0
      %v1271 = vmul.f32 %v1266, 0.35355338
      %v1272 = vsel %vm964, %v1271, -inf
      %1273 = vmax.xlane.f32.xlu0 %v1272
      %v1274 = vpop.xlane.xlu0 %1273
      %v1275 = vsub.f32 %v1271, %v1274
      %v1276 = vmul.f32 %v1275, 1.442695
      %v1277 = vpow.pop %v1276
      %v1278 = vsel %vm964, %v1277, 0.0
      %1279 = vadd.xlane.f32.xlu0 %v1278
      %v1280 = vpop.xlane.xlu0 %1279
      %v1281 = vpack.c.bf16 %v1277, %v1277
      %v1282 = vpack.c.bf16 %v1218, %v1218
      %v1284 = vsel %vm976, %v1281, 0
      %v1287 = vsel %vm980, %v1282, 0
      %1289 = vmatprep.subr.bf16.mxu0 0
      %1290 = vmatpush1.bf16.msra.mxu0 %v1287
      %1291 = vmatprep.subr.bf16.mxu0 0
      %1292 = vmatpush1.bf16.msra.mxu0 0
      %1293 = vmatprep.subr.bf16.mxu0 0
      %1294 = vmatpush1.bf16.msra.mxu0 0
      %1295 = vmatprep.subr.bf16.mxu0 0
      %1296 = vmatpush1.bf16.msra.mxu0 0
      %1297 = vmatprep.subr.bf16.mxu0 0
      %1298 = vmatpush1.bf16.msra.mxu0 0
      %1299 = vmatprep.subr.bf16.mxu0 0
      %1300 = vmatpush1.bf16.msra.mxu0 0
      %1301 = vmatprep.subr.bf16.mxu0 0
      %1302 = vmatpush1.bf16.msra.mxu0 0
      %1303 = vmatprep.subr.bf16.mxu0 0
      %1304 = vmatpush1.bf16.msra.mxu0 0
      %1305 = vmatprep.subr.bf16.mxu0 0
      %1306 = vmatpush1.bf16.msra.mxu0 0
      %1307 = vmatprep.subr.bf16.mxu0 0
      %1308 = vmatpush1.bf16.msra.mxu0 0
      %1309 = vmatprep.subr.bf16.mxu0 0
      %1310 = vmatpush1.bf16.msra.mxu0 0
      %1311 = vmatprep.subr.bf16.mxu0 0
      %1312 = vmatpush1.bf16.msra.mxu0 0
      %1313 = vmatprep.subr.bf16.mxu0 0
      %1314 = vmatpush1.bf16.msra.mxu0 0
      %1315 = vmatprep.subr.bf16.mxu0 0
      %1316 = vmatpush1.bf16.msra.mxu0 0
      %1317 = vmatprep.subr.bf16.mxu0 0
      %1318 = vmatpush1.bf16.msra.mxu0 0
      %1319 = vmatprep.subr.bf16.mxu0 0
      %1320 = vmatpush1.bf16.msra.mxu0 0
      %1321 = vmatprep.mubr.bf16.mxu0 0
      %1322 = vmatmul.mubr.bf16.gmra.mrb[0].mxu0 %v1284
      %v1323 = vpop.f32.mrb[0].mxu0
      %v1324 = vadd.f32 0.0, %v1323
      %v1325 = vpop.f32.mrb[0].mxu0
      %v1326 = vpop.f32.mrb[0].mxu0
      %v1327 = vpop.f32.mrb[0].mxu0
      %1328 = vdwg.mxu0
      %v1329 = vrcp.pop %v1280
      %v1330 = vmul.f32 %v1324, %v1329
      %v1331 = vpack.c.bf16 %v1330, %v1330
      %s1332 = scalar_lea.vmem %s9, 4
      %v1333 = vld [vmem:[%s1332] sm:$0xf]
      %v1335 = vsel %vm916, %v1331, 0
      %vm1337 = vcmask 1043456
      %v1339 = vsel %vm1337, %v1333, 0
      %1341 = vmatprep.subr.bf16.mxu0 0
      %1342 = vmatpush1.bf16.msra.mxu0 %v1339
      %1343 = vmatprep.subr.bf16.mxu0 0
      %1344 = vmatpush1.bf16.msra.mxu0 0
      %1345 = vmatprep.subr.bf16.mxu0 0
      %1346 = vmatpush1.bf16.msra.mxu0 0
      %1347 = vmatprep.subr.bf16.mxu0 0
      %1348 = vmatpush1.bf16.msra.mxu0 0
      %1349 = vmatprep.subr.bf16.mxu0 0
      %1350 = vmatpush1.bf16.msra.mxu0 0
      %1351 = vmatprep.subr.bf16.mxu0 0
      %1352 = vmatpush1.bf16.msra.mxu0 0
      %1353 = vmatprep.subr.bf16.mxu0 0
      %1354 = vmatpush1.bf16.msra.mxu0 0
      %1355 = vmatprep.subr.bf16.mxu0 0
      %1356 = vmatpush1.bf16.msra.mxu0 0
      %1357 = vmatprep.subr.bf16.mxu0 0
      %1358 = vmatpush1.bf16.msra.mxu0 0
      %1359 = vmatprep.subr.bf16.mxu0 0
      %1360 = vmatpush1.bf16.msra.mxu0 0
      %1361 = vmatprep.subr.bf16.mxu0 0
      %1362 = vmatpush1.bf16.msra.mxu0 0
      %1363 = vmatprep.subr.bf16.mxu0 0
      %1364 = vmatpush1.bf16.msra.mxu0 0
      %1365 = vmatprep.subr.bf16.mxu0 0
      %1366 = vmatpush1.bf16.msra.mxu0 0
      %1367 = vmatprep.subr.bf16.mxu0 0
      %1368 = vmatpush1.bf16.msra.mxu0 0
      %1369 = vmatprep.subr.bf16.mxu0 0
      %1370 = vmatpush1.bf16.msra.mxu0 0
      %1371 = vmatprep.subr.bf16.mxu0 0
      %1372 = vmatpush1.bf16.msra.mxu0 0
      %1373 = vmatprep.mubr.bf16.mxu0 0
      %1374 = vmatmul.mubr.bf16.gmra.mrb[0].mxu0 %v1335
      %v1375 = vpop.f32.mrb[0].mxu0
      %v1376 = vadd.f32 0.0, %v1375
      %v1377 = vpop.f32.mrb[0].mxu0
      %v1378 = vpop.f32.mrb[0].mxu0
      %v1379 = vpop.f32.mrb[0].mxu0
      %1380 = vdwg.mxu0
      %v1382 = vsel %vm916, %v1026, 0
      %v1385 = vsel %vm1337, %v1027, 0
      %1387 = vmatprep.subr.bf16.mxu0 0
      %1388 = vmatpush1.bf16.msra.mxu0 %v1385
      %1389 = vmatprep.subr.bf16.mxu0 0
      %1390 = vmatpush1.bf16.msra.mxu0 0
      %1391 = vmatprep.subr.bf16.mxu0 0
      %1392 = vmatpush1.bf16.msra.mxu0 0
      %1393 = vmatprep.subr.bf16.mxu0 0
      %1394 = vmatpush1.bf16.msra.mxu0 0
      %1395 = vmatprep.subr.bf16.mxu0 0
      %1396 = vmatpush1.bf16.msra.mxu0 0
      %1397 = vmatprep.subr.bf16.mxu0 0
      %1398 = vmatpush1.bf16.msra.mxu0 0
      %1399 = vmatprep.subr.bf16.mxu0 0
      %1400 = vmatpush1.bf16.msra.mxu0 0
      %1401 = vmatprep.subr.bf16.mxu0 0
      %1402 = vmatpush1.bf16.msra.mxu0 0
      %1403 = vmatprep.subr.bf16.mxu0 0
      %1404 = vmatpush1.bf16.msra.mxu0 0
      %1405 = vmatprep.subr.bf16.mxu0 0
      %1406 = vmatpush1.bf16.msra.mxu0 0
      %1407 = vmatprep.subr.bf16.mxu0 0
      %1408 = vmatpush1.bf16.msra.mxu0 0
      %1409 = vmatprep.subr.bf16.mxu0 0
      %1410 = vmatpush1.bf16.msra.mxu0 0
      %1411 = vmatprep.subr.bf16.mxu0 0
      %1412 = vmatpush1.bf16.msra.mxu0 0
      %1413 = vmatprep.subr.bf16.mxu0 0
      %1414 = vmatpush1.bf16.msra.mxu0 0
      %1415 = vmatprep.subr.bf16.mxu0 0
      %1416 = vmatpush1.bf16.msra.mxu0 0
      %1417 = vmatprep.subr.bf16.mxu0 0
      %1418 = vmatpush1.bf16.msra.mxu0 0
      %1419 = vmatprep.mubr.bf16.mxu0 0
      %1420 = vmatmul.mubr.bf16.gmra.mrb[0].mxu0 %v1382
      %v1421 = vpop.f32.mrb[0].mxu0
      %v1422 = vadd.f32 %v1376, %v1421
      %v1423 = vpop.f32.mrb[0].mxu0
      %v1424 = vpop.f32.mrb[0].mxu0
      %v1425 = vpop.f32.mrb[0].mxu0
      %1426 = vdwg.mxu0
      %s1427 = scalar_lea.vmem %s3, 32
      %v1428 = vld [vmem:[%s1427] sm:$0xf]
      %v1429 = vld [vmem:[%s1427 + $0x4] sm:$0xf]
      %v1430 = vld [vmem:[%s1427 + $0x8] sm:$0xf]
      %v1431 = vld [vmem:[%s1427 + $0xc] sm:$0xf]
      %s1432 = scalar_lea.vmem %s6, 2
      %v1433 = vld [vmem:[%s1432] sm:$0x1]
      %v1435 = vlaneseq
      %v1436 = vshrl.u32 %v1435, 7
      %v1437 = vsub.s32 0, %v1436
      %v1438 = vrot.slane %v1433, %v1437
      %v1444 = vunpack.c.l.b16 %v1428
      %v1445 = vunpack.c.l.b16 %v1429
      %v1446 = vunpack.c.l.b16 %v1430
      %v1447 = vunpack.c.l.b16 %v1431
      %v1448 = vpack.c.b16 %v1445, %v1444
      %v1449 = vpack.c.b16 %v1447, %v1446
      %1452 = vmatprep.subr.bf16.mxu0 0
      %1453 = vmatpush1.bf16.msra.mxu0 %v1448
      %1454 = vmatprep.subr.bf16.mxu0 0
      %1455 = vmatpush1.bf16.msra.mxu0 %v1449
      %1456 = vmatprep.subr.bf16.mxu0 0
      %1457 = vmatpush1.bf16.msra.mxu0 0
      %1458 = vmatprep.subr.bf16.mxu0 0
      %1459 = vmatpush1.bf16.msra.mxu0 0
      %1460 = vmatprep.subr.bf16.mxu0 0
      %1461 = vmatpush1.bf16.msra.mxu0 0
      %1462 = vmatprep.subr.bf16.mxu0 0
      %1463 = vmatpush1.bf16.msra.mxu0 0
      %1464 = vmatprep.subr.bf16.mxu0 0
      %1465 = vmatpush1.bf16.msra.mxu0 0
      %1466 = vmatprep.subr.bf16.mxu0 0
      %1467 = vmatpush1.bf16.msra.mxu0 0
      %1468 = vmatprep.subr.bf16.mxu0 0
      %1469 = vmatpush1.bf16.msra.mxu0 0
      %1470 = vmatprep.subr.bf16.mxu0 0
      %1471 = vmatpush1.bf16.msra.mxu0 0
      %1472 = vmatprep.subr.bf16.mxu0 0
      %1473 = vmatpush1.bf16.msra.mxu0 0
      %1474 = vmatprep.subr.bf16.mxu0 0
      %1475 = vmatpush1.bf16.msra.mxu0 0
      %1476 = vmatprep.subr.bf16.mxu0 0
      %1477 = vmatpush1.bf16.msra.mxu0 0
      %1478 = vmatprep.subr.bf16.mxu0 0
      %1479 = vmatpush1.bf16.msra.mxu0 0
      %1480 = vmatprep.subr.bf16.mxu0 0
      %1481 = vmatpush1.bf16.msra.mxu0 0
      %1482 = vmatprep.subr.bf16.mxu0 0
      %1483 = vmatpush1.bf16.msra.mxu0 0
      %1484 = vmatprep.mubr.bf16.mxu0 0
      %1485 = vmatmul.mubr.bf16.gmra.mrb[0].mxu0 %v746
      %v1486 = vpop.f32.mrb[0].mxu0
      %v1487 = vadd.f32 %v1438, %v1486
      %v1488 = vpop.f32.mrb[0].mxu0
      %v1489 = vpop.f32.mrb[0].mxu0
      %v1490 = vpop.f32.mrb[0].mxu0
      %1491 = vdwg.mxu0
      %s1492 = scalar_lea.vmem %s4, 32
      %v1493 = vld [vmem:[%s1492] sm:$0xf]
      %v1494 = vld [vmem:[%s1492 + $0x4] sm:$0xf]
      %v1495 = vld [vmem:[%s1492 + $0x8] sm:$0xf]
      %v1496 = vld [vmem:[%s1492 + $0xc] sm:$0xf]
      %s1497 = scalar_lea.vmem %s7, 2
      %v1498 = vld [vmem:[%s1497] sm:$0x1]
      %v1500 = vlaneseq
      %v1501 = vshrl.u32 %v1500, 7
      %v1502 = vsub.s32 0, %v1501
      %v1503 = vrot.slane %v1498, %v1502
      %v1509 = vunpack.c.l.b16 %v1493
      %v1510 = vunpack.c.l.b16 %v1494
      %v1511 = vunpack.c.l.b16 %v1495
      %v1512 = vunpack.c.l.b16 %v1496
      %v1513 = vpack.c.b16 %v1510, %v1509
      %v1514 = vpack.c.b16 %v1512, %v1511
      %1517 = vmatprep.subr.bf16.mxu0 0
      %1518 = vmatpush1.bf16.msra.mxu0 %v1513
      %1519 = vmatprep.subr.bf16.mxu0 0
      %1520 = vmatpush1.bf16.msra.mxu0 %v1514
      %1521 = vmatprep.subr.bf16.mxu0 0
      %1522 = vmatpush1.bf16.msra.mxu0 0
      %1523 = vmatprep.subr.bf16.mxu0 0
      %1524 = vmatpush1.bf16.msra.mxu0 0
      %1525 = vmatprep.subr.bf16.mxu0 0
      %1526 = vmatpush1.bf16.msra.mxu0 0
      %1527 = vmatprep.subr.bf16.mxu0 0
      %1528 = vmatpush1.bf16.msra.mxu0 0
      %1529 = vmatprep.subr.bf16.mxu0 0
      %1530 = vmatpush1.bf16.msra.mxu0 0
      %1531 = vmatprep.subr.bf16.mxu0 0
      %1532 = vmatpush1.bf16.msra.mxu0 0
      %1533 = vmatprep.subr.bf16.mxu0 0
      %1534 = vmatpush1.bf16.msra.mxu0 0
      %1535 = vmatprep.subr.bf16.mxu0 0
      %1536 = vmatpush1.bf16.msra.mxu0 0
      %1537 = vmatprep.subr.bf16.mxu0 0
      %1538 = vmatpush1.bf16.msra.mxu0 0
      %1539 = vmatprep.subr.bf16.mxu0 0
      %1540 = vmatpush1.bf16.msra.mxu0 0
      %1541 = vmatprep.subr.bf16.mxu0 0
      %1542 = vmatpush1.bf16.msra.mxu0 0
      %1543 = vmatprep.subr.bf16.mxu0 0
      %1544 = vmatpush1.bf16.msra.mxu0 0
      %1545 = vmatprep.subr.bf16.mxu0 0
      %1546 = vmatpush1.bf16.msra.mxu0 0
      %1547 = vmatprep.subr.bf16.mxu0 0
      %1548 = vmatpush1.bf16.msra.mxu0 0
      %1549 = vmatprep.mubr.bf16.mxu0 0
      %1550 = vmatmul.mubr.bf16.gmra.mrb[0].mxu0 %v746
      %v1551 = vpop.f32.mrb[0].mxu0
      %v1552 = vadd.f32 %v1503, %v1551
      %v1553 = vpop.f32.mrb[0].mxu0
      %v1554 = vpop.f32.mrb[0].mxu0
      %v1555 = vpop.f32.mrb[0].mxu0
      %1556 = vdwg.mxu0
      %s1557 = scalar_lea.vmem %s5, 32
      %v1558 = vld [vmem:[%s1557] sm:$0xf]
      %v1559 = vld [vmem:[%s1557 + $0x4] sm:$0xf]
      %v1560 = vld [vmem:[%s1557 + $0x8] sm:$0xf]
      %v1561 = vld [vmem:[%s1557 + $0xc] sm:$0xf]
      %s1562 = scalar_lea.vmem %s8, 2
      %v1563 = vld [vmem:[%s1562] sm:$0x1]
      %v1565 = vlaneseq
      %v1566 = vshrl.u32 %v1565, 7
      %v1567 = vsub.s32 0, %v1566
      %v1568 = vrot.slane %v1563, %v1567
      %v1574 = vunpack.c.l.b16 %v1558
      %v1575 = vunpack.c.l.b16 %v1559
      %v1576 = vunpack.c.l.b16 %v1560
      %v1577 = vunpack.c.l.b16 %v1561
      %v1578 = vpack.c.b16 %v1575, %v1574
      %v1579 = vpack.c.b16 %v1577, %v1576
      %1582 = vmatprep.subr.bf16.mxu0 0
      %1583 = vmatpush1.bf16.msra.mxu0 %v1578
      %1584 = vmatprep.subr.bf16.mxu0 0
      %1585 = vmatpush1.bf16.msra.mxu0 %v1579
      %1586 = vmatprep.subr.bf16.mxu0 0
      %1587 = vmatpush1.bf16.msra.mxu0 0
      %1588 = vmatprep.subr.bf16.mxu0 0
      %1589 = vmatpush1.bf16.msra.mxu0 0
      %1590 = vmatprep.subr.bf16.mxu0 0
      %1591 = vmatpush1.bf16.msra.mxu0 0
      %1592 = vmatprep.subr.bf16.mxu0 0
      %1593 = vmatpush1.bf16.msra.mxu0 0
      %1594 = vmatprep.subr.bf16.mxu0 0
      %1595 = vmatpush1.bf16.msra.mxu0 0
      %1596 = vmatprep.subr.bf16.mxu0 0
      %1597 = vmatpush1.bf16.msra.mxu0 0
      %1598 = vmatprep.subr.bf16.mxu0 0
      %1599 = vmatpush1.bf16.msra.mxu0 0
      %1600 = vmatprep.subr.bf16.mxu0 0
      %1601 = vmatpush1.bf16.msra.mxu0 0
      %1602 = vmatprep.subr.bf16.mxu0 0
      %1603 = vmatpush1.bf16.msra.mxu0 0
      %1604 = vmatprep.subr.bf16.mxu0 0
      %1605 = vmatpush1.bf16.msra.mxu0 0
      %1606 = vmatprep.subr.bf16.mxu0 0
      %1607 = vmatpush1.bf16.msra.mxu0 0
      %1608 = vmatprep.subr.bf16.mxu0 0
      %1609 = vmatpush1.bf16.msra.mxu0 0
      %1610 = vmatprep.subr.bf16.mxu0 0
      %1611 = vmatpush1.bf16.msra.mxu0 0
      %1612 = vmatprep.subr.bf16.mxu0 0
      %1613 = vmatpush1.bf16.msra.mxu0 0
      %1614 = vmatprep.mubr.bf16.mxu0 0
      %1615 = vmatmul.mubr.bf16.gmra.mrb[0].mxu0 %v746
      %v1616 = vpop.f32.mrb[0].mxu0
      %v1617 = vadd.f32 %v1568, %v1616
      %v1618 = vpop.f32.mrb[0].mxu0
      %v1619 = vpop.f32.mrb[0].mxu0
      %v1620 = vpop.f32.mrb[0].mxu0
      %1621 = vdwg.mxu0
      %v1622 = vpack.c.bf16 %v1487, %v1487
      %v1623 = vpack.c.bf16 %v1552, %v1552
      %v1625 = vsel %vm916, %v1622, 0
      %v1628 = vsel %vm916, %v1623, 0
      %1630 = vmatprep.subr.bf16.mxu0 0
      %1631 = vmatpush1.bf16.xpose.msra.mxu0 %v1628
      %1632 = vmatprep.subr.bf16.mxu0 0
      %1633 = vmatpush1.bf16.xpose.msra.mxu0 0
      %1634 = vmatprep.subr.bf16.mxu0 0
      %1635 = vmatpush1.bf16.xpose.msra.mxu0 0
      %1636 = vmatprep.subr.bf16.mxu0 0
      %1637 = vmatpush1.bf16.xpose.msra.mxu0 0
      %1638 = vmatprep.subr.bf16.mxu0 0
      %1639 = vmatpush1.bf16.xpose.msra.mxu0 0
      %1640 = vmatprep.subr.bf16.mxu0 0
      %1641 = vmatpush1.bf16.xpose.msra.mxu0 0
      %1642 = vmatprep.subr.bf16.mxu0 0
      %1643 = vmatpush1.bf16.xpose.msra.mxu0 0
      %1644 = vmatprep.subr.bf16.mxu0 0
      %1645 = vmatpush1.bf16.xpose.msra.mxu0 0
      %1646 = vmatprep.subr.bf16.mxu0 0
      %1647 = vmatpush1.bf16.xpose.msra.mxu0 0
      %1648 = vmatprep.subr.bf16.mxu0 0
      %1649 = vmatpush1.bf16.xpose.msra.mxu0 0
      %1650 = vmatprep.subr.bf16.mxu0 0
      %1651 = vmatpush1.bf16.xpose.msra.mxu0 0
      %1652 = vmatprep.subr.bf16.mxu0 0
      %1653 = vmatpush1.bf16.xpose.msra.mxu0 0
      %1654 = vmatprep.subr.bf16.mxu0 0
      %1655 = vmatpush1.bf16.xpose.msra.mxu0 0
      %1656 = vmatprep.subr.bf16.mxu0 0
      %1657 = vmatpush1.bf16.xpose.msra.mxu0 0
      %1658 = vmatprep.subr.bf16.mxu0 0
      %1659 = vmatpush1.bf16.xpose.msra.mxu0 0
      %1660 = vmatprep.subr.bf16.mxu0 0
      %1661 = vmatpush1.bf16.xpose.msra.mxu0 0
      %1662 = vmatprep.mubr.bf16.mxu0 0
      %1663 = vmatmul.mubr.bf16.gmra.mrb[0].mxu0 %v1625
      %v1664 = vpop.f32.mrb[0].mxu0
      %v1665 = vadd.f32 0.0, %v1664
      %v1666 = vpop.f32.mrb[0].mxu0
      %v1667 = vpop.f32.mrb[0].mxu0
      %v1668 = vpop.f32.mrb[0].mxu0
      %1669 = vdwg.mxu0
      %v1670 = vmul.f32 %v1665, 0.35355338
      %v1671 = vsel %vm964, %v1670, -inf
      %1672 = vmax.xlane.f32.xlu0 %v1671
      %v1673 = vpop.xlane.xlu0 %1672
      %v1674 = vsub.f32 %v1670, %v1673
      %v1675 = vmul.f32 %v1674, 1.442695
      %v1676 = vpow.pop %v1675
      %v1677 = vsel %vm964, %v1676, 0.0
      %1678 = vadd.xlane.f32.xlu0 %v1677
      %v1679 = vpop.xlane.xlu0 %1678
      %v1680 = vpack.c.bf16 %v1676, %v1676
      %v1681 = vpack.c.bf16 %v1617, %v1617
      %v1683 = vsel %vm976, %v1680, 0
      %v1686 = vsel %vm980, %v1681, 0
      %1688 = vmatprep.subr.bf16.mxu0 0
      %1689 = vmatpush1.bf16.msra.mxu0 %v1686
      %1690 = vmatprep.subr.bf16.mxu0 0
      %1691 = vmatpush1.bf16.msra.mxu0 0
      %1692 = vmatprep.subr.bf16.mxu0 0
      %1693 = vmatpush1.bf16.msra.mxu0 0
      %1694 = vmatprep.subr.bf16.mxu0 0
      %1695 = vmatpush1.bf16.msra.mxu0 0
      %1696 = vmatprep.subr.bf16.mxu0 0
      %1697 = vmatpush1.bf16.msra.mxu0 0
      %1698 = vmatprep.subr.bf16.mxu0 0
      %1699 = vmatpush1.bf16.msra.mxu0 0
      %1700 = vmatprep.subr.bf16.mxu0 0
      %1701 = vmatpush1.bf16.msra.mxu0 0
      %1702 = vmatprep.subr.bf16.mxu0 0
      %1703 = vmatpush1.bf16.msra.mxu0 0
      %1704 = vmatprep.subr.bf16.mxu0 0
      %1705 = vmatpush1.bf16.msra.mxu0 0
      %1706 = vmatprep.subr.bf16.mxu0 0
      %1707 = vmatpush1.bf16.msra.mxu0 0
      %1708 = vmatprep.subr.bf16.mxu0 0
      %1709 = vmatpush1.bf16.msra.mxu0 0
      %1710 = vmatprep.subr.bf16.mxu0 0
      %1711 = vmatpush1.bf16.msra.mxu0 0
      %1712 = vmatprep.subr.bf16.mxu0 0
      %1713 = vmatpush1.bf16.msra.mxu0 0
      %1714 = vmatprep.subr.bf16.mxu0 0
      %1715 = vmatpush1.bf16.msra.mxu0 0
      %1716 = vmatprep.subr.bf16.mxu0 0
      %1717 = vmatpush1.bf16.msra.mxu0 0
      %1718 = vmatprep.subr.bf16.mxu0 0
      %1719 = vmatpush1.bf16.msra.mxu0 0
      %1720 = vmatprep.mubr.bf16.mxu0 0
      %1721 = vmatmul.mubr.bf16.gmra.mrb[0].mxu0 %v1683
      %v1722 = vpop.f32.mrb[0].mxu0
      %v1723 = vadd.f32 0.0, %v1722
      %v1724 = vpop.f32.mrb[0].mxu0
      %v1725 = vpop.f32.mrb[0].mxu0
      %v1726 = vpop.f32.mrb[0].mxu0
      %1727 = vdwg.mxu0
      %v1728 = vrcp.pop %v1679
      %v1729 = vmul.f32 %v1723, %v1728
      %v1730 = vpack.c.bf16 %v1729, %v1729
      %s1731 = scalar_lea.vmem %s9, 8
      %v1732 = vld [vmem:[%s1731] sm:$0xf]
      %v1734 = vsel %vm916, %v1730, 0
      %v1737 = vsel %vm1337, %v1732, 0
      %1739 = vmatprep.subr.bf16.mxu0 0
      %1740 = vmatpush1.bf16.msra.mxu0 %v1737
      %1741 = vmatprep.subr.bf16.mxu0 0
      %1742 = vmatpush1.bf16.msra.mxu0 0
      %1743 = vmatprep.subr.bf16.mxu0 0
      %1744 = vmatpush1.bf16.msra.mxu0 0
      %1745 = vmatprep.subr.bf16.mxu0 0
      %1746 = vmatpush1.bf16.msra.mxu0 0
      %1747 = vmatprep.subr.bf16.mxu0 0
      %1748 = vmatpush1.bf16.msra.mxu0 0
      %1749 = vmatprep.subr.bf16.mxu0 0
      %1750 = vmatpush1.bf16.msra.mxu0 0
      %1751 = vmatprep.subr.bf16.mxu0 0
      %1752 = vmatpush1.bf16.msra.mxu0 0
      %1753 = vmatprep.subr.bf16.mxu0 0
      %1754 = vmatpush1.bf16.msra.mxu0 0
      %1755 = vmatprep.subr.bf16.mxu0 0
      %1756 = vmatpush1.bf16.msra.mxu0 0
      %1757 = vmatprep.subr.bf16.mxu0 0
      %1758 = vmatpush1.bf16.msra.mxu0 0
      %1759 = vmatprep.subr.bf16.mxu0 0
      %1760 = vmatpush1.bf16.msra.mxu0 0
      %1761 = vmatprep.subr.bf16.mxu0 0
      %1762 = vmatpush1.bf16.msra.mxu0 0
      %1763 = vmatprep.subr.bf16.mxu0 0
      %1764 = vmatpush1.bf16.msra.mxu0 0
      %1765 = vmatprep.subr.bf16.mxu0 0
      %1766 = vmatpush1.bf16.msra.mxu0 0
      %1767 = vmatprep.subr.bf16.mxu0 0
      %1768 = vmatpush1.bf16.msra.mxu0 0
      %1769 = vmatprep.subr.bf16.mxu0 0
      %1770 = vmatpush1.bf16.msra.mxu0 0
      %1771 = vmatprep.mubr.bf16.mxu0 0
      %1772 = vmatmul.mubr.bf16.gmra.mrb[0].mxu0 %v1734
      %v1773 = vpop.f32.mrb[0].mxu0
      %v1774 = vadd.f32 0.0, %v1773
      %v1775 = vpop.f32.mrb[0].mxu0
      %v1776 = vpop.f32.mrb[0].mxu0
      %v1777 = vpop.f32.mrb[0].mxu0
      %1778 = vdwg.mxu0
      %v1779 = vadd.f32 %v1422, %v1774
      %s1780 = scalar_lea.vmem %s3, 48
      %v1781 = vld [vmem:[%s1780] sm:$0xf]
      %v1782 = vld [vmem:[%s1780 + $0x4] sm:$0xf]
      %v1783 = vld [vmem:[%s1780 + $0x8] sm:$0xf]
      %v1784 = vld [vmem:[%s1780 + $0xc] sm:$0xf]
      %s1785 = scalar_lea.vmem %s6, 3
      %v1786 = vld [vmem:[%s1785] sm:$0x1]
      %v1788 = vlaneseq
      %v1789 = vshrl.u32 %v1788, 7
      %v1790 = vsub.s32 0, %v1789
      %v1791 = vrot.slane %v1786, %v1790
      %v1797 = vunpack.c.l.b16 %v1781
      %v1798 = vunpack.c.l.b16 %v1782
      %v1799 = vunpack.c.l.b16 %v1783
      %v1800 = vunpack.c.l.b16 %v1784
      %v1801 = vpack.c.b16 %v1798, %v1797
      %v1802 = vpack.c.b16 %v1800, %v1799
      %1805 = vmatprep.subr.bf16.mxu0 0
      %1806 = vmatpush1.bf16.msra.mxu0 %v1801
      %1807 = vmatprep.subr.bf16.mxu0 0
      %1808 = vmatpush1.bf16.msra.mxu0 %v1802
      %1809 = vmatprep.subr.bf16.mxu0 0
      %1810 = vmatpush1.bf16.msra.mxu0 0
      %1811 = vmatprep.subr.bf16.mxu0 0
      %1812 = vmatpush1.bf16.msra.mxu0 0
      %1813 = vmatprep.subr.bf16.mxu0 0
      %1814 = vmatpush1.bf16.msra.mxu0 0
      %1815 = vmatprep.subr.bf16.mxu0 0
      %1816 = vmatpush1.bf16.msra.mxu0 0
      %1817 = vmatprep.subr.bf16.mxu0 0
      %1818 = vmatpush1.bf16.msra.mxu0 0
      %1819 = vmatprep.subr.bf16.mxu0 0
      %1820 = vmatpush1.bf16.msra.mxu0 0
      %1821 = vmatprep.subr.bf16.mxu0 0
      %1822 = vmatpush1.bf16.msra.mxu0 0
      %1823 = vmatprep.subr.bf16.mxu0 0
      %1824 = vmatpush1.bf16.msra.mxu0 0
      %1825 = vmatprep.subr.bf16.mxu0 0
      %1826 = vmatpush1.bf16.msra.mxu0 0
      %1827 = vmatprep.subr.bf16.mxu0 0
      %1828 = vmatpush1.bf16.msra.mxu0 0
      %1829 = vmatprep.subr.bf16.mxu0 0
      %1830 = vmatpush1.bf16.msra.mxu0 0
      %1831 = vmatprep.subr.bf16.mxu0 0
      %1832 = vmatpush1.bf16.msra.mxu0 0
      %1833 = vmatprep.subr.bf16.mxu0 0
      %1834 = vmatpush1.bf16.msra.mxu0 0
      %1835 = vmatprep.subr.bf16.mxu0 0
      %1836 = vmatpush1.bf16.msra.mxu0 0
      %1837 = vmatprep.mubr.bf16.mxu0 0
      %1838 = vmatmul.mubr.bf16.gmra.mrb[0].mxu0 %v746
      %v1839 = vpop.f32.mrb[0].mxu0
      %v1840 = vadd.f32 %v1791, %v1839
      %v1841 = vpop.f32.mrb[0].mxu0
      %v1842 = vpop.f32.mrb[0].mxu0
      %v1843 = vpop.f32.mrb[0].mxu0
      %1844 = vdwg.mxu0
      %s1845 = scalar_lea.vmem %s4, 48
      %v1846 = vld [vmem:[%s1845] sm:$0xf]
      %v1847 = vld [vmem:[%s1845 + $0x4] sm:$0xf]
      %v1848 = vld [vmem:[%s1845 + $0x8] sm:$0xf]
      %v1849 = vld [vmem:[%s1845 + $0xc] sm:$0xf]
      %s1850 = scalar_lea.vmem %s7, 3
      %v1851 = vld [vmem:[%s1850] sm:$0x1]
      %v1853 = vlaneseq
      %v1854 = vshrl.u32 %v1853, 7
      %v1855 = vsub.s32 0, %v1854
      %v1856 = vrot.slane %v1851, %v1855
      %v1862 = vunpack.c.l.b16 %v1846
      %v1863 = vunpack.c.l.b16 %v1847
      %v1864 = vunpack.c.l.b16 %v1848
      %v1865 = vunpack.c.l.b16 %v1849
      %v1866 = vpack.c.b16 %v1863, %v1862
      %v1867 = vpack.c.b16 %v1865, %v1864
      %1870 = vmatprep.subr.bf16.mxu0 0
      %1871 = vmatpush1.bf16.msra.mxu0 %v1866
      %1872 = vmatprep.subr.bf16.mxu0 0
      %1873 = vmatpush1.bf16.msra.mxu0 %v1867
      %1874 = vmatprep.subr.bf16.mxu0 0
      %1875 = vmatpush1.bf16.msra.mxu0 0
      %1876 = vmatprep.subr.bf16.mxu0 0
      %1877 = vmatpush1.bf16.msra.mxu0 0
      %1878 = vmatprep.subr.bf16.mxu0 0
      %1879 = vmatpush1.bf16.msra.mxu0 0
      %1880 = vmatprep.subr.bf16.mxu0 0
      %1881 = vmatpush1.bf16.msra.mxu0 0
      %1882 = vmatprep.subr.bf16.mxu0 0
      %1883 = vmatpush1.bf16.msra.mxu0 0
      %1884 = vmatprep.subr.bf16.mxu0 0
      %1885 = vmatpush1.bf16.msra.mxu0 0
      %1886 = vmatprep.subr.bf16.mxu0 0
      %1887 = vmatpush1.bf16.msra.mxu0 0
      %1888 = vmatprep.subr.bf16.mxu0 0
      %1889 = vmatpush1.bf16.msra.mxu0 0
      %1890 = vmatprep.subr.bf16.mxu0 0
      %1891 = vmatpush1.bf16.msra.mxu0 0
      %1892 = vmatprep.subr.bf16.mxu0 0
      %1893 = vmatpush1.bf16.msra.mxu0 0
      %1894 = vmatprep.subr.bf16.mxu0 0
      %1895 = vmatpush1.bf16.msra.mxu0 0
      %1896 = vmatprep.subr.bf16.mxu0 0
      %1897 = vmatpush1.bf16.msra.mxu0 0
      %1898 = vmatprep.subr.bf16.mxu0 0
      %1899 = vmatpush1.bf16.msra.mxu0 0
      %1900 = vmatprep.subr.bf16.mxu0 0
      %1901 = vmatpush1.bf16.msra.mxu0 0
      %1902 = vmatprep.mubr.bf16.mxu0 0
      %1903 = vmatmul.mubr.bf16.gmra.mrb[0].mxu0 %v746
      %v1904 = vpop.f32.mrb[0].mxu0
      %v1905 = vadd.f32 %v1856, %v1904
      %v1906 = vpop.f32.mrb[0].mxu0
      %v1907 = vpop.f32.mrb[0].mxu0
      %v1908 = vpop.f32.mrb[0].mxu0
      %1909 = vdwg.mxu0
      %s1910 = scalar_lea.vmem %s5, 48
      %v1911 = vld [vmem:[%s1910] sm:$0xf]
      %v1912 = vld [vmem:[%s1910 + $0x4] sm:$0xf]
      %v1913 = vld [vmem:[%s1910 + $0x8] sm:$0xf]
      %v1914 = vld [vmem:[%s1910 + $0xc] sm:$0xf]
      %s1915 = scalar_lea.vmem %s8, 3
      %v1916 = vld [vmem:[%s1915] sm:$0x1]
      %v1918 = vlaneseq
      %v1919 = vshrl.u32 %v1918, 7
      %v1920 = vsub.s32 0, %v1919
      %v1921 = vrot.slane %v1916, %v1920
      %v1927 = vunpack.c.l.b16 %v1911
      %v1928 = vunpack.c.l.b16 %v1912
      %v1929 = vunpack.c.l.b16 %v1913
      %v1930 = vunpack.c.l.b16 %v1914
      %v1931 = vpack.c.b16 %v1928, %v1927
      %v1932 = vpack.c.b16 %v1930, %v1929
      %1935 = vmatprep.subr.bf16.mxu0 0
      %1936 = vmatpush1.bf16.msra.mxu0 %v1931
      %1937 = vmatprep.subr.bf16.mxu0 0
      %1938 = vmatpush1.bf16.msra.mxu0 %v1932
      %1939 = vmatprep.subr.bf16.mxu0 0
      %1940 = vmatpush1.bf16.msra.mxu0 0
      %1941 = vmatprep.subr.bf16.mxu0 0
      %1942 = vmatpush1.bf16.msra.mxu0 0
      %1943 = vmatprep.subr.bf16.mxu0 0
      %1944 = vmatpush1.bf16.msra.mxu0 0
      %1945 = vmatprep.subr.bf16.mxu0 0
      %1946 = vmatpush1.bf16.msra.mxu0 0
      %1947 = vmatprep.subr.bf16.mxu0 0
      %1948 = vmatpush1.bf16.msra.mxu0 0
      %1949 = vmatprep.subr.bf16.mxu0 0
      %1950 = vmatpush1.bf16.msra.mxu0 0
      %1951 = vmatprep.subr.bf16.mxu0 0
      %1952 = vmatpush1.bf16.msra.mxu0 0
      %1953 = vmatprep.subr.bf16.mxu0 0
      %1954 = vmatpush1.bf16.msra.mxu0 0
      %1955 = vmatprep.subr.bf16.mxu0 0
      %1956 = vmatpush1.bf16.msra.mxu0 0
      %1957 = vmatprep.subr.bf16.mxu0 0
      %1958 = vmatpush1.bf16.msra.mxu0 0
      %1959 = vmatprep.subr.bf16.mxu0 0
      %1960 = vmatpush1.bf16.msra.mxu0 0
      %1961 = vmatprep.subr.bf16.mxu0 0
      %1962 = vmatpush1.bf16.msra.mxu0 0
      %1963 = vmatprep.subr.bf16.mxu0 0
      %1964 = vmatpush1.bf16.msra.mxu0 0
      %1965 = vmatprep.subr.bf16.mxu0 0
      %1966 = vmatpush1.bf16.msra.mxu0 0
      %1967 = vmatprep.mubr.bf16.mxu0 0
      %1968 = vmatmul.mubr.bf16.gmra.mrb[0].mxu0 %v746
      %v1969 = vpop.f32.mrb[0].mxu0
      %v1970 = vadd.f32 %v1921, %v1969
      %v1971 = vpop.f32.mrb[0].mxu0
      %v1972 = vpop.f32.mrb[0].mxu0
      %v1973 = vpop.f32.mrb[0].mxu0
      %1974 = vdwg.mxu0
      %v1975 = vpack.c.bf16 %v1840, %v1840
      %v1976 = vpack.c.bf16 %v1905, %v1905
      %v1978 = vsel %vm916, %v1975, 0
      %v1981 = vsel %vm916, %v1976, 0
      %1983 = vmatprep.subr.bf16.mxu0 0
      %1984 = vmatpush1.bf16.xpose.msra.mxu0 %v1981
      %1985 = vmatprep.subr.bf16.mxu0 0
      %1986 = vmatpush1.bf16.xpose.msra.mxu0 0
      %1987 = vmatprep.subr.bf16.mxu0 0
      %1988 = vmatpush1.bf16.xpose.msra.mxu0 0
      %1989 = vmatprep.subr.bf16.mxu0 0
      %1990 = vmatpush1.bf16.xpose.msra.mxu0 0
      %1991 = vmatprep.subr.bf16.mxu0 0
      %1992 = vmatpush1.bf16.xpose.msra.mxu0 0
      %1993 = vmatprep.subr.bf16.mxu0 0
      %1994 = vmatpush1.bf16.xpose.msra.mxu0 0
      %1995 = vmatprep.subr.bf16.mxu0 0
      %1996 = vmatpush1.bf16.xpose.msra.mxu0 0
      %1997 = vmatprep.subr.bf16.mxu0 0
      %1998 = vmatpush1.bf16.xpose.msra.mxu0 0
      %1999 = vmatprep.subr.bf16.mxu0 0
      %2000 = vmatpush1.bf16.xpose.msra.mxu0 0
      %2001 = vmatprep.subr.bf16.mxu0 0
      %2002 = vmatpush1.bf16.xpose.msra.mxu0 0
      %2003 = vmatprep.subr.bf16.mxu0 0
      %2004 = vmatpush1.bf16.xpose.msra.mxu0 0
      %2005 = vmatprep.subr.bf16.mxu0 0
      %2006 = vmatpush1.bf16.xpose.msra.mxu0 0
      %2007 = vmatprep.subr.bf16.mxu0 0
      %2008 = vmatpush1.bf16.xpose.msra.mxu0 0
      %2009 = vmatprep.subr.bf16.mxu0 0
      %2010 = vmatpush1.bf16.xpose.msra.mxu0 0
      %2011 = vmatprep.subr.bf16.mxu0 0
      %2012 = vmatpush1.bf16.xpose.msra.mxu0 0
      %2013 = vmatprep.subr.bf16.mxu0 0
      %2014 = vmatpush1.bf16.xpose.msra.mxu0 0
      %2015 = vmatprep.mubr.bf16.mxu0 0
      %2016 = vmatmul.mubr.bf16.gmra.mrb[0].mxu0 %v1978
      %v2017 = vpop.f32.mrb[0].mxu0
      %v2018 = vadd.f32 0.0, %v2017
      %v2019 = vpop.f32.mrb[0].mxu0
      %v2020 = vpop.f32.mrb[0].mxu0
      %v2021 = vpop.f32.mrb[0].mxu0
      %2022 = vdwg.mxu0
      %v2023 = vmul.f32 %v2018, 0.35355338
      %v2024 = vsel %vm964, %v2023, -inf
      %2025 = vmax.xlane.f32.xlu0 %v2024
      %v2026 = vpop.xlane.xlu0 %2025
      %v2027 = vsub.f32 %v2023, %v2026
      %v2028 = vmul.f32 %v2027, 1.442695
      %v2029 = vpow.pop %v2028
      %v2030 = vsel %vm964, %v2029, 0.0
      %2031 = vadd.xlane.f32.xlu0 %v2030
      %v2032 = vpop.xlane.xlu0 %2031
      %v2033 = vpack.c.bf16 %v2029, %v2029
      %v2034 = vpack.c.bf16 %v1970, %v1970
      %v2036 = vsel %vm976, %v2033, 0
      %v2039 = vsel %vm980, %v2034, 0
      %2041 = vmatprep.subr.bf16.mxu0 0
      %2042 = vmatpush1.bf16.msra.mxu0 %v2039
      %2043 = vmatprep.subr.bf16.mxu0 0
      %2044 = vmatpush1.bf16.msra.mxu0 0
      %2045 = vmatprep.subr.bf16.mxu0 0
      %2046 = vmatpush1.bf16.msra.mxu0 0
      %2047 = vmatprep.subr.bf16.mxu0 0
      %2048 = vmatpush1.bf16.msra.mxu0 0
      %2049 = vmatprep.subr.bf16.mxu0 0
      %2050 = vmatpush1.bf16.msra.mxu0 0
      %2051 = vmatprep.subr.bf16.mxu0 0
      %2052 = vmatpush1.bf16.msra.mxu0 0
      %2053 = vmatprep.subr.bf16.mxu0 0
      %2054 = vmatpush1.bf16.msra.mxu0 0
      %2055 = vmatprep.subr.bf16.mxu0 0
      %2056 = vmatpush1.bf16.msra.mxu0 0
      %2057 = vmatprep.subr.bf16.mxu0 0
      %2058 = vmatpush1.bf16.msra.mxu0 0
      %2059 = vmatprep.subr.bf16.mxu0 0
      %2060 = vmatpush1.bf16.msra.mxu0 0
      %2061 = vmatprep.subr.bf16.mxu0 0
      %2062 = vmatpush1.bf16.msra.mxu0 0
      %2063 = vmatprep.subr.bf16.mxu0 0
      %2064 = vmatpush1.bf16.msra.mxu0 0
      %2065 = vmatprep.subr.bf16.mxu0 0
      %2066 = vmatpush1.bf16.msra.mxu0 0
      %2067 = vmatprep.subr.bf16.mxu0 0
      %2068 = vmatpush1.bf16.msra.mxu0 0
      %2069 = vmatprep.subr.bf16.mxu0 0
      %2070 = vmatpush1.bf16.msra.mxu0 0
      %2071 = vmatprep.subr.bf16.mxu0 0
      %2072 = vmatpush1.bf16.msra.mxu0 0
      %2073 = vmatprep.mubr.bf16.mxu0 0
      %2074 = vmatmul.mubr.bf16.gmra.mrb[0].mxu0 %v2036
      %v2075 = vpop.f32.mrb[0].mxu0
      %v2076 = vadd.f32 0.0, %v2075
      %v2077 = vpop.f32.mrb[0].mxu0
      %v2078 = vpop.f32.mrb[0].mxu0
      %v2079 = vpop.f32.mrb[0].mxu0
      %2080 = vdwg.mxu0
      %v2081 = vrcp.pop %v2032
      %v2082 = vmul.f32 %v2076, %v2081
      %v2083 = vpack.c.bf16 %v2082, %v2082
      %s2084 = scalar_lea.vmem %s9, 12
      %v2085 = vld [vmem:[%s2084] sm:$0xf]
      %v2087 = vsel %vm916, %v2083, 0
      %v2090 = vsel %vm1337, %v2085, 0
      %2092 = vmatprep.subr.bf16.mxu0 0
      %2093 = vmatpush1.bf16.msra.mxu0 %v2090
      %2094 = vmatprep.subr.bf16.mxu0 0
      %2095 = vmatpush1.bf16.msra.mxu0 0
      %2096 = vmatprep.subr.bf16.mxu0 0
      %2097 = vmatpush1.bf16.msra.mxu0 0
      %2098 = vmatprep.subr.bf16.mxu0 0
      %2099 = vmatpush1.bf16.msra.mxu0 0
      %2100 = vmatprep.subr.bf16.mxu0 0
      %2101 = vmatpush1.bf16.msra.mxu0 0
      %2102 = vmatprep.subr.bf16.mxu0 0
      %2103 = vmatpush1.bf16.msra.mxu0 0
      %2104 = vmatprep.subr.bf16.mxu0 0
      %2105 = vmatpush1.bf16.msra.mxu0 0
      %2106 = vmatprep.subr.bf16.mxu0 0
      %2107 = vmatpush1.bf16.msra.mxu0 0
      %2108 = vmatprep.subr.bf16.mxu0 0
      %2109 = vmatpush1.bf16.msra.mxu0 0
      %2110 = vmatprep.subr.bf16.mxu0 0
      %2111 = vmatpush1.bf16.msra.mxu0 0
      %2112 = vmatprep.subr.bf16.mxu0 0
      %2113 = vmatpush1.bf16.msra.mxu0 0
      %2114 = vmatprep.subr.bf16.mxu0 0
      %2115 = vmatpush1.bf16.msra.mxu0 0
      %2116 = vmatprep.subr.bf16.mxu0 0
      %2117 = vmatpush1.bf16.msra.mxu0 0
      %2118 = vmatprep.subr.bf16.mxu0 0
      %2119 = vmatpush1.bf16.msra.mxu0 0
      %2120 = vmatprep.subr.bf16.mxu0 0
      %2121 = vmatpush1.bf16.msra.mxu0 0
      %2122 = vmatprep.subr.bf16.mxu0 0
      %2123 = vmatpush1.bf16.msra.mxu0 0
      %2124 = vmatprep.mubr.bf16.mxu0 0
      %2125 = vmatmul.mubr.bf16.gmra.mrb[0].mxu0 %v2087
      %v2126 = vpop.f32.mrb[0].mxu0
      %v2127 = vadd.f32 0.0, %v2126
      %v2128 = vpop.f32.mrb[0].mxu0
      %v2129 = vpop.f32.mrb[0].mxu0
      %v2130 = vpop.f32.mrb[0].mxu0
      %2131 = vdwg.mxu0
      %v2132 = vadd.f32 %v1779, %v2127
      %v2133 = vld [vmem:[%s10] sm:$0x1]
      %v2135 = vlaneseq
      %v2136 = vshrl.u32 %v2135, 7
      %v2137 = vsub.s32 0, %v2136
      %v2138 = vrot.slane %v2133, %v2137
      %v2140 = vadd.f32 %v2132, %v2138
      %v2141 = vadd.f32 %v719, %v2140
      %v2142 = vld [vmem:[%s11] sm:$0x1]
      %v2143 = vld [vmem:[%s12] sm:$0x1]
      %vm2144 = vcmask 254976
      %v2145 = vsel %vm2144, %v2141, 0.0
      %2146 = vadd.xlane.f32.xlu0 %v2145
      %v2147 = vpop.xlane.xlu0 %2146
      %v2148 = vrcp.pop 32.0
      %v2149 = vmul.f32 %v2147, %v2148
      %v2150 = vmul.f32 %v2141, %v2141
      %v2151 = vsel %vm2144, %v2150, 0.0
      %2152 = vadd.xlane.f32.xlu0 %v2151
      %v2153 = vpop.xlane.xlu0 %2152
      %v2154 = vmul.f32 %v2153, %v2148
      %v2155 = vmul.f32 %v2149, %v2149
      %v2156 = vsub.f32 %v2154, %v2155
      %v2157 = vmax.f32 %v2156, 0.0
      %v2158 = vadd.f32 %v2157, 1e-05
      %v2159 = vrsqrt.pop %v2158
      %v2160 = vsub.f32 %v2141, %v2149
      %v2162 = vlaneseq
      %v2163 = vshrl.u32 %v2162, 7
      %v2164 = vsub.s32 0, %v2163
      %v2165 = vrot.slane %v2142, %v2164
      %v2167 = vmul.f32 %v2159, %v2165
      %v2168 = vmul.f32 %v2160, %v2167
      %v2170 = vlaneseq
      %v2171 = vshrl.u32 %v2170, 7
      %v2172 = vsub.s32 0, %v2171
      %v2173 = vrot.slane %v2143, %v2172
      %v2175 = vadd.f32 %v2168, %v2173
      %v2176 = vpack.c.bf16 %v2175, %v2175
      %v2177 = vld [vmem:[%s13] sm:$0xf]
      %v2178 = vld [vmem:[%s13 + $0x4] sm:$0xf]
      %v2179 = vld [vmem:[%s13 + $0x8] sm:$0xf]
      %v2180 = vld [vmem:[%s13 + $0xc] sm:$0xf]
      %v2181 = vld [vmem:[%s14] sm:$0x1]
      %v2183 = vlaneseq
      %v2184 = vshrl.u32 %v2183, 7
      %v2185 = vsub.s32 0, %v2184
      %v2186 = vrot.slane %v2181, %v2185
      %v2192 = vunpack.c.l.b16 %v2177
      %v2193 = vunpack.c.l.b16 %v2178
      %v2194 = vunpack.c.l.b16 %v2179
      %v2195 = vunpack.c.l.b16 %v2180
      %v2196 = vpack.c.b16 %v2193, %v2192
      %v2197 = vpack.c.b16 %v2195, %v2194
      %v2201 = vsel %vm744, %v2176, 0
      %2203 = vmatprep.subr.bf16.mxu0 0
      %2204 = vmatpush1.bf16.msra.mxu0 %v2196
      %2205 = vmatprep.subr.bf16.mxu0 0
      %2206 = vmatpush1.bf16.msra.mxu0 %v2197
      %2207 = vmatprep.subr.bf16.mxu0 0
      %2208 = vmatpush1.bf16.msra.mxu0 0
      %2209 = vmatprep.subr.bf16.mxu0 0
      %2210 = vmatpush1.bf16.msra.mxu0 0
      %2211 = vmatprep.subr.bf16.mxu0 0
      %2212 = vmatpush1.bf16.msra.mxu0 0
      %2213 = vmatprep.subr.bf16.mxu0 0
      %2214 = vmatpush1.bf16.msra.mxu0 0
      %2215 = vmatprep.subr.bf16.mxu0 0
      %2216 = vmatpush1.bf16.msra.mxu0 0
      %2217 = vmatprep.subr.bf16.mxu0 0
      %2218 = vmatpush1.bf16.msra.mxu0 0
      %2219 = vmatprep.subr.bf16.mxu0 0
      %2220 = vmatpush1.bf16.msra.mxu0 0
      %2221 = vmatprep.subr.bf16.mxu0 0
      %2222 = vmatpush1.bf16.msra.mxu0 0
      %2223 = vmatprep.subr.bf16.mxu0 0
      %2224 = vmatpush1.bf16.msra.mxu0 0
      %2225 = vmatprep.subr.bf16.mxu0 0
      %2226 = vmatpush1.bf16.msra.mxu0 0
      %2227 = vmatprep.subr.bf16.mxu0 0
      %2228 = vmatpush1.bf16.msra.mxu0 0
      %2229 = vmatprep.subr.bf16.mxu0 0
      %2230 = vmatpush1.bf16.msra.mxu0 0
      %2231 = vmatprep.subr.bf16.mxu0 0
      %2232 = vmatpush1.bf16.msra.mxu0 0
      %2233 = vmatprep.subr.bf16.mxu0 0
      %2234 = vmatpush1.bf16.msra.mxu0 0
      %2235 = vmatprep.mubr.bf16.mxu0 0
      %2236 = vmatmul.mubr.bf16.gmra.mrb[0].mxu0 %v2201
      %v2237 = vpop.f32.mrb[0].mxu0
      %v2238 = vadd.f32 %v2186, %v2237
      %v2239 = vpop.f32.mrb[0].mxu0
      %v2240 = vpop.f32.mrb[0].mxu0
      %v2241 = vpop.f32.mrb[0].mxu0
      %2242 = vdwg.mxu0
      %v2243 = vmax.f32 %v2238, 0.0
      %v2244 = vpack.c.bf16 %v2243, %v2243
      %v2245 = vld [vmem:[%s15] sm:$0xf]
      %v2246 = vld [vmem:[%s15 + $0x4] sm:$0xf]
      %v2247 = vld [vmem:[%s15 + $0x8] sm:$0xf]
      %v2248 = vld [vmem:[%s15 + $0xc] sm:$0xf]
      %v2249 = vld [vmem:[%s15 + $0x10] sm:$0xf]
      %v2250 = vld [vmem:[%s15 + $0x14] sm:$0xf]
      %v2251 = vld [vmem:[%s15 + $0x18] sm:$0xf]
      %v2252 = vld [vmem:[%s15 + $0x1c] sm:$0xf]
      %v2253 = vld [vmem:[%s16] sm:$0x1]
      %v2255 = vlaneseq
      %v2256 = vshrl.u32 %v2255, 7
      %v2257 = vsub.s32 0, %v2256
      %v2258 = vrot.slane %v2253, %v2257
      %v2268 = vunpack.c.l.b16 %v2245
      %v2269 = vunpack.c.l.b16 %v2246
      %v2270 = vunpack.c.l.b16 %v2247
      %v2271 = vunpack.c.l.b16 %v2248
      %v2272 = vunpack.c.l.b16 %v2249
      %v2273 = vunpack.c.l.b16 %v2250
      %v2274 = vunpack.c.l.b16 %v2251
      %v2275 = vunpack.c.l.b16 %v2252
      %v2276 = vpack.c.b16 %v2269, %v2268
      %v2277 = vpack.c.b16 %v2271, %v2270
      %v2278 = vpack.c.b16 %v2273, %v2272
      %v2279 = vpack.c.b16 %v2275, %v2274
      %vm2284 = vcmask 523264
      %v2286 = vsel %vm2284, %v2244, 0
      %2288 = vmatprep.subr.bf16.mxu0 0
      %2289 = vmatpush1.bf16.msra.mxu0 %v2276
      %2290 = vmatprep.subr.bf16.mxu0 0
      %2291 = vmatpush1.bf16.msra.mxu0 %v2277
      %2292 = vmatprep.subr.bf16.mxu0 0
      %2293 = vmatpush1.bf16.msra.mxu0 %v2278
      %2294 = vmatprep.subr.bf16.mxu0 0
      %2295 = vmatpush1.bf16.msra.mxu0 %v2279
      %2296 = vmatprep.subr.bf16.mxu0 0
      %2297 = vmatpush1.bf16.msra.mxu0 0
      %2298 = vmatprep.subr.bf16.mxu0 0
      %2299 = vmatpush1.bf16.msra.mxu0 0
      %2300 = vmatprep.subr.bf16.mxu0 0
      %2301 = vmatpush1.bf16.msra.mxu0 0
      %2302 = vmatprep.subr.bf16.mxu0 0
      %2303 = vmatpush1.bf16.msra.mxu0 0
      %2304 = vmatprep.subr.bf16.mxu0 0
      %2305 = vmatpush1.bf16.msra.mxu0 0
      %2306 = vmatprep.subr.bf16.mxu0 0
      %2307 = vmatpush1.bf16.msra.mxu0 0
      %2308 = vmatprep.subr.bf16.mxu0 0
      %2309 = vmatpush1.bf16.msra.mxu0 0
      %2310 = vmatprep.subr.bf16.mxu0 0
      %2311 = vmatpush1.bf16.msra.mxu0 0
      %2312 = vmatprep.subr.bf16.mxu0 0
      %2313 = vmatpush1.bf16.msra.mxu0 0
      %2314 = vmatprep.subr.bf16.mxu0 0
      %2315 = vmatpush1.bf16.msra.mxu0 0
      %2316 = vmatprep.subr.bf16.mxu0 0
      %2317 = vmatpush1.bf16.msra.mxu0 0
      %2318 = vmatprep.subr.bf16.mxu0 0
      %2319 = vmatpush1.bf16.msra.mxu0 0
      %2320 = vmatprep.mubr.bf16.mxu0 0
      %2321 = vmatmul.mubr.bf16.gmra.mrb[0].mxu0 %v2286
      %v2322 = vpop.f32.mrb[0].mxu0
      %v2323 = vadd.f32 %v2258, %v2322
      %v2324 = vpop.f32.mrb[0].mxu0
      %v2325 = vpop.f32.mrb[0].mxu0
      %v2326 = vpop.f32.mrb[0].mxu0
      %2327 = vdwg.mxu0
      %v2328 = vadd.f32 %v2175, %v2323
      %v2329 = vld [vmem:[%s17] sm:$0x1]
      %v2330 = vld [vmem:[%s18] sm:$0x1]
      %v2331 = vsel %vm2144, %v2328, 0.0
      %2332 = vadd.xlane.f32.xlu0 %v2331
      %v2333 = vpop.xlane.xlu0 %2332
      %v2334 = vmul.f32 %v2333, %v2148
      %v2335 = vmul.f32 %v2328, %v2328
      %v2336 = vsel %vm2144, %v2335, 0.0
      %2337 = vadd.xlane.f32.xlu0 %v2336
      %v2338 = vpop.xlane.xlu0 %2337
      %v2339 = vmul.f32 %v2338, %v2148
      %v2340 = vmul.f32 %v2334, %v2334
      %v2341 = vsub.f32 %v2339, %v2340
      %v2342 = vmax.f32 %v2341, 0.0
      %v2343 = vadd.f32 %v2342, 1e-05
      %v2344 = vrsqrt.pop %v2343
      %v2345 = vsub.f32 %v2328, %v2334
      %v2347 = vlaneseq
      %v2348 = vshrl.u32 %v2347, 7
      %v2349 = vsub.s32 0, %v2348
      %v2350 = vrot.slane %v2329, %v2349
      %v2352 = vmul.f32 %v2344, %v2350
      %v2353 = vmul.f32 %v2345, %v2352
      %v2355 = vlaneseq
      %v2356 = vshrl.u32 %v2355, 7
      %v2357 = vsub.s32 0, %v2356
      %v2358 = vrot.slane %v2330, %v2357
      %v2360 = vadd.f32 %v2353, %v2358
      %v2361 = vpack.c.bf16 %v2360, %v2360
      %s2362 = scalar_lea.vmem %s3, 64
      %v2363 = vld [vmem:[%s2362] sm:$0xf]
      %v2364 = vld [vmem:[%s2362 + $0x4] sm:$0xf]
      %v2365 = vld [vmem:[%s2362 + $0x8] sm:$0xf]
      %v2366 = vld [vmem:[%s2362 + $0xc] sm:$0xf]
      %s2367 = scalar_lea.vmem %s6, 4
      %v2368 = vld [vmem:[%s2367] sm:$0x1]
      %v2370 = vlaneseq
      %v2371 = vshrl.u32 %v2370, 7
      %v2372 = vsub.s32 0, %v2371
      %v2373 = vrot.slane %v2368, %v2372
      %v2379 = vunpack.c.l.b16 %v2363
      %v2380 = vunpack.c.l.b16 %v2364
      %v2381 = vunpack.c.l.b16 %v2365
      %v2382 = vunpack.c.l.b16 %v2366
      %v2383 = vpack.c.b16 %v2380, %v2379
      %v2384 = vpack.c.b16 %v2382, %v2381
      %v2388 = vsel %vm744, %v2361, 0
      %2390 = vmatprep.subr.bf16.mxu0 0
      %2391 = vmatpush1.bf16.msra.mxu0 %v2383
      %2392 = vmatprep.subr.bf16.mxu0 0
      %2393 = vmatpush1.bf16.msra.mxu0 %v2384
      %2394 = vmatprep.subr.bf16.mxu0 0
      %2395 = vmatpush1.bf16.msra.mxu0 0
      %2396 = vmatprep.subr.bf16.mxu0 0
      %2397 = vmatpush1.bf16.msra.mxu0 0
      %2398 = vmatprep.subr.bf16.mxu0 0
      %2399 = vmatpush1.bf16.msra.mxu0 0
      %2400 = vmatprep.subr.bf16.mxu0 0
      %2401 = vmatpush1.bf16.msra.mxu0 0
      %2402 = vmatprep.subr.bf16.mxu0 0
      %2403 = vmatpush1.bf16.msra.mxu0 0
      %2404 = vmatprep.subr.bf16.mxu0 0
      %2405 = vmatpush1.bf16.msra.mxu0 0
      %2406 = vmatprep.subr.bf16.mxu0 0
      %2407 = vmatpush1.bf16.msra.mxu0 0
      %2408 = vmatprep.subr.bf16.mxu0 0
      %2409 = vmatpush1.bf16.msra.mxu0 0
      %2410 = vmatprep.subr.bf16.mxu0 0
      %2411 = vmatpush1.bf16.msra.mxu0 0
      %2412 = vmatprep.subr.bf16.mxu0 0
      %2413 = vmatpush1.bf16.msra.mxu0 0
      %2414 = vmatprep.subr.bf16.mxu0 0
      %2415 = vmatpush1.bf16.msra.mxu0 0
      %2416 = vmatprep.subr.bf16.mxu0 0
      %2417 = vmatpush1.bf16.msra.mxu0 0
      %2418 = vmatprep.subr.bf16.mxu0 0
      %2419 = vmatpush1.bf16.msra.mxu0 0
      %2420 = vmatprep.subr.bf16.mxu0 0
      %2421 = vmatpush1.bf16.msra.mxu0 0
      %2422 = vmatprep.mubr.bf16.mxu0 0
      %2423 = vmatmul.mubr.bf16.gmra.mrb[0].mxu0 %v2388
      %v2424 = vpop.f32.mrb[0].mxu0
      %v2425 = vadd.f32 %v2373, %v2424
      %v2426 = vpop.f32.mrb[0].mxu0
      %v2427 = vpop.f32.mrb[0].mxu0
      %v2428 = vpop.f32.mrb[0].mxu0
      %2429 = vdwg.mxu0
      %s2430 = scalar_lea.vmem %s4, 64
      %v2431 = vld [vmem:[%s2430] sm:$0xf]
      %v2432 = vld [vmem:[%s2430 + $0x4] sm:$0xf]
      %v2433 = vld [vmem:[%s2430 + $0x8] sm:$0xf]
      %v2434 = vld [vmem:[%s2430 + $0xc] sm:$0xf]
      %s2435 = scalar_lea.vmem %s7, 4
      %v2436 = vld [vmem:[%s2435] sm:$0x1]
      %v2438 = vlaneseq
      %v2439 = vshrl.u32 %v2438, 7
      %v2440 = vsub.s32 0, %v2439
      %v2441 = vrot.slane %v2436, %v2440
      %v2447 = vunpack.c.l.b16 %v2431
      %v2448 = vunpack.c.l.b16 %v2432
      %v2449 = vunpack.c.l.b16 %v2433
      %v2450 = vunpack.c.l.b16 %v2434
      %v2451 = vpack.c.b16 %v2448, %v2447
      %v2452 = vpack.c.b16 %v2450, %v2449
      %2455 = vmatprep.subr.bf16.mxu0 0
      %2456 = vmatpush1.bf16.msra.mxu0 %v2451
      %2457 = vmatprep.subr.bf16.mxu0 0
      %2458 = vmatpush1.bf16.msra.mxu0 %v2452
      %2459 = vmatprep.subr.bf16.mxu0 0
      %2460 = vmatpush1.bf16.msra.mxu0 0
      %2461 = vmatprep.subr.bf16.mxu0 0
      %2462 = vmatpush1.bf16.msra.mxu0 0
      %2463 = vmatprep.subr.bf16.mxu0 0
      %2464 = vmatpush1.bf16.msra.mxu0 0
      %2465 = vmatprep.subr.bf16.mxu0 0
      %2466 = vmatpush1.bf16.msra.mxu0 0
      %2467 = vmatprep.subr.bf16.mxu0 0
      %2468 = vmatpush1.bf16.msra.mxu0 0
      %2469 = vmatprep.subr.bf16.mxu0 0
      %2470 = vmatpush1.bf16.msra.mxu0 0
      %2471 = vmatprep.subr.bf16.mxu0 0
      %2472 = vmatpush1.bf16.msra.mxu0 0
      %2473 = vmatprep.subr.bf16.mxu0 0
      %2474 = vmatpush1.bf16.msra.mxu0 0
      %2475 = vmatprep.subr.bf16.mxu0 0
      %2476 = vmatpush1.bf16.msra.mxu0 0
      %2477 = vmatprep.subr.bf16.mxu0 0
      %2478 = vmatpush1.bf16.msra.mxu0 0
      %2479 = vmatprep.subr.bf16.mxu0 0
      %2480 = vmatpush1.bf16.msra.mxu0 0
      %2481 = vmatprep.subr.bf16.mxu0 0
      %2482 = vmatpush1.bf16.msra.mxu0 0
      %2483 = vmatprep.subr.bf16.mxu0 0
      %2484 = vmatpush1.bf16.msra.mxu0 0
      %2485 = vmatprep.subr.bf16.mxu0 0
      %2486 = vmatpush1.bf16.msra.mxu0 0
      %2487 = vmatprep.mubr.bf16.mxu0 0
      %2488 = vmatmul.mubr.bf16.gmra.mrb[0].mxu0 %v2388
      %v2489 = vpop.f32.mrb[0].mxu0
      %v2490 = vadd.f32 %v2441, %v2489
      %v2491 = vpop.f32.mrb[0].mxu0
      %v2492 = vpop.f32.mrb[0].mxu0
      %v2493 = vpop.f32.mrb[0].mxu0
      %2494 = vdwg.mxu0
      %s2495 = scalar_lea.vmem %s5, 64
      %v2496 = vld [vmem:[%s2495] sm:$0xf]
      %v2497 = vld [vmem:[%s2495 + $0x4] sm:$0xf]
      %v2498 = vld [vmem:[%s2495 + $0x8] sm:$0xf]
      %v2499 = vld [vmem:[%s2495 + $0xc] sm:$0xf]
      %s2500 = scalar_lea.vmem %s8, 4
      %v2501 = vld [vmem:[%s2500] sm:$0x1]
      %v2503 = vlaneseq
      %v2504 = vshrl.u32 %v2503, 7
      %v2505 = vsub.s32 0, %v2504
      %v2506 = vrot.slane %v2501, %v2505
      %v2512 = vunpack.c.l.b16 %v2496
      %v2513 = vunpack.c.l.b16 %v2497
      %v2514 = vunpack.c.l.b16 %v2498
      %v2515 = vunpack.c.l.b16 %v2499
      %v2516 = vpack.c.b16 %v2513, %v2512
      %v2517 = vpack.c.b16 %v2515, %v2514
      %2520 = vmatprep.subr.bf16.mxu0 0
      %2521 = vmatpush1.bf16.msra.mxu0 %v2516
      %2522 = vmatprep.subr.bf16.mxu0 0
      %2523 = vmatpush1.bf16.msra.mxu0 %v2517
      %2524 = vmatprep.subr.bf16.mxu0 0
      %2525 = vmatpush1.bf16.msra.mxu0 0
      %2526 = vmatprep.subr.bf16.mxu0 0
      %2527 = vmatpush1.bf16.msra.mxu0 0
      %2528 = vmatprep.subr.bf16.mxu0 0
      %2529 = vmatpush1.bf16.msra.mxu0 0
      %2530 = vmatprep.subr.bf16.mxu0 0
      %2531 = vmatpush1.bf16.msra.mxu0 0
      %2532 = vmatprep.subr.bf16.mxu0 0
      %2533 = vmatpush1.bf16.msra.mxu0 0
      %2534 = vmatprep.subr.bf16.mxu0 0
      %2535 = vmatpush1.bf16.msra.mxu0 0
      %2536 = vmatprep.subr.bf16.mxu0 0
      %2537 = vmatpush1.bf16.msra.mxu0 0
      %2538 = vmatprep.subr.bf16.mxu0 0
      %2539 = vmatpush1.bf16.msra.mxu0 0
      %2540 = vmatprep.subr.bf16.mxu0 0
      %2541 = vmatpush1.bf16.msra.mxu0 0
      %2542 = vmatprep.subr.bf16.mxu0 0
      %2543 = vmatpush1.bf16.msra.mxu0 0
      %2544 = vmatprep.subr.bf16.mxu0 0
      %2545 = vmatpush1.bf16.msra.mxu0 0
      %2546 = vmatprep.subr.bf16.mxu0 0
      %2547 = vmatpush1.bf16.msra.mxu0 0
      %2548 = vmatprep.subr.bf16.mxu0 0
      %2549 = vmatpush1.bf16.msra.mxu0 0
      %2550 = vmatprep.subr.bf16.mxu0 0
      %2551 = vmatpush1.bf16.msra.mxu0 0
      %2552 = vmatprep.mubr.bf16.mxu0 0
      %2553 = vmatmul.mubr.bf16.gmra.mrb[0].mxu0 %v2388
      %v2554 = vpop.f32.mrb[0].mxu0
      %v2555 = vadd.f32 %v2506, %v2554
      %v2556 = vpop.f32.mrb[0].mxu0
      %v2557 = vpop.f32.mrb[0].mxu0
      %v2558 = vpop.f32.mrb[0].mxu0
      %2559 = vdwg.mxu0
      %v2560 = vpack.c.bf16 %v2425, %v2425
      %v2561 = vpack.c.bf16 %v2490, %v2490
      %v2563 = vsel %vm916, %v2560, 0
      %v2566 = vsel %vm916, %v2561, 0
      %2568 = vmatprep.subr.bf16.mxu0 0
      %2569 = vmatpush1.bf16.xpose.msra.mxu0 %v2566
      %2570 = vmatprep.subr.bf16.mxu0 0
      %2571 = vmatpush1.bf16.xpose.msra.mxu0 0
      %2572 = vmatprep.subr.bf16.mxu0 0
      %2573 = vmatpush1.bf16.xpose.msra.mxu0 0
      %2574 = vmatprep.subr.bf16.mxu0 0
      %2575 = vmatpush1.bf16.xpose.msra.mxu0 0
      %2576 = vmatprep.subr.bf16.mxu0 0
      %2577 = vmatpush1.bf16.xpose.msra.mxu0 0
      %2578 = vmatprep.subr.bf16.mxu0 0
      %2579 = vmatpush1.bf16.xpose.msra.mxu0 0
      %2580 = vmatprep.subr.bf16.mxu0 0
      %2581 = vmatpush1.bf16.xpose.msra.mxu0 0
      %2582 = vmatprep.subr.bf16.mxu0 0
      %2583 = vmatpush1.bf16.xpose.msra.mxu0 0
      %2584 = vmatprep.subr.bf16.mxu0 0
      %2585 = vmatpush1.bf16.xpose.msra.mxu0 0
      %2586 = vmatprep.subr.bf16.mxu0 0
      %2587 = vmatpush1.bf16.xpose.msra.mxu0 0
      %2588 = vmatprep.subr.bf16.mxu0 0
      %2589 = vmatpush1.bf16.xpose.msra.mxu0 0
      %2590 = vmatprep.subr.bf16.mxu0 0
      %2591 = vmatpush1.bf16.xpose.msra.mxu0 0
      %2592 = vmatprep.subr.bf16.mxu0 0
      %2593 = vmatpush1.bf16.xpose.msra.mxu0 0
      %2594 = vmatprep.subr.bf16.mxu0 0
      %2595 = vmatpush1.bf16.xpose.msra.mxu0 0
      %2596 = vmatprep.subr.bf16.mxu0 0
      %2597 = vmatpush1.bf16.xpose.msra.mxu0 0
      %2598 = vmatprep.subr.bf16.mxu0 0
      %2599 = vmatpush1.bf16.xpose.msra.mxu0 0
      %2600 = vmatprep.mubr.bf16.mxu0 0
      %2601 = vmatmul.mubr.bf16.gmra.mrb[0].mxu0 %v2563
      %v2602 = vpop.f32.mrb[0].mxu0
      %v2603 = vadd.f32 0.0, %v2602
      %v2604 = vpop.f32.mrb[0].mxu0
      %v2605 = vpop.f32.mrb[0].mxu0
      %v2606 = vpop.f32.mrb[0].mxu0
      %2607 = vdwg.mxu0
      %v2608 = vmul.f32 %v2603, 0.35355338
      %v2609 = vsel %vm964, %v2608, -inf
      %2610 = vmax.xlane.f32.xlu0 %v2609
      %v2611 = vpop.xlane.xlu0 %2610
      %v2612 = vsub.f32 %v2608, %v2611
      %v2613 = vmul.f32 %v2612, 1.442695
      %v2614 = vpow.pop %v2613
      %v2615 = vsel %vm964, %v2614, 0.0
      %2616 = vadd.xlane.f32.xlu0 %v2615
      %v2617 = vpop.xlane.xlu0 %2616
      %v2618 = vpack.c.bf16 %v2614, %v2614
      %v2619 = vpack.c.bf16 %v2555, %v2555
      %v2621 = vsel %vm976, %v2618, 0
      %v2624 = vsel %vm980, %v2619, 0
      %2626 = vmatprep.subr.bf16.mxu0 0
      %2627 = vmatpush1.bf16.msra.mxu0 %v2624
      %2628 = vmatprep.subr.bf16.mxu0 0
      %2629 = vmatpush1.bf16.msra.mxu0 0
      %2630 = vmatprep.subr.bf16.mxu0 0
      %2631 = vmatpush1.bf16.msra.mxu0 0
      %2632 = vmatprep.subr.bf16.mxu0 0
      %2633 = vmatpush1.bf16.msra.mxu0 0
      %2634 = vmatprep.subr.bf16.mxu0 0
      %2635 = vmatpush1.bf16.msra.mxu0 0
      %2636 = vmatprep.subr.bf16.mxu0 0
      %2637 = vmatpush1.bf16.msra.mxu0 0
      %2638 = vmatprep.subr.bf16.mxu0 0
      %2639 = vmatpush1.bf16.msra.mxu0 0
      %2640 = vmatprep.subr.bf16.mxu0 0
      %2641 = vmatpush1.bf16.msra.mxu0 0
      %2642 = vmatprep.subr.bf16.mxu0 0
      %2643 = vmatpush1.bf16.msra.mxu0 0
      %2644 = vmatprep.subr.bf16.mxu0 0
      %2645 = vmatpush1.bf16.msra.mxu0 0
      %2646 = vmatprep.subr.bf16.mxu0 0
      %2647 = vmatpush1.bf16.msra.mxu0 0
      %2648 = vmatprep.subr.bf16.mxu0 0
      %2649 = vmatpush1.bf16.msra.mxu0 0
      %2650 = vmatprep.subr.bf16.mxu0 0
      %2651 = vmatpush1.bf16.msra.mxu0 0
      %2652 = vmatprep.subr.bf16.mxu0 0
      %2653 = vmatpush1.bf16.msra.mxu0 0
      %2654 = vmatprep.subr.bf16.mxu0 0
      %2655 = vmatpush1.bf16.msra.mxu0 0
      %2656 = vmatprep.subr.bf16.mxu0 0
      %2657 = vmatpush1.bf16.msra.mxu0 0
      %2658 = vmatprep.mubr.bf16.mxu0 0
      %2659 = vmatmul.mubr.bf16.gmra.mrb[0].mxu0 %v2621
      %v2660 = vpop.f32.mrb[0].mxu0
      %v2661 = vadd.f32 0.0, %v2660
      %v2662 = vpop.f32.mrb[0].mxu0
      %v2663 = vpop.f32.mrb[0].mxu0
      %v2664 = vpop.f32.mrb[0].mxu0
      %2665 = vdwg.mxu0
      %v2666 = vrcp.pop %v2617
      %v2667 = vmul.f32 %v2661, %v2666
      %v2668 = vpack.c.bf16 %v2667, %v2667
      %s2669 = scalar_lea.vmem %s9, 16
      %v2670 = vld [vmem:[%s2669] sm:$0xf]
      %s2671 = scalar_lea.vmem %s3, 80
      %v2672 = vld [vmem:[%s2671] sm:$0xf]
      %v2673 = vld [vmem:[%s2671 + $0x4] sm:$0xf]
      %v2674 = vld [vmem:[%s2671 + $0x8] sm:$0xf]
      %v2675 = vld [vmem:[%s2671 + $0xc] sm:$0xf]
      %s2676 = scalar_lea.vmem %s6, 5
      %v2677 = vld [vmem:[%s2676] sm:$0x1]
      %v2679 = vlaneseq
      %v2680 = vshrl.u32 %v2679, 7
      %v2681 = vsub.s32 0, %v2680
      %v2682 = vrot.slane %v2677, %v2681
      %v2688 = vunpack.c.l.b16 %v2672
      %v2689 = vunpack.c.l.b16 %v2673
      %v2690 = vunpack.c.l.b16 %v2674
      %v2691 = vunpack.c.l.b16 %v2675
      %v2692 = vpack.c.b16 %v2689, %v2688
      %v2693 = vpack.c.b16 %v2691, %v2690
      %2696 = vmatprep.subr.bf16.mxu0 0
      %2697 = vmatpush1.bf16.msra.mxu0 %v2692
      %2698 = vmatprep.subr.bf16.mxu0 0
      %2699 = vmatpush1.bf16.msra.mxu0 %v2693
      %2700 = vmatprep.subr.bf16.mxu0 0
      %2701 = vmatpush1.bf16.msra.mxu0 0
      %2702 = vmatprep.subr.bf16.mxu0 0
      %2703 = vmatpush1.bf16.msra.mxu0 0
      %2704 = vmatprep.subr.bf16.mxu0 0
      %2705 = vmatpush1.bf16.msra.mxu0 0
      %2706 = vmatprep.subr.bf16.mxu0 0
      %2707 = vmatpush1.bf16.msra.mxu0 0
      %2708 = vmatprep.subr.bf16.mxu0 0
      %2709 = vmatpush1.bf16.msra.mxu0 0
      %2710 = vmatprep.subr.bf16.mxu0 0
      %2711 = vmatpush1.bf16.msra.mxu0 0
      %2712 = vmatprep.subr.bf16.mxu0 0
      %2713 = vmatpush1.bf16.msra.mxu0 0
      %2714 = vmatprep.subr.bf16.mxu0 0
      %2715 = vmatpush1.bf16.msra.mxu0 0
      %2716 = vmatprep.subr.bf16.mxu0 0
      %2717 = vmatpush1.bf16.msra.mxu0 0
      %2718 = vmatprep.subr.bf16.mxu0 0
      %2719 = vmatpush1.bf16.msra.mxu0 0
      %2720 = vmatprep.subr.bf16.mxu0 0
      %2721 = vmatpush1.bf16.msra.mxu0 0
      %2722 = vmatprep.subr.bf16.mxu0 0
      %2723 = vmatpush1.bf16.msra.mxu0 0
      %2724 = vmatprep.subr.bf16.mxu0 0
      %2725 = vmatpush1.bf16.msra.mxu0 0
      %2726 = vmatprep.subr.bf16.mxu0 0
      %2727 = vmatpush1.bf16.msra.mxu0 0
      %2728 = vmatprep.mubr.bf16.mxu0 0
      %2729 = vmatmul.mubr.bf16.gmra.mrb[0].mxu0 %v2388
      %v2730 = vpop.f32.mrb[0].mxu0
      %v2731 = vadd.f32 %v2682, %v2730
      %v2732 = vpop.f32.mrb[0].mxu0
      %v2733 = vpop.f32.mrb[0].mxu0
      %v2734 = vpop.f32.mrb[0].mxu0
      %2735 = vdwg.mxu0
      %s2736 = scalar_lea.vmem %s4, 80
      %v2737 = vld [vmem:[%s2736] sm:$0xf]
      %v2738 = vld [vmem:[%s2736 + $0x4] sm:$0xf]
      %v2739 = vld [vmem:[%s2736 + $0x8] sm:$0xf]
      %v2740 = vld [vmem:[%s2736 + $0xc] sm:$0xf]
      %s2741 = scalar_lea.vmem %s7, 5
      %v2742 = vld [vmem:[%s2741] sm:$0x1]
      %v2744 = vlaneseq
      %v2745 = vshrl.u32 %v2744, 7
      %v2746 = vsub.s32 0, %v2745
      %v2747 = vrot.slane %v2742, %v2746
      %v2753 = vunpack.c.l.b16 %v2737
      %v2754 = vunpack.c.l.b16 %v2738
      %v2755 = vunpack.c.l.b16 %v2739
      %v2756 = vunpack.c.l.b16 %v2740
      %v2757 = vpack.c.b16 %v2754, %v2753
      %v2758 = vpack.c.b16 %v2756, %v2755
      %2761 = vmatprep.subr.bf16.mxu0 0
      %2762 = vmatpush1.bf16.msra.mxu0 %v2757
      %2763 = vmatprep.subr.bf16.mxu0 0
      %2764 = vmatpush1.bf16.msra.mxu0 %v2758
      %2765 = vmatprep.subr.bf16.mxu0 0
      %2766 = vmatpush1.bf16.msra.mxu0 0
      %2767 = vmatprep.subr.bf16.mxu0 0
      %2768 = vmatpush1.bf16.msra.mxu0 0
      %2769 = vmatprep.subr.bf16.mxu0 0
      %2770 = vmatpush1.bf16.msra.mxu0 0
      %2771 = vmatprep.subr.bf16.mxu0 0
      %2772 = vmatpush1.bf16.msra.mxu0 0
      %2773 = vmatprep.subr.bf16.mxu0 0
      %2774 = vmatpush1.bf16.msra.mxu0 0
      %2775 = vmatprep.subr.bf16.mxu0 0
      %2776 = vmatpush1.bf16.msra.mxu0 0
      %2777 = vmatprep.subr.bf16.mxu0 0
      %2778 = vmatpush1.bf16.msra.mxu0 0
      %2779 = vmatprep.subr.bf16.mxu0 0
      %2780 = vmatpush1.bf16.msra.mxu0 0
      %2781 = vmatprep.subr.bf16.mxu0 0
      %2782 = vmatpush1.bf16.msra.mxu0 0
      %2783 = vmatprep.subr.bf16.mxu0 0
      %2784 = vmatpush1.bf16.msra.mxu0 0
      %2785 = vmatprep.subr.bf16.mxu0 0
      %2786 = vmatpush1.bf16.msra.mxu0 0
      %2787 = vmatprep.subr.bf16.mxu0 0
      %2788 = vmatpush1.bf16.msra.mxu0 0
      %2789 = vmatprep.subr.bf16.mxu0 0
      %2790 = vmatpush1.bf16.msra.mxu0 0
      %2791 = vmatprep.subr.bf16.mxu0 0
      %2792 = vmatpush1.bf16.msra.mxu0 0
      %2793 = vmatprep.mubr.bf16.mxu0 0
      %2794 = vmatmul.mubr.bf16.gmra.mrb[0].mxu0 %v2388
      %v2795 = vpop.f32.mrb[0].mxu0
      %v2796 = vadd.f32 %v2747, %v2795
      %v2797 = vpop.f32.mrb[0].mxu0
      %v2798 = vpop.f32.mrb[0].mxu0
      %v2799 = vpop.f32.mrb[0].mxu0
      %2800 = vdwg.mxu0
      %s2801 = scalar_lea.vmem %s5, 80
      %v2802 = vld [vmem:[%s2801] sm:$0xf]
      %v2803 = vld [vmem:[%s2801 + $0x4] sm:$0xf]
      %v2804 = vld [vmem:[%s2801 + $0x8] sm:$0xf]
      %v2805 = vld [vmem:[%s2801 + $0xc] sm:$0xf]
      %s2806 = scalar_lea.vmem %s8, 5
      %v2807 = vld [vmem:[%s2806] sm:$0x1]
      %v2809 = vlaneseq
      %v2810 = vshrl.u32 %v2809, 7
      %v2811 = vsub.s32 0, %v2810
      %v2812 = vrot.slane %v2807, %v2811
      %v2818 = vunpack.c.l.b16 %v2802
      %v2819 = vunpack.c.l.b16 %v2803
      %v2820 = vunpack.c.l.b16 %v2804
      %v2821 = vunpack.c.l.b16 %v2805
      %v2822 = vpack.c.b16 %v2819, %v2818
      %v2823 = vpack.c.b16 %v2821, %v2820
      %2826 = vmatprep.subr.bf16.mxu0 0
      %2827 = vmatpush1.bf16.msra.mxu0 %v2822
      %2828 = vmatprep.subr.bf16.mxu0 0
      %2829 = vmatpush1.bf16.msra.mxu0 %v2823
      %2830 = vmatprep.subr.bf16.mxu0 0
      %2831 = vmatpush1.bf16.msra.mxu0 0
      %2832 = vmatprep.subr.bf16.mxu0 0
      %2833 = vmatpush1.bf16.msra.mxu0 0
      %2834 = vmatprep.subr.bf16.mxu0 0
      %2835 = vmatpush1.bf16.msra.mxu0 0
      %2836 = vmatprep.subr.bf16.mxu0 0
      %2837 = vmatpush1.bf16.msra.mxu0 0
      %2838 = vmatprep.subr.bf16.mxu0 0
      %2839 = vmatpush1.bf16.msra.mxu0 0
      %2840 = vmatprep.subr.bf16.mxu0 0
      %2841 = vmatpush1.bf16.msra.mxu0 0
      %2842 = vmatprep.subr.bf16.mxu0 0
      %2843 = vmatpush1.bf16.msra.mxu0 0
      %2844 = vmatprep.subr.bf16.mxu0 0
      %2845 = vmatpush1.bf16.msra.mxu0 0
      %2846 = vmatprep.subr.bf16.mxu0 0
      %2847 = vmatpush1.bf16.msra.mxu0 0
      %2848 = vmatprep.subr.bf16.mxu0 0
      %2849 = vmatpush1.bf16.msra.mxu0 0
      %2850 = vmatprep.subr.bf16.mxu0 0
      %2851 = vmatpush1.bf16.msra.mxu0 0
      %2852 = vmatprep.subr.bf16.mxu0 0
      %2853 = vmatpush1.bf16.msra.mxu0 0
      %2854 = vmatprep.subr.bf16.mxu0 0
      %2855 = vmatpush1.bf16.msra.mxu0 0
      %2856 = vmatprep.subr.bf16.mxu0 0
      %2857 = vmatpush1.bf16.msra.mxu0 0
      %2858 = vmatprep.mubr.bf16.mxu0 0
      %2859 = vmatmul.mubr.bf16.gmra.mrb[0].mxu0 %v2388
      %v2860 = vpop.f32.mrb[0].mxu0
      %v2861 = vadd.f32 %v2812, %v2860
      %v2862 = vpop.f32.mrb[0].mxu0
      %v2863 = vpop.f32.mrb[0].mxu0
      %v2864 = vpop.f32.mrb[0].mxu0
      %2865 = vdwg.mxu0
      %v2866 = vpack.c.bf16 %v2731, %v2731
      %v2867 = vpack.c.bf16 %v2796, %v2796
      %v2869 = vsel %vm916, %v2866, 0
      %v2872 = vsel %vm916, %v2867, 0
      %2874 = vmatprep.subr.bf16.mxu0 0
      %2875 = vmatpush1.bf16.xpose.msra.mxu0 %v2872
      %2876 = vmatprep.subr.bf16.mxu0 0
      %2877 = vmatpush1.bf16.xpose.msra.mxu0 0
      %2878 = vmatprep.subr.bf16.mxu0 0
      %2879 = vmatpush1.bf16.xpose.msra.mxu0 0
      %2880 = vmatprep.subr.bf16.mxu0 0
      %2881 = vmatpush1.bf16.xpose.msra.mxu0 0
      %2882 = vmatprep.subr.bf16.mxu0 0
      %2883 = vmatpush1.bf16.xpose.msra.mxu0 0
      %2884 = vmatprep.subr.bf16.mxu0 0
      %2885 = vmatpush1.bf16.xpose.msra.mxu0 0
      %2886 = vmatprep.subr.bf16.mxu0 0
      %2887 = vmatpush1.bf16.xpose.msra.mxu0 0
      %2888 = vmatprep.subr.bf16.mxu0 0
      %2889 = vmatpush1.bf16.xpose.msra.mxu0 0
      %2890 = vmatprep.subr.bf16.mxu0 0
      %2891 = vmatpush1.bf16.xpose.msra.mxu0 0
      %2892 = vmatprep.subr.bf16.mxu0 0
      %2893 = vmatpush1.bf16.xpose.msra.mxu0 0
      %2894 = vmatprep.subr.bf16.mxu0 0
      %2895 = vmatpush1.bf16.xpose.msra.mxu0 0
      %2896 = vmatprep.subr.bf16.mxu0 0
      %2897 = vmatpush1.bf16.xpose.msra.mxu0 0
      %2898 = vmatprep.subr.bf16.mxu0 0
      %2899 = vmatpush1.bf16.xpose.msra.mxu0 0
      %2900 = vmatprep.subr.bf16.mxu0 0
      %2901 = vmatpush1.bf16.xpose.msra.mxu0 0
      %2902 = vmatprep.subr.bf16.mxu0 0
      %2903 = vmatpush1.bf16.xpose.msra.mxu0 0
      %2904 = vmatprep.subr.bf16.mxu0 0
      %2905 = vmatpush1.bf16.xpose.msra.mxu0 0
      %2906 = vmatprep.mubr.bf16.mxu0 0
      %2907 = vmatmul.mubr.bf16.gmra.mrb[0].mxu0 %v2869
      %v2908 = vpop.f32.mrb[0].mxu0
      %v2909 = vadd.f32 0.0, %v2908
      %v2910 = vpop.f32.mrb[0].mxu0
      %v2911 = vpop.f32.mrb[0].mxu0
      %v2912 = vpop.f32.mrb[0].mxu0
      %2913 = vdwg.mxu0
      %v2914 = vmul.f32 %v2909, 0.35355338
      %v2915 = vsel %vm964, %v2914, -inf
      %2916 = vmax.xlane.f32.xlu0 %v2915
      %v2917 = vpop.xlane.xlu0 %2916
      %v2918 = vsub.f32 %v2914, %v2917
      %v2919 = vmul.f32 %v2918, 1.442695
      %v2920 = vpow.pop %v2919
      %v2921 = vsel %vm964, %v2920, 0.0
      %2922 = vadd.xlane.f32.xlu0 %v2921
      %v2923 = vpop.xlane.xlu0 %2922
      %v2924 = vpack.c.bf16 %v2920, %v2920
      %v2925 = vpack.c.bf16 %v2861, %v2861
      %v2927 = vsel %vm976, %v2924, 0
      %v2930 = vsel %vm980, %v2925, 0
      %2932 = vmatprep.subr.bf16.mxu0 0
      %2933 = vmatpush1.bf16.msra.mxu0 %v2930
      %2934 = vmatprep.subr.bf16.mxu0 0
      %2935 = vmatpush1.bf16.msra.mxu0 0
      %2936 = vmatprep.subr.bf16.mxu0 0
      %2937 = vmatpush1.bf16.msra.mxu0 0
      %2938 = vmatprep.subr.bf16.mxu0 0
      %2939 = vmatpush1.bf16.msra.mxu0 0
      %2940 = vmatprep.subr.bf16.mxu0 0
      %2941 = vmatpush1.bf16.msra.mxu0 0
      %2942 = vmatprep.subr.bf16.mxu0 0
      %2943 = vmatpush1.bf16.msra.mxu0 0
      %2944 = vmatprep.subr.bf16.mxu0 0
      %2945 = vmatpush1.bf16.msra.mxu0 0
      %2946 = vmatprep.subr.bf16.mxu0 0
      %2947 = vmatpush1.bf16.msra.mxu0 0
      %2948 = vmatprep.subr.bf16.mxu0 0
      %2949 = vmatpush1.bf16.msra.mxu0 0
      %2950 = vmatprep.subr.bf16.mxu0 0
      %2951 = vmatpush1.bf16.msra.mxu0 0
      %2952 = vmatprep.subr.bf16.mxu0 0
      %2953 = vmatpush1.bf16.msra.mxu0 0
      %2954 = vmatprep.subr.bf16.mxu0 0
      %2955 = vmatpush1.bf16.msra.mxu0 0
      %2956 = vmatprep.subr.bf16.mxu0 0
      %2957 = vmatpush1.bf16.msra.mxu0 0
      %2958 = vmatprep.subr.bf16.mxu0 0
      %2959 = vmatpush1.bf16.msra.mxu0 0
      %2960 = vmatprep.subr.bf16.mxu0 0
      %2961 = vmatpush1.bf16.msra.mxu0 0
      %2962 = vmatprep.subr.bf16.mxu0 0
      %2963 = vmatpush1.bf16.msra.mxu0 0
      %2964 = vmatprep.mubr.bf16.mxu0 0
      %2965 = vmatmul.mubr.bf16.gmra.mrb[0].mxu0 %v2927
      %v2966 = vpop.f32.mrb[0].mxu0
      %v2967 = vadd.f32 0.0, %v2966
      %v2968 = vpop.f32.mrb[0].mxu0
      %v2969 = vpop.f32.mrb[0].mxu0
      %v2970 = vpop.f32.mrb[0].mxu0
      %2971 = vdwg.mxu0
      %v2972 = vrcp.pop %v2923
      %v2973 = vmul.f32 %v2967, %v2972
      %v2974 = vpack.c.bf16 %v2973, %v2973
      %s2975 = scalar_lea.vmem %s9, 20
      %v2976 = vld [vmem:[%s2975] sm:$0xf]
      %v2978 = vsel %vm916, %v2974, 0
      %v2981 = vsel %vm1337, %v2976, 0
      %2983 = vmatprep.subr.bf16.mxu0 0
      %2984 = vmatpush1.bf16.msra.mxu0 %v2981
      %2985 = vmatprep.subr.bf16.mxu0 0
      %2986 = vmatpush1.bf16.msra.mxu0 0
      %2987 = vmatprep.subr.bf16.mxu0 0
      %2988 = vmatpush1.bf16.msra.mxu0 0
      %2989 = vmatprep.subr.bf16.mxu0 0
      %2990 = vmatpush1.bf16.msra.mxu0 0
      %2991 = vmatprep.subr.bf16.mxu0 0
      %2992 = vmatpush1.bf16.msra.mxu0 0
      %2993 = vmatprep.subr.bf16.mxu0 0
      %2994 = vmatpush1.bf16.msra.mxu0 0
      %2995 = vmatprep.subr.bf16.mxu0 0
      %2996 = vmatpush1.bf16.msra.mxu0 0
      %2997 = vmatprep.subr.bf16.mxu0 0
      %2998 = vmatpush1.bf16.msra.mxu0 0
      %2999 = vmatprep.subr.bf16.mxu0 0
      %3000 = vmatpush1.bf16.msra.mxu0 0
      %3001 = vmatprep.subr.bf16.mxu0 0
      %3002 = vmatpush1.bf16.msra.mxu0 0
      %3003 = vmatprep.subr.bf16.mxu0 0
      %3004 = vmatpush1.bf16.msra.mxu0 0
      %3005 = vmatprep.subr.bf16.mxu0 0
      %3006 = vmatpush1.bf16.msra.mxu0 0
      %3007 = vmatprep.subr.bf16.mxu0 0
      %3008 = vmatpush1.bf16.msra.mxu0 0
      %3009 = vmatprep.subr.bf16.mxu0 0
      %3010 = vmatpush1.bf16.msra.mxu0 0
      %3011 = vmatprep.subr.bf16.mxu0 0
      %3012 = vmatpush1.bf16.msra.mxu0 0
      %3013 = vmatprep.subr.bf16.mxu0 0
      %3014 = vmatpush1.bf16.msra.mxu0 0
      %3015 = vmatprep.mubr.bf16.mxu0 0
      %3016 = vmatmul.mubr.bf16.gmra.mrb[0].mxu0 %v2978
      %v3017 = vpop.f32.mrb[0].mxu0
      %v3018 = vadd.f32 0.0, %v3017
      %v3019 = vpop.f32.mrb[0].mxu0
      %v3020 = vpop.f32.mrb[0].mxu0
      %v3021 = vpop.f32.mrb[0].mxu0
      %3022 = vdwg.mxu0
      %v3024 = vsel %vm916, %v2668, 0
      %v3027 = vsel %vm1337, %v2670, 0
      %3029 = vmatprep.subr.bf16.mxu0 0
      %3030 = vmatpush1.bf16.msra.mxu0 %v3027
      %3031 = vmatprep.subr.bf16.mxu0 0
      %3032 = vmatpush1.bf16.msra.mxu0 0
      %3033 = vmatprep.subr.bf16.mxu0 0
      %3034 = vmatpush1.bf16.msra.mxu0 0
      %3035 = vmatprep.subr.bf16.mxu0 0
      %3036 = vmatpush1.bf16.msra.mxu0 0
      %3037 = vmatprep.subr.bf16.mxu0 0
      %3038 = vmatpush1.bf16.msra.mxu0 0
      %3039 = vmatprep.subr.bf16.mxu0 0
      %3040 = vmatpush1.bf16.msra.mxu0 0
      %3041 = vmatprep.subr.bf16.mxu0 0
      %3042 = vmatpush1.bf16.msra.mxu0 0
      %3043 = vmatprep.subr.bf16.mxu0 0
      %3044 = vmatpush1.bf16.msra.mxu0 0
      %3045 = vmatprep.subr.bf16.mxu0 0
      %3046 = vmatpush1.bf16.msra.mxu0 0
      %3047 = vmatprep.subr.bf16.mxu0 0
      %3048 = vmatpush1.bf16.msra.mxu0 0
      %3049 = vmatprep.subr.bf16.mxu0 0
      %3050 = vmatpush1.bf16.msra.mxu0 0
      %3051 = vmatprep.subr.bf16.mxu0 0
      %3052 = vmatpush1.bf16.msra.mxu0 0
      %3053 = vmatprep.subr.bf16.mxu0 0
      %3054 = vmatpush1.bf16.msra.mxu0 0
      %3055 = vmatprep.subr.bf16.mxu0 0
      %3056 = vmatpush1.bf16.msra.mxu0 0
      %3057 = vmatprep.subr.bf16.mxu0 0
      %3058 = vmatpush1.bf16.msra.mxu0 0
      %3059 = vmatprep.subr.bf16.mxu0 0
      %3060 = vmatpush1.bf16.msra.mxu0 0
      %3061 = vmatprep.mubr.bf16.mxu0 0
      %3062 = vmatmul.mubr.bf16.gmra.mrb[0].mxu0 %v3024
      %v3063 = vpop.f32.mrb[0].mxu0
      %v3064 = vadd.f32 %v3018, %v3063
      %v3065 = vpop.f32.mrb[0].mxu0
      %v3066 = vpop.f32.mrb[0].mxu0
      %v3067 = vpop.f32.mrb[0].mxu0
      %3068 = vdwg.mxu0
      %s3069 = scalar_lea.vmem %s3, 96
      %v3070 = vld [vmem:[%s3069] sm:$0xf]
      %v3071 = vld [vmem:[%s3069 + $0x4] sm:$0xf]
      %v3072 = vld [vmem:[%s3069 + $0x8] sm:$0xf]
      %v3073 = vld [vmem:[%s3069 + $0xc] sm:$0xf]
      %s3074 = scalar_lea.vmem %s6, 6
      %v3075 = vld [vmem:[%s3074] sm:$0x1]
      %v3077 = vlaneseq
      %v3078 = vshrl.u32 %v3077, 7
      %v3079 = vsub.s32 0, %v3078
      %v3080 = vrot.slane %v3075, %v3079
      %v3086 = vunpack.c.l.b16 %v3070
      %v3087 = vunpack.c.l.b16 %v3071
      %v3088 = vunpack.c.l.b16 %v3072
      %v3089 = vunpack.c.l.b16 %v3073
      %v3090 = vpack.c.b16 %v3087, %v3086
      %v3091 = vpack.c.b16 %v3089, %v3088
      %3094 = vmatprep.subr.bf16.mxu0 0
      %3095 = vmatpush1.bf16.msra.mxu0 %v3090
      %3096 = vmatprep.subr.bf16.mxu0 0
      %3097 = vmatpush1.bf16.msra.mxu0 %v3091
      %3098 = vmatprep.subr.bf16.mxu0 0
      %3099 = vmatpush1.bf16.msra.mxu0 0
      %3100 = vmatprep.subr.bf16.mxu0 0
      %3101 = vmatpush1.bf16.msra.mxu0 0
      %3102 = vmatprep.subr.bf16.mxu0 0
      %3103 = vmatpush1.bf16.msra.mxu0 0
      %3104 = vmatprep.subr.bf16.mxu0 0
      %3105 = vmatpush1.bf16.msra.mxu0 0
      %3106 = vmatprep.subr.bf16.mxu0 0
      %3107 = vmatpush1.bf16.msra.mxu0 0
      %3108 = vmatprep.subr.bf16.mxu0 0
      %3109 = vmatpush1.bf16.msra.mxu0 0
      %3110 = vmatprep.subr.bf16.mxu0 0
      %3111 = vmatpush1.bf16.msra.mxu0 0
      %3112 = vmatprep.subr.bf16.mxu0 0
      %3113 = vmatpush1.bf16.msra.mxu0 0
      %3114 = vmatprep.subr.bf16.mxu0 0
      %3115 = vmatpush1.bf16.msra.mxu0 0
      %3116 = vmatprep.subr.bf16.mxu0 0
      %3117 = vmatpush1.bf16.msra.mxu0 0
      %3118 = vmatprep.subr.bf16.mxu0 0
      %3119 = vmatpush1.bf16.msra.mxu0 0
      %3120 = vmatprep.subr.bf16.mxu0 0
      %3121 = vmatpush1.bf16.msra.mxu0 0
      %3122 = vmatprep.subr.bf16.mxu0 0
      %3123 = vmatpush1.bf16.msra.mxu0 0
      %3124 = vmatprep.subr.bf16.mxu0 0
      %3125 = vmatpush1.bf16.msra.mxu0 0
      %3126 = vmatprep.mubr.bf16.mxu0 0
      %3127 = vmatmul.mubr.bf16.gmra.mrb[0].mxu0 %v2388
      %v3128 = vpop.f32.mrb[0].mxu0
      %v3129 = vadd.f32 %v3080, %v3128
      %v3130 = vpop.f32.mrb[0].mxu0
      %v3131 = vpop.f32.mrb[0].mxu0
      %v3132 = vpop.f32.mrb[0].mxu0
      %3133 = vdwg.mxu0
      %s3134 = scalar_lea.vmem %s4, 96
      %v3135 = vld [vmem:[%s3134] sm:$0xf]
      %v3136 = vld [vmem:[%s3134 + $0x4] sm:$0xf]
      %v3137 = vld [vmem:[%s3134 + $0x8] sm:$0xf]
      %v3138 = vld [vmem:[%s3134 + $0xc] sm:$0xf]
      %s3139 = scalar_lea.vmem %s7, 6
      %v3140 = vld [vmem:[%s3139] sm:$0x1]
      %v3142 = vlaneseq
      %v3143 = vshrl.u32 %v3142, 7
      %v3144 = vsub.s32 0, %v3143
      %v3145 = vrot.slane %v3140, %v3144
      %v3151 = vunpack.c.l.b16 %v3135
      %v3152 = vunpack.c.l.b16 %v3136
      %v3153 = vunpack.c.l.b16 %v3137
      %v3154 = vunpack.c.l.b16 %v3138
      %v3155 = vpack.c.b16 %v3152, %v3151
      %v3156 = vpack.c.b16 %v3154, %v3153
      %3159 = vmatprep.subr.bf16.mxu0 0
      %3160 = vmatpush1.bf16.msra.mxu0 %v3155
      %3161 = vmatprep.subr.bf16.mxu0 0
      %3162 = vmatpush1.bf16.msra.mxu0 %v3156
      %3163 = vmatprep.subr.bf16.mxu0 0
      %3164 = vmatpush1.bf16.msra.mxu0 0
      %3165 = vmatprep.subr.bf16.mxu0 0
      %3166 = vmatpush1.bf16.msra.mxu0 0
      %3167 = vmatprep.subr.bf16.mxu0 0
      %3168 = vmatpush1.bf16.msra.mxu0 0
      %3169 = vmatprep.subr.bf16.mxu0 0
      %3170 = vmatpush1.bf16.msra.mxu0 0
      %3171 = vmatprep.subr.bf16.mxu0 0
      %3172 = vmatpush1.bf16.msra.mxu0 0
      %3173 = vmatprep.subr.bf16.mxu0 0
      %3174 = vmatpush1.bf16.msra.mxu0 0
      %3175 = vmatprep.subr.bf16.mxu0 0
      %3176 = vmatpush1.bf16.msra.mxu0 0
      %3177 = vmatprep.subr.bf16.mxu0 0
      %3178 = vmatpush1.bf16.msra.mxu0 0
      %3179 = vmatprep.subr.bf16.mxu0 0
      %3180 = vmatpush1.bf16.msra.mxu0 0
      %3181 = vmatprep.subr.bf16.mxu0 0
      %3182 = vmatpush1.bf16.msra.mxu0 0
      %3183 = vmatprep.subr.bf16.mxu0 0
      %3184 = vmatpush1.bf16.msra.mxu0 0
      %3185 = vmatprep.subr.bf16.mxu0 0
      %3186 = vmatpush1.bf16.msra.mxu0 0
      %3187 = vmatprep.subr.bf16.mxu0 0
      %3188 = vmatpush1.bf16.msra.mxu0 0
      %3189 = vmatprep.subr.bf16.mxu0 0
      %3190 = vmatpush1.bf16.msra.mxu0 0
      %3191 = vmatprep.mubr.bf16.mxu0 0
      %3192 = vmatmul.mubr.bf16.gmra.mrb[0].mxu0 %v2388
      %v3193 = vpop.f32.mrb[0].mxu0
      %v3194 = vadd.f32 %v3145, %v3193
      %v3195 = vpop.f32.mrb[0].mxu0
      %v3196 = vpop.f32.mrb[0].mxu0
      %v3197 = vpop.f32.mrb[0].mxu0
      %3198 = vdwg.mxu0
      %s3199 = scalar_lea.vmem %s5, 96
      %v3200 = vld [vmem:[%s3199] sm:$0xf]
      %v3201 = vld [vmem:[%s3199 + $0x4] sm:$0xf]
      %v3202 = vld [vmem:[%s3199 + $0x8] sm:$0xf]
      %v3203 = vld [vmem:[%s3199 + $0xc] sm:$0xf]
      %s3204 = scalar_lea.vmem %s8, 6
      %v3205 = vld [vmem:[%s3204] sm:$0x1]
      %v3207 = vlaneseq
      %v3208 = vshrl.u32 %v3207, 7
      %v3209 = vsub.s32 0, %v3208
      %v3210 = vrot.slane %v3205, %v3209
      %v3216 = vunpack.c.l.b16 %v3200
      %v3217 = vunpack.c.l.b16 %v3201
      %v3218 = vunpack.c.l.b16 %v3202
      %v3219 = vunpack.c.l.b16 %v3203
      %v3220 = vpack.c.b16 %v3217, %v3216
      %v3221 = vpack.c.b16 %v3219, %v3218
      %3224 = vmatprep.subr.bf16.mxu0 0
      %3225 = vmatpush1.bf16.msra.mxu0 %v3220
      %3226 = vmatprep.subr.bf16.mxu0 0
      %3227 = vmatpush1.bf16.msra.mxu0 %v3221
      %3228 = vmatprep.subr.bf16.mxu0 0
      %3229 = vmatpush1.bf16.msra.mxu0 0
      %3230 = vmatprep.subr.bf16.mxu0 0
      %3231 = vmatpush1.bf16.msra.mxu0 0
      %3232 = vmatprep.subr.bf16.mxu0 0
      %3233 = vmatpush1.bf16.msra.mxu0 0
      %3234 = vmatprep.subr.bf16.mxu0 0
      %3235 = vmatpush1.bf16.msra.mxu0 0
      %3236 = vmatprep.subr.bf16.mxu0 0
      %3237 = vmatpush1.bf16.msra.mxu0 0
      %3238 = vmatprep.subr.bf16.mxu0 0
      %3239 = vmatpush1.bf16.msra.mxu0 0
      %3240 = vmatprep.subr.bf16.mxu0 0
      %3241 = vmatpush1.bf16.msra.mxu0 0
      %3242 = vmatprep.subr.bf16.mxu0 0
      %3243 = vmatpush1.bf16.msra.mxu0 0
      %3244 = vmatprep.subr.bf16.mxu0 0
      %3245 = vmatpush1.bf16.msra.mxu0 0
      %3246 = vmatprep.subr.bf16.mxu0 0
      %3247 = vmatpush1.bf16.msra.mxu0 0
      %3248 = vmatprep.subr.bf16.mxu0 0
      %3249 = vmatpush1.bf16.msra.mxu0 0
      %3250 = vmatprep.subr.bf16.mxu0 0
      %3251 = vmatpush1.bf16.msra.mxu0 0
      %3252 = vmatprep.subr.bf16.mxu0 0
      %3253 = vmatpush1.bf16.msra.mxu0 0
      %3254 = vmatprep.subr.bf16.mxu0 0
      %3255 = vmatpush1.bf16.msra.mxu0 0
      %3256 = vmatprep.mubr.bf16.mxu0 0
      %3257 = vmatmul.mubr.bf16.gmra.mrb[0].mxu0 %v2388
      %v3258 = vpop.f32.mrb[0].mxu0
      %v3259 = vadd.f32 %v3210, %v3258
      %v3260 = vpop.f32.mrb[0].mxu0
      %v3261 = vpop.f32.mrb[0].mxu0
      %v3262 = vpop.f32.mrb[0].mxu0
      %3263 = vdwg.mxu0
      %v3264 = vpack.c.bf16 %v3129, %v3129
      %v3265 = vpack.c.bf16 %v3194, %v3194
      %v3267 = vsel %vm916, %v3264, 0
      %v3270 = vsel %vm916, %v3265, 0
      %3272 = vmatprep.subr.bf16.mxu0 0
      %3273 = vmatpush1.bf16.xpose.msra.mxu0 %v3270
      %3274 = vmatprep.subr.bf16.mxu0 0
      %3275 = vmatpush1.bf16.xpose.msra.mxu0 0
      %3276 = vmatprep.subr.bf16.mxu0 0
      %3277 = vmatpush1.bf16.xpose.msra.mxu0 0
      %3278 = vmatprep.subr.bf16.mxu0 0
      %3279 = vmatpush1.bf16.xpose.msra.mxu0 0
      %3280 = vmatprep.subr.bf16.mxu0 0
      %3281 = vmatpush1.bf16.xpose.msra.mxu0 0
      %3282 = vmatprep.subr.bf16.mxu0 0
      %3283 = vmatpush1.bf16.xpose.msra.mxu0 0
      %3284 = vmatprep.subr.bf16.mxu0 0
      %3285 = vmatpush1.bf16.xpose.msra.mxu0 0
      %3286 = vmatprep.subr.bf16.mxu0 0
      %3287 = vmatpush1.bf16.xpose.msra.mxu0 0
      %3288 = vmatprep.subr.bf16.mxu0 0
      %3289 = vmatpush1.bf16.xpose.msra.mxu0 0
      %3290 = vmatprep.subr.bf16.mxu0 0
      %3291 = vmatpush1.bf16.xpose.msra.mxu0 0
      %3292 = vmatprep.subr.bf16.mxu0 0
      %3293 = vmatpush1.bf16.xpose.msra.mxu0 0
      %3294 = vmatprep.subr.bf16.mxu0 0
      %3295 = vmatpush1.bf16.xpose.msra.mxu0 0
      %3296 = vmatprep.subr.bf16.mxu0 0
      %3297 = vmatpush1.bf16.xpose.msra.mxu0 0
      %3298 = vmatprep.subr.bf16.mxu0 0
      %3299 = vmatpush1.bf16.xpose.msra.mxu0 0
      %3300 = vmatprep.subr.bf16.mxu0 0
      %3301 = vmatpush1.bf16.xpose.msra.mxu0 0
      %3302 = vmatprep.subr.bf16.mxu0 0
      %3303 = vmatpush1.bf16.xpose.msra.mxu0 0
      %3304 = vmatprep.mubr.bf16.mxu0 0
      %3305 = vmatmul.mubr.bf16.gmra.mrb[0].mxu0 %v3267
      %v3306 = vpop.f32.mrb[0].mxu0
      %v3307 = vadd.f32 0.0, %v3306
      %v3308 = vpop.f32.mrb[0].mxu0
      %v3309 = vpop.f32.mrb[0].mxu0
      %v3310 = vpop.f32.mrb[0].mxu0
      %3311 = vdwg.mxu0
      %v3312 = vmul.f32 %v3307, 0.35355338
      %v3313 = vsel %vm964, %v3312, -inf
      %3314 = vmax.xlane.f32.xlu0 %v3313
      %v3315 = vpop.xlane.xlu0 %3314
      %v3316 = vsub.f32 %v3312, %v3315
      %v3317 = vmul.f32 %v3316, 1.442695
      %v3318 = vpow.pop %v3317
      %v3319 = vsel %vm964, %v3318, 0.0
      %3320 = vadd.xlane.f32.xlu0 %v3319
      %v3321 = vpop.xlane.xlu0 %3320
      %v3322 = vpack.c.bf16 %v3318, %v3318
      %v3323 = vpack.c.bf16 %v3259, %v3259
      %v3325 = vsel %vm976, %v3322, 0
      %v3328 = vsel %vm980, %v3323, 0
      %3330 = vmatprep.subr.bf16.mxu0 0
      %3331 = vmatpush1.bf16.msra.mxu0 %v3328
      %3332 = vmatprep.subr.bf16.mxu0 0
      %3333 = vmatpush1.bf16.msra.mxu0 0
      %3334 = vmatprep.subr.bf16.mxu0 0
      %3335 = vmatpush1.bf16.msra.mxu0 0
      %3336 = vmatprep.subr.bf16.mxu0 0
      %3337 = vmatpush1.bf16.msra.mxu0 0
      %3338 = vmatprep.subr.bf16.mxu0 0
      %3339 = vmatpush1.bf16.msra.mxu0 0
      %3340 = vmatprep.subr.bf16.mxu0 0
      %3341 = vmatpush1.bf16.msra.mxu0 0
      %3342 = vmatprep.subr.bf16.mxu0 0
      %3343 = vmatpush1.bf16.msra.mxu0 0
      %3344 = vmatprep.subr.bf16.mxu0 0
      %3345 = vmatpush1.bf16.msra.mxu0 0
      %3346 = vmatprep.subr.bf16.mxu0 0
      %3347 = vmatpush1.bf16.msra.mxu0 0
      %3348 = vmatprep.subr.bf16.mxu0 0
      %3349 = vmatpush1.bf16.msra.mxu0 0
      %3350 = vmatprep.subr.bf16.mxu0 0
      %3351 = vmatpush1.bf16.msra.mxu0 0
      %3352 = vmatprep.subr.bf16.mxu0 0
      %3353 = vmatpush1.bf16.msra.mxu0 0
      %3354 = vmatprep.subr.bf16.mxu0 0
      %3355 = vmatpush1.bf16.msra.mxu0 0
      %3356 = vmatprep.subr.bf16.mxu0 0
      %3357 = vmatpush1.bf16.msra.mxu0 0
      %3358 = vmatprep.subr.bf16.mxu0 0
      %3359 = vmatpush1.bf16.msra.mxu0 0
      %3360 = vmatprep.subr.bf16.mxu0 0
      %3361 = vmatpush1.bf16.msra.mxu0 0
      %3362 = vmatprep.mubr.bf16.mxu0 0
      %3363 = vmatmul.mubr.bf16.gmra.mrb[0].mxu0 %v3325
      %v3364 = vpop.f32.mrb[0].mxu0
      %v3365 = vadd.f32 0.0, %v3364
      %v3366 = vpop.f32.mrb[0].mxu0
      %v3367 = vpop.f32.mrb[0].mxu0
      %v3368 = vpop.f32.mrb[0].mxu0
      %3369 = vdwg.mxu0
      %v3370 = vrcp.pop %v3321
      %v3371 = vmul.f32 %v3365, %v3370
      %v3372 = vpack.c.bf16 %v3371, %v3371
      %s3373 = scalar_lea.vmem %s9, 24
      %v3374 = vld [vmem:[%s3373] sm:$0xf]
      %v3376 = vsel %vm916, %v3372, 0
      %v3379 = vsel %vm1337, %v3374, 0
      %3381 = vmatprep.subr.bf16.mxu0 0
      %3382 = vmatpush1.bf16.msra.mxu0 %v3379
      %3383 = vmatprep.subr.bf16.mxu0 0
      %3384 = vmatpush1.bf16.msra.mxu0 0
      %3385 = vmatprep.subr.bf16.mxu0 0
      %3386 = vmatpush1.bf16.msra.mxu0 0
      %3387 = vmatprep.subr.bf16.mxu0 0
      %3388 = vmatpush1.bf16.msra.mxu0 0
      %3389 = vmatprep.subr.bf16.mxu0 0
      %3390 = vmatpush1.bf16.msra.mxu0 0
      %3391 = vmatprep.subr.bf16.mxu0 0
      %3392 = vmatpush1.bf16.msra.mxu0 0
      %3393 = vmatprep.subr.bf16.mxu0 0
      %3394 = vmatpush1.bf16.msra.mxu0 0
      %3395 = vmatprep.subr.bf16.mxu0 0
      %3396 = vmatpush1.bf16.msra.mxu0 0
      %3397 = vmatprep.subr.bf16.mxu0 0
      %3398 = vmatpush1.bf16.msra.mxu0 0
      %3399 = vmatprep.subr.bf16.mxu0 0
      %3400 = vmatpush1.bf16.msra.mxu0 0
      %3401 = vmatprep.subr.bf16.mxu0 0
      %3402 = vmatpush1.bf16.msra.mxu0 0
      %3403 = vmatprep.subr.bf16.mxu0 0
      %3404 = vmatpush1.bf16.msra.mxu0 0
      %3405 = vmatprep.subr.bf16.mxu0 0
      %3406 = vmatpush1.bf16.msra.mxu0 0
      %3407 = vmatprep.subr.bf16.mxu0 0
      %3408 = vmatpush1.bf16.msra.mxu0 0
      %3409 = vmatprep.subr.bf16.mxu0 0
      %3410 = vmatpush1.bf16.msra.mxu0 0
      %3411 = vmatprep.subr.bf16.mxu0 0
      %3412 = vmatpush1.bf16.msra.mxu0 0
      %3413 = vmatprep.mubr.bf16.mxu0 0
      %3414 = vmatmul.mubr.bf16.gmra.mrb[0].mxu0 %v3376
      %v3415 = vpop.f32.mrb[0].mxu0
      %v3416 = vadd.f32 0.0, %v3415
      %v3417 = vpop.f32.mrb[0].mxu0
      %v3418 = vpop.f32.mrb[0].mxu0
      %v3419 = vpop.f32.mrb[0].mxu0
      %3420 = vdwg.mxu0
      %v3421 = vadd.f32 %v3064, %v3416
      %s3422 = scalar_lea.vmem %s3, 112
      %v3423 = vld [vmem:[%s3422] sm:$0xf]
      %v3424 = vld [vmem:[%s3422 + $0x4] sm:$0xf]
      %v3425 = vld [vmem:[%s3422 + $0x8] sm:$0xf]
      %v3426 = vld [vmem:[%s3422 + $0xc] sm:$0xf]
      %s3427 = scalar_lea.vmem %s6, 7
      %v3428 = vld [vmem:[%s3427] sm:$0x1]
      %v3430 = vlaneseq
      %v3431 = vshrl.u32 %v3430, 7
      %v3432 = vsub.s32 0, %v3431
      %v3433 = vrot.slane %v3428, %v3432
      %v3439 = vunpack.c.l.b16 %v3423
      %v3440 = vunpack.c.l.b16 %v3424
      %v3441 = vunpack.c.l.b16 %v3425
      %v3442 = vunpack.c.l.b16 %v3426
      %v3443 = vpack.c.b16 %v3440, %v3439
      %v3444 = vpack.c.b16 %v3442, %v3441
      %3447 = vmatprep.subr.bf16.mxu0 0
      %3448 = vmatpush1.bf16.msra.mxu0 %v3443
      %3449 = vmatprep.subr.bf16.mxu0 0
      %3450 = vmatpush1.bf16.msra.mxu0 %v3444
      %3451 = vmatprep.subr.bf16.mxu0 0
      %3452 = vmatpush1.bf16.msra.mxu0 0
      %3453 = vmatprep.subr.bf16.mxu0 0
      %3454 = vmatpush1.bf16.msra.mxu0 0
      %3455 = vmatprep.subr.bf16.mxu0 0
      %3456 = vmatpush1.bf16.msra.mxu0 0
      %3457 = vmatprep.subr.bf16.mxu0 0
      %3458 = vmatpush1.bf16.msra.mxu0 0
      %3459 = vmatprep.subr.bf16.mxu0 0
      %3460 = vmatpush1.bf16.msra.mxu0 0
      %3461 = vmatprep.subr.bf16.mxu0 0
      %3462 = vmatpush1.bf16.msra.mxu0 0
      %3463 = vmatprep.subr.bf16.mxu0 0
      %3464 = vmatpush1.bf16.msra.mxu0 0
      %3465 = vmatprep.subr.bf16.mxu0 0
      %3466 = vmatpush1.bf16.msra.mxu0 0
      %3467 = vmatprep.subr.bf16.mxu0 0
      %3468 = vmatpush1.bf16.msra.mxu0 0
      %3469 = vmatprep.subr.bf16.mxu0 0
      %3470 = vmatpush1.bf16.msra.mxu0 0
      %3471 = vmatprep.subr.bf16.mxu0 0
      %3472 = vmatpush1.bf16.msra.mxu0 0
      %3473 = vmatprep.subr.bf16.mxu0 0
      %3474 = vmatpush1.bf16.msra.mxu0 0
      %3475 = vmatprep.subr.bf16.mxu0 0
      %3476 = vmatpush1.bf16.msra.mxu0 0
      %3477 = vmatprep.subr.bf16.mxu0 0
      %3478 = vmatpush1.bf16.msra.mxu0 0
      %3479 = vmatprep.mubr.bf16.mxu0 0
      %3480 = vmatmul.mubr.bf16.gmra.mrb[0].mxu0 %v2388
      %v3481 = vpop.f32.mrb[0].mxu0
      %v3482 = vadd.f32 %v3433, %v3481
      %v3483 = vpop.f32.mrb[0].mxu0
      %v3484 = vpop.f32.mrb[0].mxu0
      %v3485 = vpop.f32.mrb[0].mxu0
      %3486 = vdwg.mxu0
      %s3487 = scalar_lea.vmem %s4, 112
      %v3488 = vld [vmem:[%s3487] sm:$0xf]
      %v3489 = vld [vmem:[%s3487 + $0x4] sm:$0xf]
      %v3490 = vld [vmem:[%s3487 + $0x8] sm:$0xf]
      %v3491 = vld [vmem:[%s3487 + $0xc] sm:$0xf]
      %s3492 = scalar_lea.vmem %s7, 7
      %v3493 = vld [vmem:[%s3492] sm:$0x1]
      %v3495 = vlaneseq
      %v3496 = vshrl.u32 %v3495, 7
      %v3497 = vsub.s32 0, %v3496
      %v3498 = vrot.slane %v3493, %v3497
      %v3504 = vunpack.c.l.b16 %v3488
      %v3505 = vunpack.c.l.b16 %v3489
      %v3506 = vunpack.c.l.b16 %v3490
      %v3507 = vunpack.c.l.b16 %v3491
      %v3508 = vpack.c.b16 %v3505, %v3504
      %v3509 = vpack.c.b16 %v3507, %v3506
      %3512 = vmatprep.subr.bf16.mxu0 0
      %3513 = vmatpush1.bf16.msra.mxu0 %v3508
      %3514 = vmatprep.subr.bf16.mxu0 0
      %3515 = vmatpush1.bf16.msra.mxu0 %v3509
      %3516 = vmatprep.subr.bf16.mxu0 0
      %3517 = vmatpush1.bf16.msra.mxu0 0
      %3518 = vmatprep.subr.bf16.mxu0 0
      %3519 = vmatpush1.bf16.msra.mxu0 0
      %3520 = vmatprep.subr.bf16.mxu0 0
      %3521 = vmatpush1.bf16.msra.mxu0 0
      %3522 = vmatprep.subr.bf16.mxu0 0
      %3523 = vmatpush1.bf16.msra.mxu0 0
      %3524 = vmatprep.subr.bf16.mxu0 0
      %3525 = vmatpush1.bf16.msra.mxu0 0
      %3526 = vmatprep.subr.bf16.mxu0 0
      %3527 = vmatpush1.bf16.msra.mxu0 0
      %3528 = vmatprep.subr.bf16.mxu0 0
      %3529 = vmatpush1.bf16.msra.mxu0 0
      %3530 = vmatprep.subr.bf16.mxu0 0
      %3531 = vmatpush1.bf16.msra.mxu0 0
      %3532 = vmatprep.subr.bf16.mxu0 0
      %3533 = vmatpush1.bf16.msra.mxu0 0
      %3534 = vmatprep.subr.bf16.mxu0 0
      %3535 = vmatpush1.bf16.msra.mxu0 0
      %3536 = vmatprep.subr.bf16.mxu0 0
      %3537 = vmatpush1.bf16.msra.mxu0 0
      %3538 = vmatprep.subr.bf16.mxu0 0
      %3539 = vmatpush1.bf16.msra.mxu0 0
      %3540 = vmatprep.subr.bf16.mxu0 0
      %3541 = vmatpush1.bf16.msra.mxu0 0
      %3542 = vmatprep.subr.bf16.mxu0 0
      %3543 = vmatpush1.bf16.msra.mxu0 0
      %3544 = vmatprep.mubr.bf16.mxu0 0
      %3545 = vmatmul.mubr.bf16.gmra.mrb[0].mxu0 %v2388
      %v3546 = vpop.f32.mrb[0].mxu0
      %v3547 = vadd.f32 %v3498, %v3546
      %v3548 = vpop.f32.mrb[0].mxu0
      %v3549 = vpop.f32.mrb[0].mxu0
      %v3550 = vpop.f32.mrb[0].mxu0
      %3551 = vdwg.mxu0
      %s3552 = scalar_lea.vmem %s5, 112
      %v3553 = vld [vmem:[%s3552] sm:$0xf]
      %v3554 = vld [vmem:[%s3552 + $0x4] sm:$0xf]
      %v3555 = vld [vmem:[%s3552 + $0x8] sm:$0xf]
      %v3556 = vld [vmem:[%s3552 + $0xc] sm:$0xf]
      %s3557 = scalar_lea.vmem %s8, 7
      %v3558 = vld [vmem:[%s3557] sm:$0x1]
      %v3560 = vlaneseq
      %v3561 = vshrl.u32 %v3560, 7
      %v3562 = vsub.s32 0, %v3561
      %v3563 = vrot.slane %v3558, %v3562
      %v3569 = vunpack.c.l.b16 %v3553
      %v3570 = vunpack.c.l.b16 %v3554
      %v3571 = vunpack.c.l.b16 %v3555
      %v3572 = vunpack.c.l.b16 %v3556
      %v3573 = vpack.c.b16 %v3570, %v3569
      %v3574 = vpack.c.b16 %v3572, %v3571
      %3577 = vmatprep.subr.bf16.mxu0 0
      %3578 = vmatpush1.bf16.msra.mxu0 %v3573
      %3579 = vmatprep.subr.bf16.mxu0 0
      %3580 = vmatpush1.bf16.msra.mxu0 %v3574
      %3581 = vmatprep.subr.bf16.mxu0 0
      %3582 = vmatpush1.bf16.msra.mxu0 0
      %3583 = vmatprep.subr.bf16.mxu0 0
      %3584 = vmatpush1.bf16.msra.mxu0 0
      %3585 = vmatprep.subr.bf16.mxu0 0
      %3586 = vmatpush1.bf16.msra.mxu0 0
      %3587 = vmatprep.subr.bf16.mxu0 0
      %3588 = vmatpush1.bf16.msra.mxu0 0
      %3589 = vmatprep.subr.bf16.mxu0 0
      %3590 = vmatpush1.bf16.msra.mxu0 0
      %3591 = vmatprep.subr.bf16.mxu0 0
      %3592 = vmatpush1.bf16.msra.mxu0 0
      %3593 = vmatprep.subr.bf16.mxu0 0
      %3594 = vmatpush1.bf16.msra.mxu0 0
      %3595 = vmatprep.subr.bf16.mxu0 0
      %3596 = vmatpush1.bf16.msra.mxu0 0
      %3597 = vmatprep.subr.bf16.mxu0 0
      %3598 = vmatpush1.bf16.msra.mxu0 0
      %3599 = vmatprep.subr.bf16.mxu0 0
      %3600 = vmatpush1.bf16.msra.mxu0 0
      %3601 = vmatprep.subr.bf16.mxu0 0
      %3602 = vmatpush1.bf16.msra.mxu0 0
      %3603 = vmatprep.subr.bf16.mxu0 0
      %3604 = vmatpush1.bf16.msra.mxu0 0
      %3605 = vmatprep.subr.bf16.mxu0 0
      %3606 = vmatpush1.bf16.msra.mxu0 0
      %3607 = vmatprep.subr.bf16.mxu0 0
      %3608 = vmatpush1.bf16.msra.mxu0 0
      %3609 = vmatprep.mubr.bf16.mxu0 0
      %3610 = vmatmul.mubr.bf16.gmra.mrb[0].mxu0 %v2388
      %v3611 = vpop.f32.mrb[0].mxu0
      %v3612 = vadd.f32 %v3563, %v3611
      %v3613 = vpop.f32.mrb[0].mxu0
      %v3614 = vpop.f32.mrb[0].mxu0
      %v3615 = vpop.f32.mrb[0].mxu0
      %3616 = vdwg.mxu0
      %v3617 = vpack.c.bf16 %v3482, %v3482
      %v3618 = vpack.c.bf16 %v3547, %v3547
      %v3620 = vsel %vm916, %v3617, 0
      %v3623 = vsel %vm916, %v3618, 0
      %3625 = vmatprep.subr.bf16.mxu0 0
      %3626 = vmatpush1.bf16.xpose.msra.mxu0 %v3623
      %3627 = vmatprep.subr.bf16.mxu0 0
      %3628 = vmatpush1.bf16.xpose.msra.mxu0 0
      %3629 = vmatprep.subr.bf16.mxu0 0
      %3630 = vmatpush1.bf16.xpose.msra.mxu0 0
      %3631 = vmatprep.subr.bf16.mxu0 0
      %3632 = vmatpush1.bf16.xpose.msra.mxu0 0
      %3633 = vmatprep.subr.bf16.mxu0 0
      %3634 = vmatpush1.bf16.xpose.msra.mxu0 0
      %3635 = vmatprep.subr.bf16.mxu0 0
      %3636 = vmatpush1.bf16.xpose.msra.mxu0 0
      %3637 = vmatprep.subr.bf16.mxu0 0
      %3638 = vmatpush1.bf16.xpose.msra.mxu0 0
      %3639 = vmatprep.subr.bf16.mxu0 0
      %3640 = vmatpush1.bf16.xpose.msra.mxu0 0
      %3641 = vmatprep.subr.bf16.mxu0 0
      %3642 = vmatpush1.bf16.xpose.msra.mxu0 0
      %3643 = vmatprep.subr.bf16.mxu0 0
      %3644 = vmatpush1.bf16.xpose.msra.mxu0 0
      %3645 = vmatprep.subr.bf16.mxu0 0
      %3646 = vmatpush1.bf16.xpose.msra.mxu0 0
      %3647 = vmatprep.subr.bf16.mxu0 0
      %3648 = vmatpush1.bf16.xpose.msra.mxu0 0
      %3649 = vmatprep.subr.bf16.mxu0 0
      %3650 = vmatpush1.bf16.xpose.msra.mxu0 0
      %3651 = vmatprep.subr.bf16.mxu0 0
      %3652 = vmatpush1.bf16.xpose.msra.mxu0 0
      %3653 = vmatprep.subr.bf16.mxu0 0
      %3654 = vmatpush1.bf16.xpose.msra.mxu0 0
      %3655 = vmatprep.subr.bf16.mxu0 0
      %3656 = vmatpush1.bf16.xpose.msra.mxu0 0
      %3657 = vmatprep.mubr.bf16.mxu0 0
      %3658 = vmatmul.mubr.bf16.gmra.mrb[0].mxu0 %v3620
      %v3659 = vpop.f32.mrb[0].mxu0
      %v3660 = vadd.f32 0.0, %v3659
      %v3661 = vpop.f32.mrb[0].mxu0
      %v3662 = vpop.f32.mrb[0].mxu0
      %v3663 = vpop.f32.mrb[0].mxu0
      %3664 = vdwg.mxu0
      %v3665 = vmul.f32 %v3660, 0.35355338
      %v3666 = vsel %vm964, %v3665, -inf
      %3667 = vmax.xlane.f32.xlu0 %v3666
      %v3668 = vpop.xlane.xlu0 %3667
      %v3669 = vsub.f32 %v3665, %v3668
      %v3670 = vmul.f32 %v3669, 1.442695
      %v3671 = vpow.pop %v3670
      %v3672 = vsel %vm964, %v3671, 0.0
      %3673 = vadd.xlane.f32.xlu0 %v3672
      %v3674 = vpop.xlane.xlu0 %3673
      %v3675 = vpack.c.bf16 %v3671, %v3671
      %v3676 = vpack.c.bf16 %v3612, %v3612
      %v3678 = vsel %vm976, %v3675, 0
      %v3681 = vsel %vm980, %v3676, 0
      %3683 = vmatprep.subr.bf16.mxu0 0
      %3684 = vmatpush1.bf16.msra.mxu0 %v3681
      %3685 = vmatprep.subr.bf16.mxu0 0
      %3686 = vmatpush1.bf16.msra.mxu0 0
      %3687 = vmatprep.subr.bf16.mxu0 0
      %3688 = vmatpush1.bf16.msra.mxu0 0
      %3689 = vmatprep.subr.bf16.mxu0 0
      %3690 = vmatpush1.bf16.msra.mxu0 0
      %3691 = vmatprep.subr.bf16.mxu0 0
      %3692 = vmatpush1.bf16.msra.mxu0 0
      %3693 = vmatprep.subr.bf16.mxu0 0
      %3694 = vmatpush1.bf16.msra.mxu0 0
      %3695 = vmatprep.subr.bf16.mxu0 0
      %3696 = vmatpush1.bf16.msra.mxu0 0
      %3697 = vmatprep.subr.bf16.mxu0 0
      %3698 = vmatpush1.bf16.msra.mxu0 0
      %3699 = vmatprep.subr.bf16.mxu0 0
      %3700 = vmatpush1.bf16.msra.mxu0 0
      %3701 = vmatprep.subr.bf16.mxu0 0
      %3702 = vmatpush1.bf16.msra.mxu0 0
      %3703 = vmatprep.subr.bf16.mxu0 0
      %3704 = vmatpush1.bf16.msra.mxu0 0
      %3705 = vmatprep.subr.bf16.mxu0 0
      %3706 = vmatpush1.bf16.msra.mxu0 0
      %3707 = vmatprep.subr.bf16.mxu0 0
      %3708 = vmatpush1.bf16.msra.mxu0 0
      %3709 = vmatprep.subr.bf16.mxu0 0
      %3710 = vmatpush1.bf16.msra.mxu0 0
      %3711 = vmatprep.subr.bf16.mxu0 0
      %3712 = vmatpush1.bf16.msra.mxu0 0
      %3713 = vmatprep.subr.bf16.mxu0 0
      %3714 = vmatpush1.bf16.msra.mxu0 0
      %3715 = vmatprep.mubr.bf16.mxu0 0
      %3716 = vmatmul.mubr.bf16.gmra.mrb[0].mxu0 %v3678
      %v3717 = vpop.f32.mrb[0].mxu0
      %v3718 = vadd.f32 0.0, %v3717
      %v3719 = vpop.f32.mrb[0].mxu0
      %v3720 = vpop.f32.mrb[0].mxu0
      %v3721 = vpop.f32.mrb[0].mxu0
      %3722 = vdwg.mxu0
      %v3723 = vrcp.pop %v3674
      %v3724 = vmul.f32 %v3718, %v3723
      %v3725 = vpack.c.bf16 %v3724, %v3724
      %s3726 = scalar_lea.vmem %s9, 28
      %v3727 = vld [vmem:[%s3726] sm:$0xf]
      %v3729 = vsel %vm916, %v3725, 0
      %v3732 = vsel %vm1337, %v3727, 0
      %3734 = vmatprep.subr.bf16.mxu0 0
      %3735 = vmatpush1.bf16.msra.mxu0 %v3732
      %3736 = vmatprep.subr.bf16.mxu0 0
      %3737 = vmatpush1.bf16.msra.mxu0 0
      %3738 = vmatprep.subr.bf16.mxu0 0
      %3739 = vmatpush1.bf16.msra.mxu0 0
      %3740 = vmatprep.subr.bf16.mxu0 0
      %3741 = vmatpush1.bf16.msra.mxu0 0
      %3742 = vmatprep.subr.bf16.mxu0 0
      %3743 = vmatpush1.bf16.msra.mxu0 0
      %3744 = vmatprep.subr.bf16.mxu0 0
      %3745 = vmatpush1.bf16.msra.mxu0 0
      %3746 = vmatprep.subr.bf16.mxu0 0
      %3747 = vmatpush1.bf16.msra.mxu0 0
      %3748 = vmatprep.subr.bf16.mxu0 0
      %3749 = vmatpush1.bf16.msra.mxu0 0
      %3750 = vmatprep.subr.bf16.mxu0 0
      %3751 = vmatpush1.bf16.msra.mxu0 0
      %3752 = vmatprep.subr.bf16.mxu0 0
      %3753 = vmatpush1.bf16.msra.mxu0 0
      %3754 = vmatprep.subr.bf16.mxu0 0
      %3755 = vmatpush1.bf16.msra.mxu0 0
      %3756 = vmatprep.subr.bf16.mxu0 0
      %3757 = vmatpush1.bf16.msra.mxu0 0
      %3758 = vmatprep.subr.bf16.mxu0 0
      %3759 = vmatpush1.bf16.msra.mxu0 0
      %3760 = vmatprep.subr.bf16.mxu0 0
      %3761 = vmatpush1.bf16.msra.mxu0 0
      %3762 = vmatprep.subr.bf16.mxu0 0
      %3763 = vmatpush1.bf16.msra.mxu0 0
      %3764 = vmatprep.subr.bf16.mxu0 0
      %3765 = vmatpush1.bf16.msra.mxu0 0
      %3766 = vmatprep.mubr.bf16.mxu0 0
      %3767 = vmatmul.mubr.bf16.gmra.mrb[0].mxu0 %v3729
      %v3768 = vpop.f32.mrb[0].mxu0
      %v3769 = vadd.f32 0.0, %v3768
      %v3770 = vpop.f32.mrb[0].mxu0
      %v3771 = vpop.f32.mrb[0].mxu0
      %v3772 = vpop.f32.mrb[0].mxu0
      %3773 = vdwg.mxu0
      %v3774 = vadd.f32 %v3421, %v3769
      %s3775 = scalar_lea.vmem %s10, 1
      %v3776 = vld [vmem:[%s3775] sm:$0x1]
      %v3778 = vlaneseq
      %v3779 = vshrl.u32 %v3778, 7
      %v3780 = vsub.s32 0, %v3779
      %v3781 = vrot.slane %v3776, %v3780
      %v3783 = vadd.f32 %v3774, %v3781
      %v3784 = vadd.f32 %v2360, %v3783
      %s3785 = scalar_lea.vmem %s11, 1
      %v3786 = vld [vmem:[%s3785] sm:$0x1]
      %s3787 = scalar_lea.vmem %s12, 1
      %v3788 = vld [vmem:[%s3787] sm:$0x1]
      %v3789 = vsel %vm2144, %v3784, 0.0
      %3790 = vadd.xlane.f32.xlu0 %v3789
      %v3791 = vpop.xlane.xlu0 %3790
      %v3792 = vmul.f32 %v3791, %v2148
      %v3793 = vmul.f32 %v3784, %v3784
      %v3794 = vsel %vm2144, %v3793, 0.0
      %3795 = vadd.xlane.f32.xlu0 %v3794
      %v3796 = vpop.xlane.xlu0 %3795
      %v3797 = vmul.f32 %v3796, %v2148
      %v3798 = vmul.f32 %v3792, %v3792
      %v3799 = vsub.f32 %v3797, %v3798
      %v3800 = vmax.f32 %v3799, 0.0
      %v3801 = vadd.f32 %v3800, 1e-05
      %v3802 = vrsqrt.pop %v3801
      %v3803 = vsub.f32 %v3784, %v3792
      %v3805 = vlaneseq
      %v3806 = vshrl.u32 %v3805, 7
      %v3807 = vsub.s32 0, %v3806
      %v3808 = vrot.slane %v3786, %v3807
      %v3810 = vmul.f32 %v3802, %v3808
      %v3811 = vmul.f32 %v3803, %v3810
      %v3813 = vlaneseq
      %v3814 = vshrl.u32 %v3813, 7
      %v3815 = vsub.s32 0, %v3814
      %v3816 = vrot.slane %v3788, %v3815
      %v3818 = vadd.f32 %v3811, %v3816
      %v3819 = vpack.c.bf16 %v3818, %v3818
      %s3820 = scalar_lea.vmem %s13, 16
      %v3821 = vld [vmem:[%s3820] sm:$0xf]
      %v3822 = vld [vmem:[%s3820 + $0x4] sm:$0xf]
      %v3823 = vld [vmem:[%s3820 + $0x8] sm:$0xf]
      %v3824 = vld [vmem:[%s3820 + $0xc] sm:$0xf]
      %s3825 = scalar_lea.vmem %s14, 1
      %v3826 = vld [vmem:[%s3825] sm:$0x1]
      %v3828 = vlaneseq
      %v3829 = vshrl.u32 %v3828, 7
      %v3830 = vsub.s32 0, %v3829
      %v3831 = vrot.slane %v3826, %v3830
      %v3837 = vunpack.c.l.b16 %v3821
      %v3838 = vunpack.c.l.b16 %v3822
      %v3839 = vunpack.c.l.b16 %v3823
      %v3840 = vunpack.c.l.b16 %v3824
      %v3841 = vpack.c.b16 %v3838, %v3837
      %v3842 = vpack.c.b16 %v3840, %v3839
      %v3846 = vsel %vm744, %v3819, 0
      %3848 = vmatprep.subr.bf16.mxu0 0
      %3849 = vmatpush1.bf16.msra.mxu0 %v3841
      %3850 = vmatprep.subr.bf16.mxu0 0
      %3851 = vmatpush1.bf16.msra.mxu0 %v3842
      %3852 = vmatprep.subr.bf16.mxu0 0
      %3853 = vmatpush1.bf16.msra.mxu0 0
      %3854 = vmatprep.subr.bf16.mxu0 0
      %3855 = vmatpush1.bf16.msra.mxu0 0
      %3856 = vmatprep.subr.bf16.mxu0 0
      %3857 = vmatpush1.bf16.msra.mxu0 0
      %3858 = vmatprep.subr.bf16.mxu0 0
      %3859 = vmatpush1.bf16.msra.mxu0 0
      %3860 = vmatprep.subr.bf16.mxu0 0
      %3861 = vmatpush1.bf16.msra.mxu0 0
      %3862 = vmatprep.subr.bf16.mxu0 0
      %3863 = vmatpush1.bf16.msra.mxu0 0
      %3864 = vmatprep.subr.bf16.mxu0 0
      %3865 = vmatpush1.bf16.msra.mxu0 0
      %3866 = vmatprep.subr.bf16.mxu0 0
      %3867 = vmatpush1.bf16.msra.mxu0 0
      %3868 = vmatprep.subr.bf16.mxu0 0
      %3869 = vmatpush1.bf16.msra.mxu0 0
      %3870 = vmatprep.subr.bf16.mxu0 0
      %3871 = vmatpush1.bf16.msra.mxu0 0
      %3872 = vmatprep.subr.bf16.mxu0 0
      %3873 = vmatpush1.bf16.msra.mxu0 0
      %3874 = vmatprep.subr.bf16.mxu0 0
      %3875 = vmatpush1.bf16.msra.mxu0 0
      %3876 = vmatprep.subr.bf16.mxu0 0
      %3877 = vmatpush1.bf16.msra.mxu0 0
      %3878 = vmatprep.subr.bf16.mxu0 0
      %3879 = vmatpush1.bf16.msra.mxu0 0
      %3880 = vmatprep.mubr.bf16.mxu0 0
      %3881 = vmatmul.mubr.bf16.gmra.mrb[0].mxu0 %v3846
      %v3882 = vpop.f32.mrb[0].mxu0
      %v3883 = vadd.f32 %v3831, %v3882
      %v3884 = vpop.f32.mrb[0].mxu0
      %v3885 = vpop.f32.mrb[0].mxu0
      %v3886 = vpop.f32.mrb[0].mxu0
      %3887 = vdwg.mxu0
      %v3888 = vmax.f32 %v3883, 0.0
      %v3889 = vpack.c.bf16 %v3888, %v3888
      %s3890 = scalar_lea.vmem %s15, 32
      %v3891 = vld [vmem:[%s3890] sm:$0xf]
      %v3892 = vld [vmem:[%s3890 + $0x4] sm:$0xf]
      %v3893 = vld [vmem:[%s3890 + $0x8] sm:$0xf]
      %v3894 = vld [vmem:[%s3890 + $0xc] sm:$0xf]
      %v3895 = vld [vmem:[%s3890 + $0x10] sm:$0xf]
      %v3896 = vld [vmem:[%s3890 + $0x14] sm:$0xf]
      %v3897 = vld [vmem:[%s3890 + $0x18] sm:$0xf]
      %v3898 = vld [vmem:[%s3890 + $0x1c] sm:$0xf]
      %s3899 = scalar_lea.vmem %s16, 1
      %v3900 = vld [vmem:[%s3899] sm:$0x1]
      %v3902 = vlaneseq
      %v3903 = vshrl.u32 %v3902, 7
      %v3904 = vsub.s32 0, %v3903
      %v3905 = vrot.slane %v3900, %v3904
      %v3915 = vunpack.c.l.b16 %v3891
      %v3916 = vunpack.c.l.b16 %v3892
      %v3917 = vunpack.c.l.b16 %v3893
      %v3918 = vunpack.c.l.b16 %v3894
      %v3919 = vunpack.c.l.b16 %v3895
      %v3920 = vunpack.c.l.b16 %v3896
      %v3921 = vunpack.c.l.b16 %v3897
      %v3922 = vunpack.c.l.b16 %v3898
      %v3923 = vpack.c.b16 %v3916, %v3915
      %v3924 = vpack.c.b16 %v3918, %v3917
      %v3925 = vpack.c.b16 %v3920, %v3919
      %v3926 = vpack.c.b16 %v3922, %v3921
      %v3932 = vsel %vm2284, %v3889, 0
      %3934 = vmatprep.subr.bf16.mxu0 0
      %3935 = vmatpush1.bf16.msra.mxu0 %v3923
      %3936 = vmatprep.subr.bf16.mxu0 0
      %3937 = vmatpush1.bf16.msra.mxu0 %v3924
      %3938 = vmatprep.subr.bf16.mxu0 0
      %3939 = vmatpush1.bf16.msra.mxu0 %v3925
      %3940 = vmatprep.subr.bf16.mxu0 0
      %3941 = vmatpush1.bf16.msra.mxu0 %v3926
      %3942 = vmatprep.subr.bf16.mxu0 0
      %3943 = vmatpush1.bf16.msra.mxu0 0
      %3944 = vmatprep.subr.bf16.mxu0 0
      %3945 = vmatpush1.bf16.msra.mxu0 0
      %3946 = vmatprep.subr.bf16.mxu0 0
      %3947 = vmatpush1.bf16.msra.mxu0 0
      %3948 = vmatprep.subr.bf16.mxu0 0
      %3949 = vmatpush1.bf16.msra.mxu0 0
      %3950 = vmatprep.subr.bf16.mxu0 0
      %3951 = vmatpush1.bf16.msra.mxu0 0
      %3952 = vmatprep.subr.bf16.mxu0 0
      %3953 = vmatpush1.bf16.msra.mxu0 0
      %3954 = vmatprep.subr.bf16.mxu0 0
      %3955 = vmatpush1.bf16.msra.mxu0 0
      %3956 = vmatprep.subr.bf16.mxu0 0
      %3957 = vmatpush1.bf16.msra.mxu0 0
      %3958 = vmatprep.subr.bf16.mxu0 0
      %3959 = vmatpush1.bf16.msra.mxu0 0
      %3960 = vmatprep.subr.bf16.mxu0 0
      %3961 = vmatpush1.bf16.msra.mxu0 0
      %3962 = vmatprep.subr.bf16.mxu0 0
      %3963 = vmatpush1.bf16.msra.mxu0 0
      %3964 = vmatprep.subr.bf16.mxu0 0
      %3965 = vmatpush1.bf16.msra.mxu0 0
      %3966 = vmatprep.mubr.bf16.mxu0 0
      %3967 = vmatmul.mubr.bf16.gmra.mrb[0].mxu0 %v3932
      %v3968 = vpop.f32.mrb[0].mxu0
      %v3969 = vadd.f32 %v3905, %v3968
      %v3970 = vpop.f32.mrb[0].mxu0
      %v3971 = vpop.f32.mrb[0].mxu0
      %v3972 = vpop.f32.mrb[0].mxu0
      %3973 = vdwg.mxu0
      %v3974 = vadd.f32 %v3818, %v3969
      %s3975 = scalar_lea.vmem %s17, 1
      %v3976 = vld [vmem:[%s3975] sm:$0x1]
      %s3977 = scalar_lea.vmem %s18, 1
      %v3978 = vld [vmem:[%s3977] sm:$0x1]
      %v3979 = vsel %vm2144, %v3974, 0.0
      %3980 = vadd.xlane.f32.xlu0 %v3979
      %v3981 = vpop.xlane.xlu0 %3980
      %v3982 = vmul.f32 %v3981, %v2148
      %v3983 = vmul.f32 %v3974, %v3974
      %v3984 = vsel %vm2144, %v3983, 0.0
      %3985 = vadd.xlane.f32.xlu0 %v3984
      %v3986 = vpop.xlane.xlu0 %3985
      %v3987 = vmul.f32 %v3986, %v2148
      %v3988 = vmul.f32 %v3982, %v3982
      %v3989 = vsub.f32 %v3987, %v3988
      %v3990 = vmax.f32 %v3989, 0.0
      %v3991 = vadd.f32 %v3990, 1e-05
      %v3992 = vrsqrt.pop %v3991
      %v3993 = vsub.f32 %v3974, %v3982
      %v3995 = vlaneseq
      %v3996 = vshrl.u32 %v3995, 7
      %v3997 = vsub.s32 0, %v3996
      %v3998 = vrot.slane %v3976, %v3997
      %v4000 = vmul.f32 %v3992, %v3998
      %v4001 = vmul.f32 %v3993, %v4000
      %v4003 = vlaneseq
      %v4004 = vshrl.u32 %v4003, 7
      %v4005 = vsub.s32 0, %v4004
      %v4006 = vrot.slane %v3978, %v4005
      %v4008 = vadd.f32 %v4001, %v4006
      %v4009 = vld [vmem:[%s19] sm:$0x1]
      %v4010 = vld [vmem:[#allocation2] sm:$0x1]
      %4012 = vset.pattern.permute.xlu0 0
      %4013 = vperm.xlu0 %4012, %v4010
      %v4014 = vpop.permute.xlu0 %4013
      %v4016 = vlaneseq
      %v4017 = vshrl.u32 %v4016, 7
      %v4018 = vsub.s32 0, %v4017
      %v4019 = vrot.slane %v4014, %v4018
      %v4021 = vsel %vm744, %v4009, 0
      %v4024 = vsel %vm744, %v4008, 0
      %4026 = vmatprep.subr.mxu0 0.0
      %4027 = vmatpush1.xpose.msra.mxu0 %v4024
      %4028 = vmatprep.subr.mxu0 0.0
      %4029 = vmatpush1.xpose.msra.mxu0 0.0
      %4030 = vmatprep.subr.mxu0 0.0
      %4031 = vmatpush1.xpose.msra.mxu0 0.0
      %4032 = vmatprep.subr.mxu0 0.0
      %4033 = vmatpush1.xpose.msra.mxu0 0.0
      %4034 = vmatprep.subr.mxu0 0.0
      %4035 = vmatpush1.xpose.msra.mxu0 0.0
      %4036 = vmatprep.subr.mxu0 0.0
      %4037 = vmatpush1.xpose.msra.mxu0 0.0
      %4038 = vmatprep.subr.mxu0 0.0
      %4039 = vmatpush1.xpose.msra.mxu0 0.0
      %4040 = vmatprep.subr.mxu0 0.0
      %4041 = vmatpush1.xpose.msra.mxu0 0.0
      %4042 = vmatprep.subr.mxu0 0.0
      %4043 = vmatpush1.xpose.msra.mxu0 0.0
      %4044 = vmatprep.subr.mxu0 0.0
      %4045 = vmatpush1.xpose.msra.mxu0 0.0
      %4046 = vmatprep.subr.mxu0 0.0
      %4047 = vmatpush1.xpose.msra.mxu0 0.0
      %4048 = vmatprep.subr.mxu0 0.0
      %4049 = vmatpush1.xpose.msra.mxu0 0.0
      %4050 = vmatprep.subr.mxu0 0.0
      %4051 = vmatpush1.xpose.msra.mxu0 0.0
      %4052 = vmatprep.subr.mxu0 0.0
      %4053 = vmatpush1.xpose.msra.mxu0 0.0
      %4054 = vmatprep.subr.mxu0 0.0
      %4055 = vmatpush1.xpose.msra.mxu0 0.0
      %4056 = vmatprep.subr.mxu0 0.0
      %4057 = vmatpush1.xpose.msra.mxu0 0.0
      %4058 = vmatprep.subr.mxu0 0.0
      %4059 = vmatpush1.xpose.msra.mxu0 0.0
      %4060 = vmatprep.subr.mxu0 0.0
      %4061 = vmatpush1.xpose.msra.mxu0 0.0
      %4062 = vmatprep.subr.mxu0 0.0
      %4063 = vmatpush1.xpose.msra.mxu0 0.0
      %4064 = vmatprep.subr.mxu0 0.0
      %4065 = vmatpush1.xpose.msra.mxu0 0.0
      %4066 = vmatprep.subr.mxu0 0.0
      %4067 = vmatpush1.xpose.msra.mxu0 0.0
      %4068 = vmatprep.subr.mxu0 0.0
      %4069 = vmatpush1.xpose.msra.mxu0 0.0
      %4070 = vmatprep.subr.mxu0 0.0
      %4071 = vmatpush1.xpose.msra.mxu0 0.0
      %4072 = vmatprep.subr.mxu0 0.0
      %4073 = vmatpush1.xpose.msra.mxu0 0.0
      %4074 = vmatprep.subr.mxu0 0.0
      %4075 = vmatpush1.xpose.msra.mxu0 0.0
      %4076 = vmatprep.subr.mxu0 0.0
      %4077 = vmatpush1.xpose.msra.mxu0 0.0
      %4078 = vmatprep.subr.mxu0 0.0
      %4079 = vmatpush1.xpose.msra.mxu0 0.0
      %4080 = vmatprep.subr.mxu0 0.0
      %4081 = vmatpush1.xpose.msra.mxu0 0.0
      %4082 = vmatprep.subr.mxu0 0.0
      %4083 = vmatpush1.xpose.msra.mxu0 0.0
      %4084 = vmatprep.subr.mxu0 0.0
      %4085 = vmatpush1.xpose.msra.mxu0 0.0
      %4086 = vmatprep.subr.mxu0 0.0
      %4087 = vmatpush1.xpose.msra.mxu0 0.0
      %4088 = vmatprep.subr.mxu0 0.0
      %4089 = vmatpush1.xpose.msra.mxu0 0.0
      %4090 = vmatprep.mubr.f32.mxu0 0.0
      %4091 = vmatmul.mubr.f32.gmra.mrb[0].mxu0 %v4021
      %v4092 = vpop.f32.mrb[0].mxu0
      %v4093 = vadd.f32 %v4019, %v4092
      %v4094 = vpop.f32.mrb[0].mxu0
      %4095 = vdwg.mxu0
      %vm4096 = vcmask 8192
      %4097 = vst.msk [vmem:[%s665] sm:$0x1] %vm4096, %v4093
      %p4098 = scmp.lt.s32.totalorder %s34, 7
      %s4099 = scalar_select %p4098, %s34, 7
      %s4100 = scalar_lea.vmem %s21, %s4099
      // Predicated region
      $region105: #{forward.1} parent=103 // pred_check
        %p4101 = pneg %p503
      $region106: #{forward.1} parent=103 // pred_check_branch
        %4103 = sbr.rel (%p4101) target = $region108
      $region107: #{forward.1} parent=103 // pred_region
        _
      $region108: #{forward.1} parent=103 // pred_fallthru
        _
    $region104: #{forward.1} parent=5 // pred_fallthru
      _
    %p4104 = scmp.le.s32.totalorder 2, %s29
    // Predicated region
    $region109: #{forward.1} parent=5 // pred_check
      %p4105 = pneg %p4104
    $region110: #{forward.1} parent=5 // pred_check_branch
      %4107 = sbr.rel (%p4105) target = $region112
    $region111: #{forward.1} parent=5 // pred_region
      %s4108 = ssub.s32 %s29, 2
      // Predicated region
      $region113: #{forward.1} parent=111 // pred_check
        %p4109 = pneg %p509
      $region114: #{forward.1} parent=111 // pred_check_branch
        %4111 = sbr.rel (%p4109) target = $region116
      $region115: #{forward.1} parent=111 // pred_region
        %p4112 = scmp.lt.s32.totalorder %s35, 7
        %s4113 = scalar_select %p4112, %s35, 7
        %s4114 = scalar_lea.vmem %s21, %s4113
      $region116: #{forward.1} parent=111 // pred_fallthru
        _
    $region112: #{forward.1} parent=5 // pred_fallthru
      _
  $region6: #{forward.1} parent=0 // loop_footer
    %s33 = sadd.s32 1, %s29
  $region7: #{forward.1} parent=0 // loop_footer_branch
    %28 = sbr.rel target = $region3
  $region8: #{forward.1} parent=0 // loop_exit
    _

</llo_original>
